<compile_context>
chip_gen: v7x
topology: tpu7x:2x2x1
jax: 0.10.0
libtpu: 0.0.40
codegen_flags: <defaults>
</compile_context>

<pallas_src>
import numpy as np
import jax
import jax.numpy as jnp
from jax.experimental import pallas as pl
from jax.experimental.pallas import tpu as pltpu


def _dft_bases(head_dim, seq_len):
    """Real matrices implementing rfft over D and irfft(., n=L) over the bin axis."""
    fd = head_dim // 2 + 1          # rfft bins produced over the head dim
    fl = seq_len // 2 + 1           # bins consumed by irfft(n=L) (cropped / zero-padded)
    fm = min(fd, fl)
    # rfft of a length-D axis; keep only the fm bins that survive irfft's crop.
    w = np.fft.rfft(np.eye(head_dim), axis=-1)[:, :fm]
    wr = np.ascontiguousarray(w.real).astype(np.float32)               # (D, Fm)
    wi = np.ascontiguousarray(w.imag).astype(np.float32)               # (D, Fm)
    # irfft(n=L) impulse responses for real / imaginary unit bins 0..Fm-1.
    er = np.eye(fm, fl)                                                # zero bins >= Fm
    br = np.fft.irfft(er, n=seq_len, axis=-1).astype(np.float32)       # (Fm, L)
    bi = np.fft.irfft(1j * er, n=seq_len, axis=-1).astype(np.float32)  # (Fm, L)
    return wr, wi, br, bi, fm


def _autocorr_kernel(q_ref, k_ref, v_ref, wr_ref, wi_ref, br_ref, bi_ref, out_ref):
    # Blocks: q/k/v/out (1, H, L, D); wr/wi (H, D, Fm); br/bi (H, Fm, L).
    q = q_ref[0].astype(jnp.float32)          # (H, L, D)
    k = k_ref[0].astype(jnp.float32)
    v = v_ref[0].astype(jnp.float32)
    wr = wr_ref[...]
    wi = wi_ref[...]
    br = br_ref[...]
    bi = bi_ref[...]

    # rfft over the head dim via real matmuls (MXU).
    qf_r = jnp.einsum('hld,hdf->hlf', q, wr, preferred_element_type=jnp.float32)
    qf_i = jnp.einsum('hld,hdf->hlf', q, wi, preferred_element_type=jnp.float32)
    kf_r = jnp.einsum('hld,hdf->hlf', k, wr, preferred_element_type=jnp.float32)
    kf_i = jnp.einsum('hld,hdf->hlf', k, wi, preferred_element_type=jnp.float32)

    # res = q_fft * conj(k_fft)
    res_r = qf_r * kf_r + qf_i * kf_i
    res_i = qf_i * kf_r - qf_r * kf_i

    # corr = irfft(res, n=L):  (H, L, L)
    corr = (jnp.einsum('hlf,hft->hlt', res_r, br, preferred_element_type=jnp.float32)
            + jnp.einsum('hlf,hft->hlt', res_i, bi, preferred_element_type=jnp.float32))

    # time_delay_agg_training: softmax over the last axis of (corr - mean over heads).
    mean = jnp.mean(corr, axis=0, keepdims=True)
    logits = corr - mean
    m = jnp.max(logits, axis=-1, keepdims=True)
    e = jnp.exp(logits - m)
    s = jnp.sum(e, axis=-1, keepdims=True)
    w = e / s                                  # (H, L, L), softmax over t (last axis)

    # V[h, t, d] = sum_l w[h, l, t] * v[h, l, d]
    wt = jnp.swapaxes(w, -1, -2)               # (H, L_t, L_l)
    V = jnp.einsum('htl,hld->htd', wt, v, preferred_element_type=jnp.float32)

    out_ref[0] = V.astype(out_ref.dtype)


def auto_correlation(queries, keys, values, n_heads):
    """AutoCorrelation.forward (output_attention=False). queries/keys/values: (B, L, E)."""
    B, L, E = queries.shape
    _, S, _ = keys.shape
    assert S == L, "spec's elementwise q_fft * conj(k_fft) requires S == L"
    H = n_heads
    assert E % H == 0
    D = E // H

    # Layout plumbing in the wrapper (mirrors the torch reshape/permute chain).
    qh = queries.reshape(B, L, H, D).transpose(0, 2, 1, 3)   # (B, H, L, D)
    kh = keys.reshape(B, S, H, D).transpose(0, 2, 1, 3)      # (B, H, S, D)
    vh = values.reshape(B, S, H, D).transpose(0, 2, 1, 3)    # (B, H, S, D) == torch values.transpose(-1,-2)

    wr, wi, br, bi, Fm = _dft_bases(D, L)
    wr_b = jnp.broadcast_to(jnp.asarray(wr), (H, D, Fm))
    wi_b = jnp.broadcast_to(jnp.asarray(wi), (H, D, Fm))
    br_b = jnp.broadcast_to(jnp.asarray(br), (H, Fm, L))
    bi_b = jnp.broadcast_to(jnp.asarray(bi), (H, Fm, L))

    bhd_spec = pl.BlockSpec((1, H, L, D), lambda b: (b, 0, 0, 0))
    const3 = lambda b: (0, 0, 0)

    V = pl.pallas_call(
        _autocorr_kernel,
        out_shape=jax.ShapeDtypeStruct((B, H, L, D), queries.dtype),
        grid=(B,),
        in_specs=[
            bhd_spec, bhd_spec, bhd_spec,
            pl.BlockSpec((H, D, Fm), const3),
            pl.BlockSpec((H, D, Fm), const3),
            pl.BlockSpec((H, Fm, L), const3),
            pl.BlockSpec((H, Fm, L), const3),
        ],
        out_specs=bhd_spec,
        compiler_params=pltpu.CompilerParams(dimension_semantics=("parallel",)),
    )(qh, kh, vh, wr_b, wi_b, br_b, bi_b)

    # torch: V.transpose(-1, -2).permute(0, 2, 1, 3).reshape(B, L, -1)
    out = jnp.transpose(V, (0, 3, 1, 2)).reshape(B, L, H * D)
    return out


def _reference(queries, keys, values, n_heads):
    """Pure-JAX replica of the PyTorch forward (uses jnp.fft), for validation only."""
    B, L, E = queries.shape
    _, S, _ = keys.shape
    H = n_heads
    D = E // H
    qh = queries.reshape(B, L, H, D).transpose(0, 2, 1, 3)   # (B,H,L,D)
    kh = keys.reshape(B, S, H, D).transpose(0, 2, 1, 3)      # (B,H,S,D)
    vh = values.reshape(B, S, H, D).transpose(0, 2, 3, 1)    # (B,H,D,S)
    q_fft = jnp.fft.rfft(qh, axis=-1)
    k_fft = jnp.fft.rfft(kh, axis=-1)
    res = q_fft * jnp.conj(k_fft)
    corr = jnp.fft.irfft(res, n=L, axis=-1)                  # (B,H,L,L)
    mean_value = jnp.mean(corr, axis=1, keepdims=True)
    weights = jax.nn.softmax(corr - mean_value, axis=-1)
    weights = jnp.swapaxes(weights, -1, -2)
    V = jnp.matmul(weights, jnp.swapaxes(vh, -1, -2))        # (B,H,L,D)
    V = jnp.swapaxes(V, -1, -2)                               # (B,H,D,L)
    return jnp.transpose(V, (0, 2, 1, 3)).reshape(B, L, H * D)


if __name__ == "__main__":
    B, L, E, H = 2, 16, 64, 8

    key = jax.random.PRNGKey(0)
    kq, kk, kv = jax.random.split(key, 3)
    q = jax.random.normal(kq, (B, L, E), dtype=jnp.float32)
    k = jax.random.normal(kk, (B, L, E), dtype=jnp.float32)
    v = jax.random.normal(kv, (B, L, E), dtype=jnp.float32)

    out = auto_correlation(q, k, v, n_heads=H)
    jax.block_until_ready(out)

    ref = _reference(q, k, v, n_heads=H)
    assert out.shape == (B, L, E)
    assert jnp.allclose(out, ref, atol=1e-3, rtol=1e-3), "AutoCorrelation mismatch vs FFT reference"

    print("KERNEL_OK")
</pallas_src>

<mosaic_0001>
module attributes {stable_mosaic.version = 11 : i64} {
  func.func @_autocorr_kernel(%arg0: i32, %arg1: memref<1x8x16x8xf32, #tpu.memory_space<vmem>>, %arg2: memref<1x8x16x8xf32, #tpu.memory_space<vmem>>, %arg3: memref<1x8x16x8xf32, #tpu.memory_space<vmem>>, %arg4: memref<8x8x5xf32, #tpu.memory_space<vmem>>, %arg5: memref<8x8x5xf32, #tpu.memory_space<vmem>>, %arg6: memref<8x5x16xf32, #tpu.memory_space<vmem>>, %arg7: memref<8x5x16xf32, #tpu.memory_space<vmem>>, %arg8: memref<1x8x16x8xf32, #tpu.memory_space<vmem>>) attributes {dimension_semantics = [#tpu.dimension_semantics<parallel>], iteration_bounds = array<i64: 2>, scalar_prefetch = 0 : i64, scratch_operands = 0 : i64, tpu.core_type = #tpu.core_type<tc>, window_params = [{transform_indices = @transform_0, window_bounds = array<i64: 1, 8, 16, 8>}, {transform_indices = @transform_1, window_bounds = array<i64: 1, 8, 16, 8>}, {transform_indices = @transform_2, window_bounds = array<i64: 1, 8, 16, 8>}, {pipeline_mode = #tpu.pipeline_mode<synchronous>, transform_indices = @transform_3, window_bounds = array<i64: 8, 8, 5>}, {pipeline_mode = #tpu.pipeline_mode<synchronous>, transform_indices = @transform_4, window_bounds = array<i64: 8, 8, 5>}, {pipeline_mode = #tpu.pipeline_mode<synchronous>, transform_indices = @transform_5, window_bounds = array<i64: 8, 5, 16>}, {pipeline_mode = #tpu.pipeline_mode<synchronous>, transform_indices = @transform_6, window_bounds = array<i64: 8, 5, 16>}, {transform_indices = @transform_7, window_bounds = array<i64: 1, 8, 16, 8>}]} {
    %c0 = arith.constant 0 : index
    %c0_0 = arith.constant 0 : index
    %c0_1 = arith.constant 0 : index
    %c0_2 = arith.constant 0 : index
    %0 = vector.load %arg1[%c0, %c0_0, %c0_1, %c0_2] : memref<1x8x16x8xf32, #tpu.memory_space<vmem>>, vector<1x8x16x8xf32>
    %1 = vector.shape_cast %0 : vector<1x8x16x8xf32> to vector<8x16x8xf32>
    %c0_3 = arith.constant 0 : index
    %c0_4 = arith.constant 0 : index
    %c0_5 = arith.constant 0 : index
    %c0_6 = arith.constant 0 : index
    %2 = vector.load %arg2[%c0_3, %c0_4, %c0_5, %c0_6] : memref<1x8x16x8xf32, #tpu.memory_space<vmem>>, vector<1x8x16x8xf32>
    %3 = vector.shape_cast %2 : vector<1x8x16x8xf32> to vector<8x16x8xf32>
    %c0_7 = arith.constant 0 : index
    %c0_8 = arith.constant 0 : index
    %c0_9 = arith.constant 0 : index
    %c0_10 = arith.constant 0 : index
    %4 = vector.load %arg3[%c0_7, %c0_8, %c0_9, %c0_10] : memref<1x8x16x8xf32, #tpu.memory_space<vmem>>, vector<1x8x16x8xf32>
    %5 = vector.shape_cast %4 : vector<1x8x16x8xf32> to vector<8x16x8xf32>
    %c0_11 = arith.constant 0 : index
    %c0_12 = arith.constant 0 : index
    %c0_13 = arith.constant 0 : index
    %6 = vector.load %arg4[%c0_11, %c0_12, %c0_13] : memref<8x8x5xf32, #tpu.memory_space<vmem>>, vector<8x8x5xf32>
    %c0_14 = arith.constant 0 : index
    %c0_15 = arith.constant 0 : index
    %c0_16 = arith.constant 0 : index
    %7 = vector.load %arg5[%c0_14, %c0_15, %c0_16] : memref<8x8x5xf32, #tpu.memory_space<vmem>>, vector<8x8x5xf32>
    %c0_17 = arith.constant 0 : index
    %c0_18 = arith.constant 0 : index
    %c0_19 = arith.constant 0 : index
    %8 = vector.load %arg6[%c0_17, %c0_18, %c0_19] : memref<8x5x16xf32, #tpu.memory_space<vmem>>, vector<8x5x16xf32>
    %c0_20 = arith.constant 0 : index
    %c0_21 = arith.constant 0 : index
    %c0_22 = arith.constant 0 : index
    %9 = vector.load %arg7[%c0_20, %c0_21, %c0_22] : memref<8x5x16xf32, #tpu.memory_space<vmem>>, vector<8x5x16xf32>
    "tpu.trace_start"() <{level = 10 : i32, message = "hld,hdf->hlf"}> : () -> ()
    %cst = arith.constant dense<0.000000e+00> : vector<8x16x5xf32>
    %10 = tpu.matmul %1, %6, %cst {dimension_numbers = #tpu.dot_dimension_numbers<[2], [1], [1], [2], [0, 0, 0, 1, 1, 2], [0], [0]>} : vector<8x16x8xf32>, vector<8x8x5xf32>, vector<8x16x5xf32> -> vector<8x16x5xf32>
    %cst_23 = arith.constant dense<0.000000e+00> : vector<8x16x5xf32>
    %11 = tpu.matmul %1, %7, %cst_23 {dimension_numbers = #tpu.dot_dimension_numbers<[2], [1], [1], [2], [0, 0, 0, 1, 1, 2], [0], [0]>} : vector<8x16x8xf32>, vector<8x8x5xf32>, vector<8x16x5xf32> -> vector<8x16x5xf32>
    %cst_24 = arith.constant dense<0.000000e+00> : vector<8x16x5xf32>
    %12 = tpu.matmul %3, %6, %cst_24 {dimension_numbers = #tpu.dot_dimension_numbers<[2], [1], [1], [2], [0, 0, 0, 1, 1, 2], [0], [0]>} : vector<8x16x8xf32>, vector<8x8x5xf32>, vector<8x16x5xf32> -> vector<8x16x5xf32>
    %cst_25 = arith.constant dense<0.000000e+00> : vector<8x16x5xf32>
    %13 = tpu.matmul %3, %7, %cst_25 {dimension_numbers = #tpu.dot_dimension_numbers<[2], [1], [1], [2], [0, 0, 0, 1, 1, 2], [0], [0]>} : vector<8x16x8xf32>, vector<8x8x5xf32>, vector<8x16x5xf32> -> vector<8x16x5xf32>
    "tpu.trace_stop"() : () -> ()
    %14 = arith.mulf %10, %12 : vector<8x16x5xf32>
    %15 = arith.mulf %11, %13 : vector<8x16x5xf32>
    %16 = arith.addf %14, %15 : vector<8x16x5xf32>
    %17 = arith.mulf %11, %12 : vector<8x16x5xf32>
    %18 = arith.mulf %10, %13 : vector<8x16x5xf32>
    %19 = arith.subf %17, %18 : vector<8x16x5xf32>
    "tpu.trace_start"() <{level = 10 : i32, message = "hlf,hft->hlt"}> : () -> ()
    %cst_26 = arith.constant dense<0.000000e+00> : vector<8x16x16xf32>
    %20 = tpu.matmul %16, %8, %cst_26 {dimension_numbers = #tpu.dot_dimension_numbers<[2], [1], [1], [2], [0, 0, 0, 1, 1, 2], [0], [0]>} : vector<8x16x5xf32>, vector<8x5x16xf32>, vector<8x16x16xf32> -> vector<8x16x16xf32>
    %cst_27 = arith.constant dense<0.000000e+00> : vector<8x16x16xf32>
    %21 = tpu.matmul %19, %9, %cst_27 {dimension_numbers = #tpu.dot_dimension_numbers<[2], [1], [1], [2], [0, 0, 0, 1, 1, 2], [0], [0]>} : vector<8x16x5xf32>, vector<8x5x16xf32>, vector<8x16x16xf32> -> vector<8x16x16xf32>
    "tpu.trace_stop"() : () -> ()
    %22 = arith.addf %20, %21 : vector<8x16x16xf32>
    %cst_28 = arith.constant dense<0.000000e+00> : vector<16x16xf32>
    %23 = vector.multi_reduction <add>, %22, %cst_28 [0] : vector<8x16x16xf32> to vector<16x16xf32>
    %24 = vector.shape_cast %23 : vector<16x16xf32> to vector<1x16x16xf32>
    %cst_29 = arith.constant 8.000000e+00 : f32
    %25 = vector.broadcast %cst_29 : f32 to vector<1x16x16xf32>
    %26 = arith.divf %24, %25 : vector<1x16x16xf32>
    %27 = vector.broadcast %26 : vector<1x16x16xf32> to vector<8x16x16xf32>
    %28 = arith.subf %22, %27 : vector<8x16x16xf32>
    %cst_30 = arith.constant dense<0xFF800000> : vector<8x16xf32>
    %29 = vector.multi_reduction <maximumf>, %28, %cst_30 [2] : vector<8x16x16xf32> to vector<8x16xf32>
    %30 = vector.shape_cast %29 : vector<8x16xf32> to vector<8x16x1xf32>
    %31 = vector.broadcast %30 : vector<8x16x1xf32> to vector<8x16x16xf32>
    %32 = arith.subf %28, %31 : vector<8x16x16xf32>
    %33 = math.exp %32 : vector<8x16x16xf32>
    %cst_31 = arith.constant dense<0.000000e+00> : vector<8x16xf32>
    %34 = vector.multi_reduction <add>, %33, %cst_31 [2] : vector<8x16x16xf32> to vector<8x16xf32>
    %35 = vector.shape_cast %34 : vector<8x16xf32> to vector<8x16x1xf32>
    %36 = vector.broadcast %35 : vector<8x16x1xf32> to vector<8x16x16xf32>
    %37 = arith.divf %33, %36 : vector<8x16x16xf32>
    %38 = tpu.transpose %37, [0, 2, 1] : vector<8x16x16xf32> -> vector<8x16x16xf32>
    "tpu.trace_start"() <{level = 10 : i32, message = "htl,hld->htd"}> : () -> ()
    %cst_32 = arith.constant dense<0.000000e+00> : vector<8x16x8xf32>
    %39 = tpu.matmul %38, %5, %cst_32 {dimension_numbers = #tpu.dot_dimension_numbers<[2], [1], [1], [2], [0, 0, 0, 1, 1, 2], [0], [0]>} : vector<8x16x16xf32>, vector<8x16x8xf32>, vector<8x16x8xf32> -> vector<8x16x8xf32>
    "tpu.trace_stop"() : () -> ()
    %c0_33 = arith.constant 0 : index
    %c0_34 = arith.constant 0 : index
    %c0_35 = arith.constant 0 : index
    %c0_36 = arith.constant 0 : index
    %40 = vector.load %arg8[%c0_33, %c0_34, %c0_35, %c0_36] : memref<1x8x16x8xf32, #tpu.memory_space<vmem>>, vector<1x8x16x8xf32>
    %41 = vector.shape_cast %40 : vector<1x8x16x8xf32> to vector<8x16x8xf32>
    %42 = vector.shape_cast %39 : vector<8x16x8xf32> to vector<1x8x16x8xf32>
    tpu.vector_store %arg8[%c0_33, %c0_34, %c0_35, %c0_36], %42 {strides = array<i32>} : memref<1x8x16x8xf32, #tpu.memory_space<vmem>>, vector<1x8x16x8xf32>,
    return
  }
  func.func @transform_0(%arg0: i32) -> (i32, i32, i32, i32) {
    %c0_i32 = arith.constant 0 : i32
    %c0_i32_0 = arith.constant 0 : i32
    %c0_i32_1 = arith.constant 0 : i32
    %c0_i32_2 = arith.constant 0 : i32
    return %arg0, %c0_i32, %c0_i32_0, %c0_i32_1 : i32, i32, i32, i32
  }
  func.func @transform_1(%arg0: i32) -> (i32, i32, i32, i32) {
    %c0_i32 = arith.constant 0 : i32
    %c0_i32_0 = arith.constant 0 : i32
    %c0_i32_1 = arith.constant 0 : i32
    %c0_i32_2 = arith.constant 0 : i32
    return %arg0, %c0_i32, %c0_i32_0, %c0_i32_1 : i32, i32, i32, i32
  }
  func.func @transform_2(%arg0: i32) -> (i32, i32, i32, i32) {
    %c0_i32 = arith.constant 0 : i32
    %c0_i32_0 = arith.constant 0 : i32
    %c0_i32_1 = arith.constant 0 : i32
    %c0_i32_2 = arith.constant 0 : i32
    return %arg0, %c0_i32, %c0_i32_0, %c0_i32_1 : i32, i32, i32, i32
  }
  func.func @transform_3(%arg0: i32) -> (i32, i32, i32) {
    %c0_i32 = arith.constant 0 : i32
    %c0_i32_0 = arith.constant 0 : i32
    %c0_i32_1 = arith.constant 0 : i32
    %c0_i32_2 = arith.constant 0 : i32
    return %c0_i32, %c0_i32_0, %c0_i32_1 : i32, i32, i32
  }
  func.func @transform_4(%arg0: i32) -> (i32, i32, i32) {
    %c0_i32 = arith.constant 0 : i32
    %c0_i32_0 = arith.constant 0 : i32
    %c0_i32_1 = arith.constant 0 : i32
    %c0_i32_2 = arith.constant 0 : i32
    return %c0_i32, %c0_i32_0, %c0_i32_1 : i32, i32, i32
  }
  func.func @transform_5(%arg0: i32) -> (i32, i32, i32) {
    %c0_i32 = arith.constant 0 : i32
    %c0_i32_0 = arith.constant 0 : i32
    %c0_i32_1 = arith.constant 0 : i32
    %c0_i32_2 = arith.constant 0 : i32
    return %c0_i32, %c0_i32_0, %c0_i32_1 : i32, i32, i32
  }
  func.func @transform_6(%arg0: i32) -> (i32, i32, i32) {
    %c0_i32 = arith.constant 0 : i32
    %c0_i32_0 = arith.constant 0 : i32
    %c0_i32_1 = arith.constant 0 : i32
    %c0_i32_2 = arith.constant 0 : i32
    return %c0_i32, %c0_i32_0, %c0_i32_1 : i32, i32, i32
  }
  func.func @transform_7(%arg0: i32) -> (i32, i32, i32, i32) {
    %c0_i32 = arith.constant 0 : i32
    %c0_i32_0 = arith.constant 0 : i32
    %c0_i32_1 = arith.constant 0 : i32
    %c0_i32_2 = arith.constant 0 : i32
    return %arg0, %c0_i32, %c0_i32_0, %c0_i32_1 : i32, i32, i32, i32
  }
}

</mosaic_0001>

<llo_original>
// kernel: tpu_custom_call.1
$region0: #{tpu_custom_call.1}
  #allocation0 [shape = 'u32[]', space=smem, size = 0x4, offset = 0x4, fixed_abs, tag = 'smem constant byte address 0x4 - core index']
  #allocation1 [shape = 'u32[144,128]{1,0:T(1,128)}', space=vmem, size = 0x12000, scoped, tag = 'internal scratch']
  %s0 = inlined_call_operand.vmem [shape: f32[2,8,16,8], index: 0, kind: input, shape index: {}]
  %s1 = inlined_call_operand.vmem [shape: f32[2,8,16,8], index: 1, kind: input, shape index: {}]
  %s2 = inlined_call_operand.vmem [shape: f32[2,8,16,8], index: 2, kind: input, shape index: {}]
  %s3 = inlined_call_operand.vmem [shape: f32[8,8,5], index: 3, kind: input, shape index: {}]
  %s4 = inlined_call_operand.vmem [shape: f32[8,8,5], index: 4, kind: input, shape index: {}]
  %s5 = inlined_call_operand.vmem [shape: f32[8,5,16], index: 5, kind: input, shape index: {}]
  %s6 = inlined_call_operand.vmem [shape: f32[8,5,16], index: 6, kind: input, shape index: {}]
  %s7 = inlined_call_operand.vmem [shape: f32[2,8,16,8], index: 7, kind: output, shape index: {}]
  %s8 = sld [smem:[#allocation0]]
  $region61: #{tpu_custom_call.1} parent=0
    _
  %s10 = ssub.s32 1, %s8
  %s11 = scalar_select 0, %s10, %s8
  loop: start=0, step=1, limit=4
  $region2: #{tpu_custom_call.1} parent=0 // loop_pre_header
    _
  $region3: #{tpu_custom_call.1} parent=0 // loop_header
    %s13 = sphi 0, %s17
    %p14 = scmp.ge.s32.totalorder %s13, 4
    %s23 = sphi 0, %s25
    %s26 = sphi 0, %s23
    %s27 = sphi 0, %s26
    %s43 = sphi 0, %s27
    %s49 = sphi 0, %s51
    %s52 = sphi 0, %s49
    %s53 = sphi 0, %s52
    %s69 = sphi 0, %s53
    %s75 = sphi 0, %s77
    %s78 = sphi 0, %s75
    %s79 = sphi 0, %s78
    %s95 = sphi 0, %s79
    %s99 = sphi 0, %s99
    %s101 = sphi 0, %s99
    %s102 = sphi 0, %s101
    %s116 = sphi 0, %s102
    %s120 = sphi 0, %s120
    %s122 = sphi 0, %s120
    %s123 = sphi 0, %s122
    %s137 = sphi 0, %s123
    %s141 = sphi 0, %s141
    %s143 = sphi 0, %s141
    %s144 = sphi 0, %s143
    %s158 = sphi 0, %s144
    %s162 = sphi 0, %s162
    %s164 = sphi 0, %s162
    %s165 = sphi 0, %s164
    %s179 = sphi 0, %s165
    %s185 = sphi 0, %s187
    %s188 = sphi 0, %s185
    %s189 = sphi 0, %s188
    %s205 = sphi 0, %s189
  $region4: #{tpu_custom_call.1} parent=0 // loop_header_branch
    %16 = sbr.rel (%p14) target = $region8
  $region5: #{tpu_custom_call.1} parent=0 // loop_body
    %s18 = ssub.s32 %s13, 1
    %s19 = ssub.s32 %s13, 2
    %s20 = sadd.s32 %s13, 1
    %s21 = ssub.s32 %s13, %s20
    %p22 = scmp.eq.s32.totalorder %s21, 0
    %s24 = sadd.s32 %s23, 1
    %s25 = scalar_select %p22, %s23, %s24
    %p28 = pneg %p22
    %p29 = scmp.eq.s32.totalorder %s13, 1
    %p30 = por %p28, %p29
    %p31 = scmp.ne.s32.totalorder %s23, %s26
    %p32 = scmp.eq.s32.totalorder %s13, 0
    %p33 = por %p31, %p32
    %p34 = scmp.ne.s32.totalorder %s23, %s26
    %p35 = scmp.eq.s32.totalorder %s18, 1
    %p36 = por %p34, %p35
    %p37 = scmp.ne.s32.totalorder %s26, %s27
    %p38 = scmp.eq.s32.totalorder %s18, 0
    %p39 = por %p37, %p38
    %p40 = scmp.ne.s32.totalorder %s26, %s27
    %p41 = scmp.eq.s32.totalorder %s19, 1
    %p42 = por %p40, %p41
    %p44 = scmp.ne.s32.totalorder %s27, %s43
    %p45 = scmp.eq.s32.totalorder %s19, 0
    %p46 = por %p44, %p45
    %s47 = ssub.s32 %s13, %s20
    %p48 = scmp.eq.s32.totalorder %s47, 0
    %s50 = sadd.s32 %s49, 1
    %s51 = scalar_select %p48, %s49, %s50
    %p54 = pneg %p48
    %p55 = scmp.eq.s32.totalorder %s13, 1
    %p56 = por %p54, %p55
    %p57 = scmp.ne.s32.totalorder %s49, %s52
    %p58 = scmp.eq.s32.totalorder %s13, 0
    %p59 = por %p57, %p58
    %p60 = scmp.ne.s32.totalorder %s49, %s52
    %p61 = scmp.eq.s32.totalorder %s18, 1
    %p62 = por %p60, %p61
    %p63 = scmp.ne.s32.totalorder %s52, %s53
    %p64 = scmp.eq.s32.totalorder %s18, 0
    %p65 = por %p63, %p64
    %p66 = scmp.ne.s32.totalorder %s52, %s53
    %p67 = scmp.eq.s32.totalorder %s19, 1
    %p68 = por %p66, %p67
    %p70 = scmp.ne.s32.totalorder %s53, %s69
    %p71 = scmp.eq.s32.totalorder %s19, 0
    %p72 = por %p70, %p71
    %s73 = ssub.s32 %s13, %s20
    %p74 = scmp.eq.s32.totalorder %s73, 0
    %s76 = sadd.s32 %s75, 1
    %s77 = scalar_select %p74, %s75, %s76
    %p80 = pneg %p74
    %p81 = scmp.eq.s32.totalorder %s13, 1
    %p82 = por %p80, %p81
    %p83 = scmp.ne.s32.totalorder %s75, %s78
    %p84 = scmp.eq.s32.totalorder %s13, 0
    %p85 = por %p83, %p84
    %p86 = scmp.ne.s32.totalorder %s75, %s78
    %p87 = scmp.eq.s32.totalorder %s18, 1
    %p88 = por %p86, %p87
    %p89 = scmp.ne.s32.totalorder %s78, %s79
    %p90 = scmp.eq.s32.totalorder %s18, 0
    %p91 = por %p89, %p90
    %p92 = scmp.ne.s32.totalorder %s78, %s79
    %p93 = scmp.eq.s32.totalorder %s19, 1
    %p94 = por %p92, %p93
    %p96 = scmp.ne.s32.totalorder %s79, %s95
    %p97 = scmp.eq.s32.totalorder %s19, 0
    %p98 = por %p96, %p97
    %s100 = sadd.s32 %s99, 1
    %p103 = scmp.eq.s32.totalorder %s13, 1
    %p104 = scmp.ne.s32.totalorder %s99, %s101
    %p105 = scmp.eq.s32.totalorder %s13, 0
    %p106 = por %p104, %p105
    %p107 = scmp.ne.s32.totalorder %s99, %s101
    %p108 = scmp.eq.s32.totalorder %s18, 1
    %p109 = por %p107, %p108
    %p110 = scmp.ne.s32.totalorder %s101, %s102
    %p111 = scmp.eq.s32.totalorder %s18, 0
    %p112 = por %p110, %p111
    %p113 = scmp.ne.s32.totalorder %s101, %s102
    %p114 = scmp.eq.s32.totalorder %s19, 1
    %p115 = por %p113, %p114
    %p117 = scmp.ne.s32.totalorder %s102, %s116
    %p118 = scmp.eq.s32.totalorder %s19, 0
    %p119 = por %p117, %p118
    %s121 = sadd.s32 %s120, 1
    %p124 = scmp.eq.s32.totalorder %s13, 1
    %p125 = scmp.ne.s32.totalorder %s120, %s122
    %p126 = scmp.eq.s32.totalorder %s13, 0
    %p127 = por %p125, %p126
    %p128 = scmp.ne.s32.totalorder %s120, %s122
    %p129 = scmp.eq.s32.totalorder %s18, 1
    %p130 = por %p128, %p129
    %p131 = scmp.ne.s32.totalorder %s122, %s123
    %p132 = scmp.eq.s32.totalorder %s18, 0
    %p133 = por %p131, %p132
    %p134 = scmp.ne.s32.totalorder %s122, %s123
    %p135 = scmp.eq.s32.totalorder %s19, 1
    %p136 = por %p134, %p135
    %p138 = scmp.ne.s32.totalorder %s123, %s137
    %p139 = scmp.eq.s32.totalorder %s19, 0
    %p140 = por %p138, %p139
    %s142 = sadd.s32 %s141, 1
    %p145 = scmp.eq.s32.totalorder %s13, 1
    %p146 = scmp.ne.s32.totalorder %s141, %s143
    %p147 = scmp.eq.s32.totalorder %s13, 0
    %p148 = por %p146, %p147
    %p149 = scmp.ne.s32.totalorder %s141, %s143
    %p150 = scmp.eq.s32.totalorder %s18, 1
    %p151 = por %p149, %p150
    %p152 = scmp.ne.s32.totalorder %s143, %s144
    %p153 = scmp.eq.s32.totalorder %s18, 0
    %p154 = por %p152, %p153
    %p155 = scmp.ne.s32.totalorder %s143, %s144
    %p156 = scmp.eq.s32.totalorder %s19, 1
    %p157 = por %p155, %p156
    %p159 = scmp.ne.s32.totalorder %s144, %s158
    %p160 = scmp.eq.s32.totalorder %s19, 0
    %p161 = por %p159, %p160
    %s163 = sadd.s32 %s162, 1
    %p166 = scmp.eq.s32.totalorder %s13, 1
    %p167 = scmp.ne.s32.totalorder %s162, %s164
    %p168 = scmp.eq.s32.totalorder %s13, 0
    %p169 = por %p167, %p168
    %p170 = scmp.ne.s32.totalorder %s162, %s164
    %p171 = scmp.eq.s32.totalorder %s18, 1
    %p172 = por %p170, %p171
    %p173 = scmp.ne.s32.totalorder %s164, %s165
    %p174 = scmp.eq.s32.totalorder %s18, 0
    %p175 = por %p173, %p174
    %p176 = scmp.ne.s32.totalorder %s164, %s165
    %p177 = scmp.eq.s32.totalorder %s19, 1
    %p178 = por %p176, %p177
    %p180 = scmp.ne.s32.totalorder %s165, %s179
    %p181 = scmp.eq.s32.totalorder %s19, 0
    %p182 = por %p180, %p181
    %s183 = ssub.s32 %s13, %s20
    %p184 = scmp.eq.s32.totalorder %s183, 0
    %s186 = sadd.s32 %s185, 1
    %s187 = scalar_select %p184, %s185, %s186
    %p190 = pneg %p184
    %p191 = scmp.eq.s32.totalorder %s13, 1
    %p192 = por %p190, %p191
    %p193 = scmp.ne.s32.totalorder %s185, %s188
    %p194 = scmp.eq.s32.totalorder %s13, 0
    %p195 = por %p193, %p194
    %p196 = scmp.ne.s32.totalorder %s185, %s188
    %p197 = scmp.eq.s32.totalorder %s18, 1
    %p198 = por %p196, %p197
    %p199 = scmp.ne.s32.totalorder %s188, %s189
    %p200 = scmp.eq.s32.totalorder %s18, 0
    %p201 = por %p199, %p200
    %p202 = scmp.ne.s32.totalorder %s188, %s189
    %p203 = scmp.eq.s32.totalorder %s19, 1
    %p204 = por %p202, %p203
    %p206 = scmp.ne.s32.totalorder %s189, %s205
    %p207 = scmp.eq.s32.totalorder %s19, 0
    %p208 = por %p206, %p207
    %p209 = scmp.le.s32.totalorder 1, %s13
    %p210 = scmp.lt.s32.totalorder %s13, 3
    %p211 = pnand %p209, %p210
    %p212 = pneg %p211
    // Predicated region
    $region9: #{tpu_custom_call.1} parent=5 // pred_check
      _
    $region10: #{tpu_custom_call.1} parent=5 // pred_check_branch
      %214 = sbr.rel (%p211) target = $region12
    $region11: #{tpu_custom_call.1} parent=5 // pred_region
      %s215 = ssub.s32 %s13, 1
      // Predicated region
      $region13: #{tpu_custom_call.1} parent=11 // pred_check
        %p216 = pneg %p112
      $region14: #{tpu_custom_call.1} parent=11 // pred_check_branch
        %218 = sbr.rel (%p216) target = $region16
      $region15: #{tpu_custom_call.1} parent=11 // pred_region
        _
      $region16: #{tpu_custom_call.1} parent=11 // pred_fallthru
        _
      // Predicated region
      $region17: #{tpu_custom_call.1} parent=11 // pred_check
        %p219 = pneg %p133
      $region18: #{tpu_custom_call.1} parent=11 // pred_check_branch
        %221 = sbr.rel (%p219) target = $region20
      $region19: #{tpu_custom_call.1} parent=11 // pred_region
        _
      $region20: #{tpu_custom_call.1} parent=11 // pred_fallthru
        _
      // Predicated region
      $region21: #{tpu_custom_call.1} parent=11 // pred_check
        %p222 = pneg %p154
      $region22: #{tpu_custom_call.1} parent=11 // pred_check_branch
        %224 = sbr.rel (%p222) target = $region24
      $region23: #{tpu_custom_call.1} parent=11 // pred_region
        _
      $region24: #{tpu_custom_call.1} parent=11 // pred_fallthru
        _
      // Predicated region
      $region25: #{tpu_custom_call.1} parent=11 // pred_check
        %p225 = pneg %p175
      $region26: #{tpu_custom_call.1} parent=11 // pred_check_branch
        %227 = sbr.rel (%p225) target = $region28
      $region27: #{tpu_custom_call.1} parent=11 // pred_region
        _
      $region28: #{tpu_custom_call.1} parent=11 // pred_fallthru
        _
    $region12: #{tpu_custom_call.1} parent=5 // pred_fallthru
      _
    %p228 = scmp.lt.s32.totalorder %s13, 2
    // Predicated region
    $region29: #{tpu_custom_call.1} parent=5 // pred_check
      %p229 = pneg %p228
    $region30: #{tpu_custom_call.1} parent=5 // pred_check_branch
      %231 = sbr.rel (%p229) target = $region32
    $region31: #{tpu_custom_call.1} parent=5 // pred_region
      // Predicated region
      $region33: #{tpu_custom_call.1} parent=31 // pred_check
        %p232 = pneg %p33
      $region34: #{tpu_custom_call.1} parent=31 // pred_check_branch
        %234 = sbr.rel (%p232) target = $region36
      $region35: #{tpu_custom_call.1} parent=31 // pred_region
        %p235 = scmp.lt.s32.totalorder %s13, 1
        %s236 = scalar_select %p235, %s13, 1
        %s237 = smul.addr %s236, 16
        %s238 = smul.addr %s237, 8
        %s239 = scalar_lea.vmem %s0, %s238
      $region36: #{tpu_custom_call.1} parent=31 // pred_fallthru
        _
      // Predicated region
      $region37: #{tpu_custom_call.1} parent=31 // pred_check
        %p240 = pneg %p59
      $region38: #{tpu_custom_call.1} parent=31 // pred_check_branch
        %242 = sbr.rel (%p240) target = $region40
      $region39: #{tpu_custom_call.1} parent=31 // pred_region
        %p243 = scmp.lt.s32.totalorder %s13, 1
        %s244 = scalar_select %p243, %s13, 1
        %s245 = smul.addr %s244, 16
        %s246 = smul.addr %s245, 8
        %s247 = scalar_lea.vmem %s1, %s246
      $region40: #{tpu_custom_call.1} parent=31 // pred_fallthru
        _
      // Predicated region
      $region41: #{tpu_custom_call.1} parent=31 // pred_check
        %p248 = pneg %p85
      $region42: #{tpu_custom_call.1} parent=31 // pred_check_branch
        %250 = sbr.rel (%p248) target = $region44
      $region43: #{tpu_custom_call.1} parent=31 // pred_region
        %p251 = scmp.lt.s32.totalorder %s13, 1
        %s252 = scalar_select %p251, %s13, 1
        %s253 = smul.addr %s252, 16
        %s254 = smul.addr %s253, 8
        %s255 = scalar_lea.vmem %s2, %s254
      $region44: #{tpu_custom_call.1} parent=31 // pred_fallthru
        _
    $region32: #{tpu_custom_call.1} parent=5 // pred_fallthru
      _
    %p256 = scmp.le.s32.totalorder 1, %s13
    %p257 = scmp.lt.s32.totalorder %s13, 3
    %p258 = pnand %p256, %p257
    %p259 = pneg %p258
    // Predicated region
    $region45: #{tpu_custom_call.1} parent=5 // pred_check
      _
    $region46: #{tpu_custom_call.1} parent=5 // pred_check_branch
      %261 = sbr.rel (%p258) target = $region48
    $region47: #{tpu_custom_call.1} parent=5 // pred_region
      %s262 = ssub.s32 %s13, 1
      %p263 = scmp.lt.s32.totalorder %s18, 1
      %s264 = scalar_select %p263, %s18, 1
      %s265 = smul.addr %s264, 16
      %s266 = smul.addr %s265, 8
      %s267 = scalar_lea.vmem %s0, %s266
      %p268 = pneg %p39
      %p269 = pneg %p36
      %p270 = scmp.lt.s32.totalorder %s18, 1
      %s271 = scalar_select %p270, %s18, 1
      %s272 = smul.addr %s271, 16
      %s273 = smul.addr %s272, 8
      %s274 = scalar_lea.vmem %s1, %s273
      %p275 = pneg %p65
      %p276 = pneg %p62
      %p277 = scmp.lt.s32.totalorder %s18, 1
      %s278 = scalar_select %p277, %s18, 1
      %s279 = smul.addr %s278, 16
      %s280 = smul.addr %s279, 8
      %s281 = scalar_lea.vmem %s2, %s280
      %p282 = pneg %p91
      %p283 = pneg %p88
      %p284 = pneg %p112
      %p285 = pneg %p109
      %p286 = pneg %p133
      %p287 = pneg %p130
      %p288 = pneg %p154
      %p289 = pneg %p151
      %p290 = pneg %p175
      %p291 = pneg %p172
      %p292 = pneg %p201
      %p293 = pneg %p198
      %p294 = scmp.lt.s32.totalorder %s18, 1
      %s295 = scalar_select %p294, %s18, 1
      %s296 = smul.addr %s295, 16
      %s297 = smul.addr %s296, 8
      %s298 = scalar_lea.vmem %s7, %s297
      %p299 = scmp.lt.s32.totalorder %s18, 1
      %s300 = scalar_select %p299, %s18, 1
      %s301 = smul.addr %s300, 16
      %s302 = smul.addr %s301, 8
      %s303 = scalar_lea.vmem %s0, %s302
      %p304 = scmp.lt.s32.totalorder %s18, 1
      %s305 = scalar_select %p304, %s18, 1
      %s306 = smul.addr %s305, 16
      %s307 = smul.addr %s306, 8
      %s308 = scalar_lea.vmem %s1, %s307
      %p309 = scmp.lt.s32.totalorder %s18, 1
      %s310 = scalar_select %p309, %s18, 1
      %s311 = smul.addr %s310, 16
      %s312 = smul.addr %s311, 8
      %s313 = scalar_lea.vmem %s2, %s312
      %p314 = scmp.lt.s32.totalorder %s18, 1
      %s315 = scalar_select %p314, %s18, 1
      %s316 = smul.addr %s315, 16
      %s317 = smul.addr %s316, 8
      %s318 = scalar_lea.vmem %s7, %s317
      %v319 = vld [vmem:[%s303] sm:$0xff]
      %v320 = vld [vmem:[%s303 + $0x8] sm:$0xff]
      %v321 = vld [vmem:[%s303 + $0x10] sm:$0xff]
      %v322 = vld [vmem:[%s303 + $0x18] sm:$0xff]
      %v323 = vld [vmem:[%s303 + $0x20] sm:$0xff]
      %v324 = vld [vmem:[%s303 + $0x28] sm:$0xff]
      %v325 = vld [vmem:[%s303 + $0x30] sm:$0xff]
      %v326 = vld [vmem:[%s303 + $0x38] sm:$0xff]
      %v327 = vld [vmem:[%s303 + $0x40] sm:$0xff]
      %v328 = vld [vmem:[%s303 + $0x48] sm:$0xff]
      %v329 = vld [vmem:[%s303 + $0x50] sm:$0xff]
      %v330 = vld [vmem:[%s303 + $0x58] sm:$0xff]
      %v331 = vld [vmem:[%s303 + $0x60] sm:$0xff]
      %v332 = vld [vmem:[%s303 + $0x68] sm:$0xff]
      %v333 = vld [vmem:[%s303 + $0x70] sm:$0xff]
      %v334 = vld [vmem:[%s303 + $0x78] sm:$0xff]
      %v335 = vld [vmem:[%s308] sm:$0xff]
      %v336 = vld [vmem:[%s308 + $0x8] sm:$0xff]
      %v337 = vld [vmem:[%s308 + $0x10] sm:$0xff]
      %v338 = vld [vmem:[%s308 + $0x18] sm:$0xff]
      %v339 = vld [vmem:[%s308 + $0x20] sm:$0xff]
      %v340 = vld [vmem:[%s308 + $0x28] sm:$0xff]
      %v341 = vld [vmem:[%s308 + $0x30] sm:$0xff]
      %v342 = vld [vmem:[%s308 + $0x38] sm:$0xff]
      %v343 = vld [vmem:[%s308 + $0x40] sm:$0xff]
      %v344 = vld [vmem:[%s308 + $0x48] sm:$0xff]
      %v345 = vld [vmem:[%s308 + $0x50] sm:$0xff]
      %v346 = vld [vmem:[%s308 + $0x58] sm:$0xff]
      %v347 = vld [vmem:[%s308 + $0x60] sm:$0xff]
      %v348 = vld [vmem:[%s308 + $0x68] sm:$0xff]
      %v349 = vld [vmem:[%s308 + $0x70] sm:$0xff]
      %v350 = vld [vmem:[%s308 + $0x78] sm:$0xff]
      %v351 = vld [vmem:[%s313] sm:$0xff]
      %v352 = vld [vmem:[%s313 + $0x8] sm:$0xff]
      %v353 = vld [vmem:[%s313 + $0x10] sm:$0xff]
      %v354 = vld [vmem:[%s313 + $0x18] sm:$0xff]
      %v355 = vld [vmem:[%s313 + $0x20] sm:$0xff]
      %v356 = vld [vmem:[%s313 + $0x28] sm:$0xff]
      %v357 = vld [vmem:[%s313 + $0x30] sm:$0xff]
      %v358 = vld [vmem:[%s313 + $0x38] sm:$0xff]
      %v359 = vld [vmem:[%s313 + $0x40] sm:$0xff]
      %v360 = vld [vmem:[%s313 + $0x48] sm:$0xff]
      %v361 = vld [vmem:[%s313 + $0x50] sm:$0xff]
      %v362 = vld [vmem:[%s313 + $0x58] sm:$0xff]
      %v363 = vld [vmem:[%s313 + $0x60] sm:$0xff]
      %v364 = vld [vmem:[%s313 + $0x68] sm:$0xff]
      %v365 = vld [vmem:[%s313 + $0x70] sm:$0xff]
      %v366 = vld [vmem:[%s313 + $0x78] sm:$0xff]
      %v367 = vld [vmem:[%s3] sm:$0xff]
      %v368 = vld [vmem:[%s3 + $0x8] sm:$0xff]
      %v369 = vld [vmem:[%s3 + $0x10] sm:$0xff]
      %v370 = vld [vmem:[%s3 + $0x18] sm:$0xff]
      %v371 = vld [vmem:[%s3 + $0x20] sm:$0xff]
      %v372 = vld [vmem:[%s3 + $0x28] sm:$0xff]
      %v373 = vld [vmem:[%s3 + $0x30] sm:$0xff]
      %v374 = vld [vmem:[%s3 + $0x38] sm:$0xff]
      %v375 = vld [vmem:[%s4] sm:$0xff]
      %v376 = vld [vmem:[%s4 + $0x8] sm:$0xff]
      %v377 = vld [vmem:[%s4 + $0x10] sm:$0xff]
      %v378 = vld [vmem:[%s4 + $0x18] sm:$0xff]
      %v379 = vld [vmem:[%s4 + $0x20] sm:$0xff]
      %v380 = vld [vmem:[%s4 + $0x28] sm:$0xff]
      %v381 = vld [vmem:[%s4 + $0x30] sm:$0xff]
      %v382 = vld [vmem:[%s4 + $0x38] sm:$0xff]
      %v383 = vld [vmem:[%s5] sm:$0x1f]
      %v384 = vld [vmem:[%s5 + $0x8] sm:$0x1f]
      %v385 = vld [vmem:[%s5 + $0x10] sm:$0x1f]
      %v386 = vld [vmem:[%s5 + $0x18] sm:$0x1f]
      %v387 = vld [vmem:[%s5 + $0x20] sm:$0x1f]
      %v388 = vld [vmem:[%s5 + $0x28] sm:$0x1f]
      %v389 = vld [vmem:[%s5 + $0x30] sm:$0x1f]
      %v390 = vld [vmem:[%s5 + $0x38] sm:$0x1f]
      %v391 = vld [vmem:[%s6] sm:$0x1f]
      %v392 = vld [vmem:[%s6 + $0x8] sm:$0x1f]
      %v393 = vld [vmem:[%s6 + $0x10] sm:$0x1f]
      %v394 = vld [vmem:[%s6 + $0x18] sm:$0x1f]
      %v395 = vld [vmem:[%s6 + $0x20] sm:$0x1f]
      %v396 = vld [vmem:[%s6 + $0x28] sm:$0x1f]
      %v397 = vld [vmem:[%s6 + $0x30] sm:$0x1f]
      %v398 = vld [vmem:[%s6 + $0x38] sm:$0x1f]
      %vm399 = vcmask 64512
      %v401 = vsel %vm399, %v319, 0
      %v404 = vsel %vm399, %v320, 0
      %406 = vmatprep.subr.mxu0 0.0
      %407 = vmatpush1.msra.mxu0 %v367
      %408 = vmatprep.subr.mxu0 0.0
      %409 = vmatpush1.msra.mxu0 0.0
      %410 = vmatprep.subr.mxu0 0.0
      %411 = vmatpush1.msra.mxu0 0.0
      %412 = vmatprep.subr.mxu0 0.0
      %413 = vmatpush1.msra.mxu0 0.0
      %414 = vmatprep.subr.mxu0 0.0
      %415 = vmatpush1.msra.mxu0 0.0
      %416 = vmatprep.subr.mxu0 0.0
      %417 = vmatpush1.msra.mxu0 0.0
      %418 = vmatprep.subr.mxu0 0.0
      %419 = vmatpush1.msra.mxu0 0.0
      %420 = vmatprep.subr.mxu0 0.0
      %421 = vmatpush1.msra.mxu0 0.0
      %422 = vmatprep.subr.mxu0 0.0
      %423 = vmatpush1.msra.mxu0 0.0
      %424 = vmatprep.subr.mxu0 0.0
      %425 = vmatpush1.msra.mxu0 0.0
      %426 = vmatprep.subr.mxu0 0.0
      %427 = vmatpush1.msra.mxu0 0.0
      %428 = vmatprep.subr.mxu0 0.0
      %429 = vmatpush1.msra.mxu0 0.0
      %430 = vmatprep.subr.mxu0 0.0
      %431 = vmatpush1.msra.mxu0 0.0
      %432 = vmatprep.subr.mxu0 0.0
      %433 = vmatpush1.msra.mxu0 0.0
      %434 = vmatprep.subr.mxu0 0.0
      %435 = vmatpush1.msra.mxu0 0.0
      %436 = vmatprep.subr.mxu0 0.0
      %437 = vmatpush1.msra.mxu0 0.0
      %438 = vmatprep.subr.mxu0 0.0
      %439 = vmatpush1.msra.mxu0 0.0
      %440 = vmatprep.subr.mxu0 0.0
      %441 = vmatpush1.msra.mxu0 0.0
      %442 = vmatprep.subr.mxu0 0.0
      %443 = vmatpush1.msra.mxu0 0.0
      %444 = vmatprep.subr.mxu0 0.0
      %445 = vmatpush1.msra.mxu0 0.0
      %446 = vmatprep.subr.mxu0 0.0
      %447 = vmatpush1.msra.mxu0 0.0
      %448 = vmatprep.subr.mxu0 0.0
      %449 = vmatpush1.msra.mxu0 0.0
      %450 = vmatprep.subr.mxu0 0.0
      %451 = vmatpush1.msra.mxu0 0.0
      %452 = vmatprep.subr.mxu0 0.0
      %453 = vmatpush1.msra.mxu0 0.0
      %454 = vmatprep.subr.mxu0 0.0
      %455 = vmatpush1.msra.mxu0 0.0
      %456 = vmatprep.subr.mxu0 0.0
      %457 = vmatpush1.msra.mxu0 0.0
      %458 = vmatprep.subr.mxu0 0.0
      %459 = vmatpush1.msra.mxu0 0.0
      %460 = vmatprep.subr.mxu0 0.0
      %461 = vmatpush1.msra.mxu0 0.0
      %462 = vmatprep.subr.mxu0 0.0
      %463 = vmatpush1.msra.mxu0 0.0
      %464 = vmatprep.subr.mxu0 0.0
      %465 = vmatpush1.msra.mxu0 0.0
      %466 = vmatprep.subr.mxu0 0.0
      %467 = vmatpush1.msra.mxu0 0.0
      %468 = vmatprep.subr.mxu0 0.0
      %469 = vmatpush1.msra.mxu0 0.0
      %470 = vmatprep.mubr.f32.mxu0 0.0
      %471 = vmatmul.mubr.f32.gmra.mrb[0].mxu0 %v401
      %v472 = vpop.f32.mrb[0].mxu0
      %v473 = vadd.f32 0.0, %v472
      %v474 = vpop.f32.mrb[0].mxu0
      %475 = vmatprep.mubr.f32.mxu0 0.0
      %476 = vmatmul.mubr.f32.gmra.mrb[0].mxu0 %v404
      %v477 = vpop.f32.mrb[0].mxu0
      %v478 = vadd.f32 0.0, %v477
      %v479 = vpop.f32.mrb[0].mxu0
      %480 = vdwg.mxu0
      %v482 = vsel %vm399, %v321, 0
      %v485 = vsel %vm399, %v322, 0
      %487 = vmatprep.subr.mxu0 0.0
      %488 = vmatpush1.msra.mxu0 %v368
      %489 = vmatprep.subr.mxu0 0.0
      %490 = vmatpush1.msra.mxu0 0.0
      %491 = vmatprep.subr.mxu0 0.0
      %492 = vmatpush1.msra.mxu0 0.0
      %493 = vmatprep.subr.mxu0 0.0
      %494 = vmatpush1.msra.mxu0 0.0
      %495 = vmatprep.subr.mxu0 0.0
      %496 = vmatpush1.msra.mxu0 0.0
      %497 = vmatprep.subr.mxu0 0.0
      %498 = vmatpush1.msra.mxu0 0.0
      %499 = vmatprep.subr.mxu0 0.0
      %500 = vmatpush1.msra.mxu0 0.0
      %501 = vmatprep.subr.mxu0 0.0
      %502 = vmatpush1.msra.mxu0 0.0
      %503 = vmatprep.subr.mxu0 0.0
      %504 = vmatpush1.msra.mxu0 0.0
      %505 = vmatprep.subr.mxu0 0.0
      %506 = vmatpush1.msra.mxu0 0.0
      %507 = vmatprep.subr.mxu0 0.0
      %508 = vmatpush1.msra.mxu0 0.0
      %509 = vmatprep.subr.mxu0 0.0
      %510 = vmatpush1.msra.mxu0 0.0
      %511 = vmatprep.subr.mxu0 0.0
      %512 = vmatpush1.msra.mxu0 0.0
      %513 = vmatprep.subr.mxu0 0.0
      %514 = vmatpush1.msra.mxu0 0.0
      %515 = vmatprep.subr.mxu0 0.0
      %516 = vmatpush1.msra.mxu0 0.0
      %517 = vmatprep.subr.mxu0 0.0
      %518 = vmatpush1.msra.mxu0 0.0
      %519 = vmatprep.subr.mxu0 0.0
      %520 = vmatpush1.msra.mxu0 0.0
      %521 = vmatprep.subr.mxu0 0.0
      %522 = vmatpush1.msra.mxu0 0.0
      %523 = vmatprep.subr.mxu0 0.0
      %524 = vmatpush1.msra.mxu0 0.0
      %525 = vmatprep.subr.mxu0 0.0
      %526 = vmatpush1.msra.mxu0 0.0
      %527 = vmatprep.subr.mxu0 0.0
      %528 = vmatpush1.msra.mxu0 0.0
      %529 = vmatprep.subr.mxu0 0.0
      %530 = vmatpush1.msra.mxu0 0.0
      %531 = vmatprep.subr.mxu0 0.0
      %532 = vmatpush1.msra.mxu0 0.0
      %533 = vmatprep.subr.mxu0 0.0
      %534 = vmatpush1.msra.mxu0 0.0
      %535 = vmatprep.subr.mxu0 0.0
      %536 = vmatpush1.msra.mxu0 0.0
      %537 = vmatprep.subr.mxu0 0.0
      %538 = vmatpush1.msra.mxu0 0.0
      %539 = vmatprep.subr.mxu0 0.0
      %540 = vmatpush1.msra.mxu0 0.0
      %541 = vmatprep.subr.mxu0 0.0
      %542 = vmatpush1.msra.mxu0 0.0
      %543 = vmatprep.subr.mxu0 0.0
      %544 = vmatpush1.msra.mxu0 0.0
      %545 = vmatprep.subr.mxu0 0.0
      %546 = vmatpush1.msra.mxu0 0.0
      %547 = vmatprep.subr.mxu0 0.0
      %548 = vmatpush1.msra.mxu0 0.0
      %549 = vmatprep.subr.mxu0 0.0
      %550 = vmatpush1.msra.mxu0 0.0
      %551 = vmatprep.mubr.f32.mxu0 0.0
      %552 = vmatmul.mubr.f32.gmra.mrb[0].mxu0 %v482
      %v553 = vpop.f32.mrb[0].mxu0
      %v554 = vadd.f32 0.0, %v553
      %v555 = vpop.f32.mrb[0].mxu0
      %556 = vmatprep.mubr.f32.mxu0 0.0
      %557 = vmatmul.mubr.f32.gmra.mrb[0].mxu0 %v485
      %v558 = vpop.f32.mrb[0].mxu0
      %v559 = vadd.f32 0.0, %v558
      %v560 = vpop.f32.mrb[0].mxu0
      %561 = vdwg.mxu0
      %v563 = vsel %vm399, %v323, 0
      %v566 = vsel %vm399, %v324, 0
      %568 = vmatprep.subr.mxu0 0.0
      %569 = vmatpush1.msra.mxu0 %v369
      %570 = vmatprep.subr.mxu0 0.0
      %571 = vmatpush1.msra.mxu0 0.0
      %572 = vmatprep.subr.mxu0 0.0
      %573 = vmatpush1.msra.mxu0 0.0
      %574 = vmatprep.subr.mxu0 0.0
      %575 = vmatpush1.msra.mxu0 0.0
      %576 = vmatprep.subr.mxu0 0.0
      %577 = vmatpush1.msra.mxu0 0.0
      %578 = vmatprep.subr.mxu0 0.0
      %579 = vmatpush1.msra.mxu0 0.0
      %580 = vmatprep.subr.mxu0 0.0
      %581 = vmatpush1.msra.mxu0 0.0
      %582 = vmatprep.subr.mxu0 0.0
      %583 = vmatpush1.msra.mxu0 0.0
      %584 = vmatprep.subr.mxu0 0.0
      %585 = vmatpush1.msra.mxu0 0.0
      %586 = vmatprep.subr.mxu0 0.0
      %587 = vmatpush1.msra.mxu0 0.0
      %588 = vmatprep.subr.mxu0 0.0
      %589 = vmatpush1.msra.mxu0 0.0
      %590 = vmatprep.subr.mxu0 0.0
      %591 = vmatpush1.msra.mxu0 0.0
      %592 = vmatprep.subr.mxu0 0.0
      %593 = vmatpush1.msra.mxu0 0.0
      %594 = vmatprep.subr.mxu0 0.0
      %595 = vmatpush1.msra.mxu0 0.0
      %596 = vmatprep.subr.mxu0 0.0
      %597 = vmatpush1.msra.mxu0 0.0
      %598 = vmatprep.subr.mxu0 0.0
      %599 = vmatpush1.msra.mxu0 0.0
      %600 = vmatprep.subr.mxu0 0.0
      %601 = vmatpush1.msra.mxu0 0.0
      %602 = vmatprep.subr.mxu0 0.0
      %603 = vmatpush1.msra.mxu0 0.0
      %604 = vmatprep.subr.mxu0 0.0
      %605 = vmatpush1.msra.mxu0 0.0
      %606 = vmatprep.subr.mxu0 0.0
      %607 = vmatpush1.msra.mxu0 0.0
      %608 = vmatprep.subr.mxu0 0.0
      %609 = vmatpush1.msra.mxu0 0.0
      %610 = vmatprep.subr.mxu0 0.0
      %611 = vmatpush1.msra.mxu0 0.0
      %612 = vmatprep.subr.mxu0 0.0
      %613 = vmatpush1.msra.mxu0 0.0
      %614 = vmatprep.subr.mxu0 0.0
      %615 = vmatpush1.msra.mxu0 0.0
      %616 = vmatprep.subr.mxu0 0.0
      %617 = vmatpush1.msra.mxu0 0.0
      %618 = vmatprep.subr.mxu0 0.0
      %619 = vmatpush1.msra.mxu0 0.0
      %620 = vmatprep.subr.mxu0 0.0
      %621 = vmatpush1.msra.mxu0 0.0
      %622 = vmatprep.subr.mxu0 0.0
      %623 = vmatpush1.msra.mxu0 0.0
      %624 = vmatprep.subr.mxu0 0.0
      %625 = vmatpush1.msra.mxu0 0.0
      %626 = vmatprep.subr.mxu0 0.0
      %627 = vmatpush1.msra.mxu0 0.0
      %628 = vmatprep.subr.mxu0 0.0
      %629 = vmatpush1.msra.mxu0 0.0
      %630 = vmatprep.subr.mxu0 0.0
      %631 = vmatpush1.msra.mxu0 0.0
      %632 = vmatprep.mubr.f32.mxu0 0.0
      %633 = vmatmul.mubr.f32.gmra.mrb[0].mxu0 %v563
      %v634 = vpop.f32.mrb[0].mxu0
      %v635 = vadd.f32 0.0, %v634
      %v636 = vpop.f32.mrb[0].mxu0
      %637 = vmatprep.mubr.f32.mxu0 0.0
      %638 = vmatmul.mubr.f32.gmra.mrb[0].mxu0 %v566
      %v639 = vpop.f32.mrb[0].mxu0
      %v640 = vadd.f32 0.0, %v639
      %v641 = vpop.f32.mrb[0].mxu0
      %642 = vdwg.mxu0
      %v644 = vsel %vm399, %v325, 0
      %v647 = vsel %vm399, %v326, 0
      %649 = vmatprep.subr.mxu0 0.0
      %650 = vmatpush1.msra.mxu0 %v370
      %651 = vmatprep.subr.mxu0 0.0
      %652 = vmatpush1.msra.mxu0 0.0
      %653 = vmatprep.subr.mxu0 0.0
      %654 = vmatpush1.msra.mxu0 0.0
      %655 = vmatprep.subr.mxu0 0.0
      %656 = vmatpush1.msra.mxu0 0.0
      %657 = vmatprep.subr.mxu0 0.0
      %658 = vmatpush1.msra.mxu0 0.0
      %659 = vmatprep.subr.mxu0 0.0
      %660 = vmatpush1.msra.mxu0 0.0
      %661 = vmatprep.subr.mxu0 0.0
      %662 = vmatpush1.msra.mxu0 0.0
      %663 = vmatprep.subr.mxu0 0.0
      %664 = vmatpush1.msra.mxu0 0.0
      %665 = vmatprep.subr.mxu0 0.0
      %666 = vmatpush1.msra.mxu0 0.0
      %667 = vmatprep.subr.mxu0 0.0
      %668 = vmatpush1.msra.mxu0 0.0
      %669 = vmatprep.subr.mxu0 0.0
      %670 = vmatpush1.msra.mxu0 0.0
      %671 = vmatprep.subr.mxu0 0.0
      %672 = vmatpush1.msra.mxu0 0.0
      %673 = vmatprep.subr.mxu0 0.0
      %674 = vmatpush1.msra.mxu0 0.0
      %675 = vmatprep.subr.mxu0 0.0
      %676 = vmatpush1.msra.mxu0 0.0
      %677 = vmatprep.subr.mxu0 0.0
      %678 = vmatpush1.msra.mxu0 0.0
      %679 = vmatprep.subr.mxu0 0.0
      %680 = vmatpush1.msra.mxu0 0.0
      %681 = vmatprep.subr.mxu0 0.0
      %682 = vmatpush1.msra.mxu0 0.0
      %683 = vmatprep.subr.mxu0 0.0
      %684 = vmatpush1.msra.mxu0 0.0
      %685 = vmatprep.subr.mxu0 0.0
      %686 = vmatpush1.msra.mxu0 0.0
      %687 = vmatprep.subr.mxu0 0.0
      %688 = vmatpush1.msra.mxu0 0.0
      %689 = vmatprep.subr.mxu0 0.0
      %690 = vmatpush1.msra.mxu0 0.0
      %691 = vmatprep.subr.mxu0 0.0
      %692 = vmatpush1.msra.mxu0 0.0
      %693 = vmatprep.subr.mxu0 0.0
      %694 = vmatpush1.msra.mxu0 0.0
      %695 = vmatprep.subr.mxu0 0.0
      %696 = vmatpush1.msra.mxu0 0.0
      %697 = vmatprep.subr.mxu0 0.0
      %698 = vmatpush1.msra.mxu0 0.0
      %699 = vmatprep.subr.mxu0 0.0
      %700 = vmatpush1.msra.mxu0 0.0
      %701 = vmatprep.subr.mxu0 0.0
      %702 = vmatpush1.msra.mxu0 0.0
      %703 = vmatprep.subr.mxu0 0.0
      %704 = vmatpush1.msra.mxu0 0.0
      %705 = vmatprep.subr.mxu0 0.0
      %706 = vmatpush1.msra.mxu0 0.0
      %707 = vmatprep.subr.mxu0 0.0
      %708 = vmatpush1.msra.mxu0 0.0
      %709 = vmatprep.subr.mxu0 0.0
      %710 = vmatpush1.msra.mxu0 0.0
      %711 = vmatprep.subr.mxu0 0.0
      %712 = vmatpush1.msra.mxu0 0.0
      %713 = vmatprep.mubr.f32.mxu0 0.0
      %714 = vmatmul.mubr.f32.gmra.mrb[0].mxu0 %v644
      %v715 = vpop.f32.mrb[0].mxu0
      %v716 = vadd.f32 0.0, %v715
      %v717 = vpop.f32.mrb[0].mxu0
      %718 = vmatprep.mubr.f32.mxu0 0.0
      %719 = vmatmul.mubr.f32.gmra.mrb[0].mxu0 %v647
      %v720 = vpop.f32.mrb[0].mxu0
      %v721 = vadd.f32 0.0, %v720
      %v722 = vpop.f32.mrb[0].mxu0
      %723 = vdwg.mxu0
      %v725 = vsel %vm399, %v327, 0
      %v728 = vsel %vm399, %v328, 0
      %730 = vmatprep.subr.mxu0 0.0
      %731 = vmatpush1.msra.mxu0 %v371
      %732 = vmatprep.subr.mxu0 0.0
      %733 = vmatpush1.msra.mxu0 0.0
      %734 = vmatprep.subr.mxu0 0.0
      %735 = vmatpush1.msra.mxu0 0.0
      %736 = vmatprep.subr.mxu0 0.0
      %737 = vmatpush1.msra.mxu0 0.0
      %738 = vmatprep.subr.mxu0 0.0
      %739 = vmatpush1.msra.mxu0 0.0
      %740 = vmatprep.subr.mxu0 0.0
      %741 = vmatpush1.msra.mxu0 0.0
      %742 = vmatprep.subr.mxu0 0.0
      %743 = vmatpush1.msra.mxu0 0.0
      %744 = vmatprep.subr.mxu0 0.0
      %745 = vmatpush1.msra.mxu0 0.0
      %746 = vmatprep.subr.mxu0 0.0
      %747 = vmatpush1.msra.mxu0 0.0
      %748 = vmatprep.subr.mxu0 0.0
      %749 = vmatpush1.msra.mxu0 0.0
      %750 = vmatprep.subr.mxu0 0.0
      %751 = vmatpush1.msra.mxu0 0.0
      %752 = vmatprep.subr.mxu0 0.0
      %753 = vmatpush1.msra.mxu0 0.0
      %754 = vmatprep.subr.mxu0 0.0
      %755 = vmatpush1.msra.mxu0 0.0
      %756 = vmatprep.subr.mxu0 0.0
      %757 = vmatpush1.msra.mxu0 0.0
      %758 = vmatprep.subr.mxu0 0.0
      %759 = vmatpush1.msra.mxu0 0.0
      %760 = vmatprep.subr.mxu0 0.0
      %761 = vmatpush1.msra.mxu0 0.0
      %762 = vmatprep.subr.mxu0 0.0
      %763 = vmatpush1.msra.mxu0 0.0
      %764 = vmatprep.subr.mxu0 0.0
      %765 = vmatpush1.msra.mxu0 0.0
      %766 = vmatprep.subr.mxu0 0.0
      %767 = vmatpush1.msra.mxu0 0.0
      %768 = vmatprep.subr.mxu0 0.0
      %769 = vmatpush1.msra.mxu0 0.0
      %770 = vmatprep.subr.mxu0 0.0
      %771 = vmatpush1.msra.mxu0 0.0
      %772 = vmatprep.subr.mxu0 0.0
      %773 = vmatpush1.msra.mxu0 0.0
      %774 = vmatprep.subr.mxu0 0.0
      %775 = vmatpush1.msra.mxu0 0.0
      %776 = vmatprep.subr.mxu0 0.0
      %777 = vmatpush1.msra.mxu0 0.0
      %778 = vmatprep.subr.mxu0 0.0
      %779 = vmatpush1.msra.mxu0 0.0
      %780 = vmatprep.subr.mxu0 0.0
      %781 = vmatpush1.msra.mxu0 0.0
      %782 = vmatprep.subr.mxu0 0.0
      %783 = vmatpush1.msra.mxu0 0.0
      %784 = vmatprep.subr.mxu0 0.0
      %785 = vmatpush1.msra.mxu0 0.0
      %786 = vmatprep.subr.mxu0 0.0
      %787 = vmatpush1.msra.mxu0 0.0
      %788 = vmatprep.subr.mxu0 0.0
      %789 = vmatpush1.msra.mxu0 0.0
      %790 = vmatprep.subr.mxu0 0.0
      %791 = vmatpush1.msra.mxu0 0.0
      %792 = vmatprep.subr.mxu0 0.0
      %793 = vmatpush1.msra.mxu0 0.0
      %794 = vmatprep.mubr.f32.mxu0 0.0
      %795 = vmatmul.mubr.f32.gmra.mrb[0].mxu0 %v725
      %v796 = vpop.f32.mrb[0].mxu0
      %v797 = vadd.f32 0.0, %v796
      %v798 = vpop.f32.mrb[0].mxu0
      %799 = vmatprep.mubr.f32.mxu0 0.0
      %800 = vmatmul.mubr.f32.gmra.mrb[0].mxu0 %v728
      %v801 = vpop.f32.mrb[0].mxu0
      %v802 = vadd.f32 0.0, %v801
      %v803 = vpop.f32.mrb[0].mxu0
      %804 = vdwg.mxu0
      %v806 = vsel %vm399, %v329, 0
      %v809 = vsel %vm399, %v330, 0
      %811 = vmatprep.subr.mxu0 0.0
      %812 = vmatpush1.msra.mxu0 %v372
      %813 = vmatprep.subr.mxu0 0.0
      %814 = vmatpush1.msra.mxu0 0.0
      %815 = vmatprep.subr.mxu0 0.0
      %816 = vmatpush1.msra.mxu0 0.0
      %817 = vmatprep.subr.mxu0 0.0
      %818 = vmatpush1.msra.mxu0 0.0
      %819 = vmatprep.subr.mxu0 0.0
      %820 = vmatpush1.msra.mxu0 0.0
      %821 = vmatprep.subr.mxu0 0.0
      %822 = vmatpush1.msra.mxu0 0.0
      %823 = vmatprep.subr.mxu0 0.0
      %824 = vmatpush1.msra.mxu0 0.0
      %825 = vmatprep.subr.mxu0 0.0
      %826 = vmatpush1.msra.mxu0 0.0
      %827 = vmatprep.subr.mxu0 0.0
      %828 = vmatpush1.msra.mxu0 0.0
      %829 = vmatprep.subr.mxu0 0.0
      %830 = vmatpush1.msra.mxu0 0.0
      %831 = vmatprep.subr.mxu0 0.0
      %832 = vmatpush1.msra.mxu0 0.0
      %833 = vmatprep.subr.mxu0 0.0
      %834 = vmatpush1.msra.mxu0 0.0
      %835 = vmatprep.subr.mxu0 0.0
      %836 = vmatpush1.msra.mxu0 0.0
      %837 = vmatprep.subr.mxu0 0.0
      %838 = vmatpush1.msra.mxu0 0.0
      %839 = vmatprep.subr.mxu0 0.0
      %840 = vmatpush1.msra.mxu0 0.0
      %841 = vmatprep.subr.mxu0 0.0
      %842 = vmatpush1.msra.mxu0 0.0
      %843 = vmatprep.subr.mxu0 0.0
      %844 = vmatpush1.msra.mxu0 0.0
      %845 = vmatprep.subr.mxu0 0.0
      %846 = vmatpush1.msra.mxu0 0.0
      %847 = vmatprep.subr.mxu0 0.0
      %848 = vmatpush1.msra.mxu0 0.0
      %849 = vmatprep.subr.mxu0 0.0
      %850 = vmatpush1.msra.mxu0 0.0
      %851 = vmatprep.subr.mxu0 0.0
      %852 = vmatpush1.msra.mxu0 0.0
      %853 = vmatprep.subr.mxu0 0.0
      %854 = vmatpush1.msra.mxu0 0.0
      %855 = vmatprep.subr.mxu0 0.0
      %856 = vmatpush1.msra.mxu0 0.0
      %857 = vmatprep.subr.mxu0 0.0
      %858 = vmatpush1.msra.mxu0 0.0
      %859 = vmatprep.subr.mxu0 0.0
      %860 = vmatpush1.msra.mxu0 0.0
      %861 = vmatprep.subr.mxu0 0.0
      %862 = vmatpush1.msra.mxu0 0.0
      %863 = vmatprep.subr.mxu0 0.0
      %864 = vmatpush1.msra.mxu0 0.0
      %865 = vmatprep.subr.mxu0 0.0
      %866 = vmatpush1.msra.mxu0 0.0
      %867 = vmatprep.subr.mxu0 0.0
      %868 = vmatpush1.msra.mxu0 0.0
      %869 = vmatprep.subr.mxu0 0.0
      %870 = vmatpush1.msra.mxu0 0.0
      %871 = vmatprep.subr.mxu0 0.0
      %872 = vmatpush1.msra.mxu0 0.0
      %873 = vmatprep.subr.mxu0 0.0
      %874 = vmatpush1.msra.mxu0 0.0
      %875 = vmatprep.mubr.f32.mxu0 0.0
      %876 = vmatmul.mubr.f32.gmra.mrb[0].mxu0 %v806
      %v877 = vpop.f32.mrb[0].mxu0
      %v878 = vadd.f32 0.0, %v877
      %v879 = vpop.f32.mrb[0].mxu0
      %880 = vmatprep.mubr.f32.mxu0 0.0
      %881 = vmatmul.mubr.f32.gmra.mrb[0].mxu0 %v809
      %v882 = vpop.f32.mrb[0].mxu0
      %v883 = vadd.f32 0.0, %v882
      %v884 = vpop.f32.mrb[0].mxu0
      %885 = vdwg.mxu0
      %v887 = vsel %vm399, %v331, 0
      %v890 = vsel %vm399, %v332, 0
      %892 = vmatprep.subr.mxu0 0.0
      %893 = vmatpush1.msra.mxu0 %v373
      %894 = vmatprep.subr.mxu0 0.0
      %895 = vmatpush1.msra.mxu0 0.0
      %896 = vmatprep.subr.mxu0 0.0
      %897 = vmatpush1.msra.mxu0 0.0
      %898 = vmatprep.subr.mxu0 0.0
      %899 = vmatpush1.msra.mxu0 0.0
      %900 = vmatprep.subr.mxu0 0.0
      %901 = vmatpush1.msra.mxu0 0.0
      %902 = vmatprep.subr.mxu0 0.0
      %903 = vmatpush1.msra.mxu0 0.0
      %904 = vmatprep.subr.mxu0 0.0
      %905 = vmatpush1.msra.mxu0 0.0
      %906 = vmatprep.subr.mxu0 0.0
      %907 = vmatpush1.msra.mxu0 0.0
      %908 = vmatprep.subr.mxu0 0.0
      %909 = vmatpush1.msra.mxu0 0.0
      %910 = vmatprep.subr.mxu0 0.0
      %911 = vmatpush1.msra.mxu0 0.0
      %912 = vmatprep.subr.mxu0 0.0
      %913 = vmatpush1.msra.mxu0 0.0
      %914 = vmatprep.subr.mxu0 0.0
      %915 = vmatpush1.msra.mxu0 0.0
      %916 = vmatprep.subr.mxu0 0.0
      %917 = vmatpush1.msra.mxu0 0.0
      %918 = vmatprep.subr.mxu0 0.0
      %919 = vmatpush1.msra.mxu0 0.0
      %920 = vmatprep.subr.mxu0 0.0
      %921 = vmatpush1.msra.mxu0 0.0
      %922 = vmatprep.subr.mxu0 0.0
      %923 = vmatpush1.msra.mxu0 0.0
      %924 = vmatprep.subr.mxu0 0.0
      %925 = vmatpush1.msra.mxu0 0.0
      %926 = vmatprep.subr.mxu0 0.0
      %927 = vmatpush1.msra.mxu0 0.0
      %928 = vmatprep.subr.mxu0 0.0
      %929 = vmatpush1.msra.mxu0 0.0
      %930 = vmatprep.subr.mxu0 0.0
      %931 = vmatpush1.msra.mxu0 0.0
      %932 = vmatprep.subr.mxu0 0.0
      %933 = vmatpush1.msra.mxu0 0.0
      %934 = vmatprep.subr.mxu0 0.0
      %935 = vmatpush1.msra.mxu0 0.0
      %936 = vmatprep.subr.mxu0 0.0
      %937 = vmatpush1.msra.mxu0 0.0
      %938 = vmatprep.subr.mxu0 0.0
      %939 = vmatpush1.msra.mxu0 0.0
      %940 = vmatprep.subr.mxu0 0.0
      %941 = vmatpush1.msra.mxu0 0.0
      %942 = vmatprep.subr.mxu0 0.0
      %943 = vmatpush1.msra.mxu0 0.0
      %944 = vmatprep.subr.mxu0 0.0
      %945 = vmatpush1.msra.mxu0 0.0
      %946 = vmatprep.subr.mxu0 0.0
      %947 = vmatpush1.msra.mxu0 0.0
      %948 = vmatprep.subr.mxu0 0.0
      %949 = vmatpush1.msra.mxu0 0.0
      %950 = vmatprep.subr.mxu0 0.0
      %951 = vmatpush1.msra.mxu0 0.0
      %952 = vmatprep.subr.mxu0 0.0
      %953 = vmatpush1.msra.mxu0 0.0
      %954 = vmatprep.subr.mxu0 0.0
      %955 = vmatpush1.msra.mxu0 0.0
      %956 = vmatprep.mubr.f32.mxu0 0.0
      %957 = vmatmul.mubr.f32.gmra.mrb[0].mxu0 %v887
      %v958 = vpop.f32.mrb[0].mxu0
      %v959 = vadd.f32 0.0, %v958
      %v960 = vpop.f32.mrb[0].mxu0
      %961 = vmatprep.mubr.f32.mxu0 0.0
      %962 = vmatmul.mubr.f32.gmra.mrb[0].mxu0 %v890
      %v963 = vpop.f32.mrb[0].mxu0
      %v964 = vadd.f32 0.0, %v963
      %v965 = vpop.f32.mrb[0].mxu0
      %966 = vdwg.mxu0
      %v968 = vsel %vm399, %v333, 0
      %v971 = vsel %vm399, %v334, 0
      %973 = vmatprep.subr.mxu0 0.0
      %974 = vmatpush1.msra.mxu0 %v374
      %975 = vmatprep.subr.mxu0 0.0
      %976 = vmatpush1.msra.mxu0 0.0
      %977 = vmatprep.subr.mxu0 0.0
      %978 = vmatpush1.msra.mxu0 0.0
      %979 = vmatprep.subr.mxu0 0.0
      %980 = vmatpush1.msra.mxu0 0.0
      %981 = vmatprep.subr.mxu0 0.0
      %982 = vmatpush1.msra.mxu0 0.0
      %983 = vmatprep.subr.mxu0 0.0
      %984 = vmatpush1.msra.mxu0 0.0
      %985 = vmatprep.subr.mxu0 0.0
      %986 = vmatpush1.msra.mxu0 0.0
      %987 = vmatprep.subr.mxu0 0.0
      %988 = vmatpush1.msra.mxu0 0.0
      %989 = vmatprep.subr.mxu0 0.0
      %990 = vmatpush1.msra.mxu0 0.0
      %991 = vmatprep.subr.mxu0 0.0
      %992 = vmatpush1.msra.mxu0 0.0
      %993 = vmatprep.subr.mxu0 0.0
      %994 = vmatpush1.msra.mxu0 0.0
      %995 = vmatprep.subr.mxu0 0.0
      %996 = vmatpush1.msra.mxu0 0.0
      %997 = vmatprep.subr.mxu0 0.0
      %998 = vmatpush1.msra.mxu0 0.0
      %999 = vmatprep.subr.mxu0 0.0
      %1000 = vmatpush1.msra.mxu0 0.0
      %1001 = vmatprep.subr.mxu0 0.0
      %1002 = vmatpush1.msra.mxu0 0.0
      %1003 = vmatprep.subr.mxu0 0.0
      %1004 = vmatpush1.msra.mxu0 0.0
      %1005 = vmatprep.subr.mxu0 0.0
      %1006 = vmatpush1.msra.mxu0 0.0
      %1007 = vmatprep.subr.mxu0 0.0
      %1008 = vmatpush1.msra.mxu0 0.0
      %1009 = vmatprep.subr.mxu0 0.0
      %1010 = vmatpush1.msra.mxu0 0.0
      %1011 = vmatprep.subr.mxu0 0.0
      %1012 = vmatpush1.msra.mxu0 0.0
      %1013 = vmatprep.subr.mxu0 0.0
      %1014 = vmatpush1.msra.mxu0 0.0
      %1015 = vmatprep.subr.mxu0 0.0
      %1016 = vmatpush1.msra.mxu0 0.0
      %1017 = vmatprep.subr.mxu0 0.0
      %1018 = vmatpush1.msra.mxu0 0.0
      %1019 = vmatprep.subr.mxu0 0.0
      %1020 = vmatpush1.msra.mxu0 0.0
      %1021 = vmatprep.subr.mxu0 0.0
      %1022 = vmatpush1.msra.mxu0 0.0
      %1023 = vmatprep.subr.mxu0 0.0
      %1024 = vmatpush1.msra.mxu0 0.0
      %1025 = vmatprep.subr.mxu0 0.0
      %1026 = vmatpush1.msra.mxu0 0.0
      %1027 = vmatprep.subr.mxu0 0.0
      %1028 = vmatpush1.msra.mxu0 0.0
      %1029 = vmatprep.subr.mxu0 0.0
      %1030 = vmatpush1.msra.mxu0 0.0
      %1031 = vmatprep.subr.mxu0 0.0
      %1032 = vmatpush1.msra.mxu0 0.0
      %1033 = vmatprep.subr.mxu0 0.0
      %1034 = vmatpush1.msra.mxu0 0.0
      %1035 = vmatprep.subr.mxu0 0.0
      %1036 = vmatpush1.msra.mxu0 0.0
      %1037 = vmatprep.mubr.f32.mxu0 0.0
      %1038 = vmatmul.mubr.f32.gmra.mrb[0].mxu0 %v968
      %v1039 = vpop.f32.mrb[0].mxu0
      %v1040 = vadd.f32 0.0, %v1039
      %v1041 = vpop.f32.mrb[0].mxu0
      %1042 = vmatprep.mubr.f32.mxu0 0.0
      %1043 = vmatmul.mubr.f32.gmra.mrb[0].mxu0 %v971
      %v1044 = vpop.f32.mrb[0].mxu0
      %v1045 = vadd.f32 0.0, %v1044
      %v1046 = vpop.f32.mrb[0].mxu0
      %1047 = vdwg.mxu0
      %1048 = vmatprep.subr.mxu0 0.0
      %1049 = vmatpush1.msra.mxu0 %v375
      %1050 = vmatprep.subr.mxu0 0.0
      %1051 = vmatpush1.msra.mxu0 0.0
      %1052 = vmatprep.subr.mxu0 0.0
      %1053 = vmatpush1.msra.mxu0 0.0
      %1054 = vmatprep.subr.mxu0 0.0
      %1055 = vmatpush1.msra.mxu0 0.0
      %1056 = vmatprep.subr.mxu0 0.0
      %1057 = vmatpush1.msra.mxu0 0.0
      %1058 = vmatprep.subr.mxu0 0.0
      %1059 = vmatpush1.msra.mxu0 0.0
      %1060 = vmatprep.subr.mxu0 0.0
      %1061 = vmatpush1.msra.mxu0 0.0
      %1062 = vmatprep.subr.mxu0 0.0
      %1063 = vmatpush1.msra.mxu0 0.0
      %1064 = vmatprep.subr.mxu0 0.0
      %1065 = vmatpush1.msra.mxu0 0.0
      %1066 = vmatprep.subr.mxu0 0.0
      %1067 = vmatpush1.msra.mxu0 0.0
      %1068 = vmatprep.subr.mxu0 0.0
      %1069 = vmatpush1.msra.mxu0 0.0
      %1070 = vmatprep.subr.mxu0 0.0
      %1071 = vmatpush1.msra.mxu0 0.0
      %1072 = vmatprep.subr.mxu0 0.0
      %1073 = vmatpush1.msra.mxu0 0.0
      %1074 = vmatprep.subr.mxu0 0.0
      %1075 = vmatpush1.msra.mxu0 0.0
      %1076 = vmatprep.subr.mxu0 0.0
      %1077 = vmatpush1.msra.mxu0 0.0
      %1078 = vmatprep.subr.mxu0 0.0
      %1079 = vmatpush1.msra.mxu0 0.0
      %1080 = vmatprep.subr.mxu0 0.0
      %1081 = vmatpush1.msra.mxu0 0.0
      %1082 = vmatprep.subr.mxu0 0.0
      %1083 = vmatpush1.msra.mxu0 0.0
      %1084 = vmatprep.subr.mxu0 0.0
      %1085 = vmatpush1.msra.mxu0 0.0
      %1086 = vmatprep.subr.mxu0 0.0
      %1087 = vmatpush1.msra.mxu0 0.0
      %1088 = vmatprep.subr.mxu0 0.0
      %1089 = vmatpush1.msra.mxu0 0.0
      %1090 = vmatprep.subr.mxu0 0.0
      %1091 = vmatpush1.msra.mxu0 0.0
      %1092 = vmatprep.subr.mxu0 0.0
      %1093 = vmatpush1.msra.mxu0 0.0
      %1094 = vmatprep.subr.mxu0 0.0
      %1095 = vmatpush1.msra.mxu0 0.0
      %1096 = vmatprep.subr.mxu0 0.0
      %1097 = vmatpush1.msra.mxu0 0.0
      %1098 = vmatprep.subr.mxu0 0.0
      %1099 = vmatpush1.msra.mxu0 0.0
      %1100 = vmatprep.subr.mxu0 0.0
      %1101 = vmatpush1.msra.mxu0 0.0
      %1102 = vmatprep.subr.mxu0 0.0
      %1103 = vmatpush1.msra.mxu0 0.0
      %1104 = vmatprep.subr.mxu0 0.0
      %1105 = vmatpush1.msra.mxu0 0.0
      %1106 = vmatprep.subr.mxu0 0.0
      %1107 = vmatpush1.msra.mxu0 0.0
      %1108 = vmatprep.subr.mxu0 0.0
      %1109 = vmatpush1.msra.mxu0 0.0
      %1110 = vmatprep.subr.mxu0 0.0
      %1111 = vmatpush1.msra.mxu0 0.0
      %1112 = vmatprep.mubr.f32.mxu0 0.0
      %1113 = vmatmul.mubr.f32.gmra.mrb[0].mxu0 %v401
      %v1114 = vpop.f32.mrb[0].mxu0
      %v1115 = vadd.f32 0.0, %v1114
      %v1116 = vpop.f32.mrb[0].mxu0
      %1117 = vmatprep.mubr.f32.mxu0 0.0
      %1118 = vmatmul.mubr.f32.gmra.mrb[0].mxu0 %v404
      %v1119 = vpop.f32.mrb[0].mxu0
      %v1120 = vadd.f32 0.0, %v1119
      %v1121 = vpop.f32.mrb[0].mxu0
      %1122 = vdwg.mxu0
      %1123 = vmatprep.subr.mxu0 0.0
      %1124 = vmatpush1.msra.mxu0 %v376
      %1125 = vmatprep.subr.mxu0 0.0
      %1126 = vmatpush1.msra.mxu0 0.0
      %1127 = vmatprep.subr.mxu0 0.0
      %1128 = vmatpush1.msra.mxu0 0.0
      %1129 = vmatprep.subr.mxu0 0.0
      %1130 = vmatpush1.msra.mxu0 0.0
      %1131 = vmatprep.subr.mxu0 0.0
      %1132 = vmatpush1.msra.mxu0 0.0
      %1133 = vmatprep.subr.mxu0 0.0
      %1134 = vmatpush1.msra.mxu0 0.0
      %1135 = vmatprep.subr.mxu0 0.0
      %1136 = vmatpush1.msra.mxu0 0.0
      %1137 = vmatprep.subr.mxu0 0.0
      %1138 = vmatpush1.msra.mxu0 0.0
      %1139 = vmatprep.subr.mxu0 0.0
      %1140 = vmatpush1.msra.mxu0 0.0
      %1141 = vmatprep.subr.mxu0 0.0
      %1142 = vmatpush1.msra.mxu0 0.0
      %1143 = vmatprep.subr.mxu0 0.0
      %1144 = vmatpush1.msra.mxu0 0.0
      %1145 = vmatprep.subr.mxu0 0.0
      %1146 = vmatpush1.msra.mxu0 0.0
      %1147 = vmatprep.subr.mxu0 0.0
      %1148 = vmatpush1.msra.mxu0 0.0
      %1149 = vmatprep.subr.mxu0 0.0
      %1150 = vmatpush1.msra.mxu0 0.0
      %1151 = vmatprep.subr.mxu0 0.0
      %1152 = vmatpush1.msra.mxu0 0.0
      %1153 = vmatprep.subr.mxu0 0.0
      %1154 = vmatpush1.msra.mxu0 0.0
      %1155 = vmatprep.subr.mxu0 0.0
      %1156 = vmatpush1.msra.mxu0 0.0
      %1157 = vmatprep.subr.mxu0 0.0
      %1158 = vmatpush1.msra.mxu0 0.0
      %1159 = vmatprep.subr.mxu0 0.0
      %1160 = vmatpush1.msra.mxu0 0.0
      %1161 = vmatprep.subr.mxu0 0.0
      %1162 = vmatpush1.msra.mxu0 0.0
      %1163 = vmatprep.subr.mxu0 0.0
      %1164 = vmatpush1.msra.mxu0 0.0
      %1165 = vmatprep.subr.mxu0 0.0
      %1166 = vmatpush1.msra.mxu0 0.0
      %1167 = vmatprep.subr.mxu0 0.0
      %1168 = vmatpush1.msra.mxu0 0.0
      %1169 = vmatprep.subr.mxu0 0.0
      %1170 = vmatpush1.msra.mxu0 0.0
      %1171 = vmatprep.subr.mxu0 0.0
      %1172 = vmatpush1.msra.mxu0 0.0
      %1173 = vmatprep.subr.mxu0 0.0
      %1174 = vmatpush1.msra.mxu0 0.0
      %1175 = vmatprep.subr.mxu0 0.0
      %1176 = vmatpush1.msra.mxu0 0.0
      %1177 = vmatprep.subr.mxu0 0.0
      %1178 = vmatpush1.msra.mxu0 0.0
      %1179 = vmatprep.subr.mxu0 0.0
      %1180 = vmatpush1.msra.mxu0 0.0
      %1181 = vmatprep.subr.mxu0 0.0
      %1182 = vmatpush1.msra.mxu0 0.0
      %1183 = vmatprep.subr.mxu0 0.0
      %1184 = vmatpush1.msra.mxu0 0.0
      %1185 = vmatprep.subr.mxu0 0.0
      %1186 = vmatpush1.msra.mxu0 0.0
      %1187 = vmatprep.mubr.f32.mxu0 0.0
      %1188 = vmatmul.mubr.f32.gmra.mrb[0].mxu0 %v482
      %v1189 = vpop.f32.mrb[0].mxu0
      %v1190 = vadd.f32 0.0, %v1189
      %v1191 = vpop.f32.mrb[0].mxu0
      %1192 = vmatprep.mubr.f32.mxu0 0.0
      %1193 = vmatmul.mubr.f32.gmra.mrb[0].mxu0 %v485
      %v1194 = vpop.f32.mrb[0].mxu0
      %v1195 = vadd.f32 0.0, %v1194
      %v1196 = vpop.f32.mrb[0].mxu0
      %1197 = vdwg.mxu0
      %1198 = vmatprep.subr.mxu0 0.0
      %1199 = vmatpush1.msra.mxu0 %v377
      %1200 = vmatprep.subr.mxu0 0.0
      %1201 = vmatpush1.msra.mxu0 0.0
      %1202 = vmatprep.subr.mxu0 0.0
      %1203 = vmatpush1.msra.mxu0 0.0
      %1204 = vmatprep.subr.mxu0 0.0
      %1205 = vmatpush1.msra.mxu0 0.0
      %1206 = vmatprep.subr.mxu0 0.0
      %1207 = vmatpush1.msra.mxu0 0.0
      %1208 = vmatprep.subr.mxu0 0.0
      %1209 = vmatpush1.msra.mxu0 0.0
      %1210 = vmatprep.subr.mxu0 0.0
      %1211 = vmatpush1.msra.mxu0 0.0
      %1212 = vmatprep.subr.mxu0 0.0
      %1213 = vmatpush1.msra.mxu0 0.0
      %1214 = vmatprep.subr.mxu0 0.0
      %1215 = vmatpush1.msra.mxu0 0.0
      %1216 = vmatprep.subr.mxu0 0.0
      %1217 = vmatpush1.msra.mxu0 0.0
      %1218 = vmatprep.subr.mxu0 0.0
      %1219 = vmatpush1.msra.mxu0 0.0
      %1220 = vmatprep.subr.mxu0 0.0
      %1221 = vmatpush1.msra.mxu0 0.0
      %1222 = vmatprep.subr.mxu0 0.0
      %1223 = vmatpush1.msra.mxu0 0.0
      %1224 = vmatprep.subr.mxu0 0.0
      %1225 = vmatpush1.msra.mxu0 0.0
      %1226 = vmatprep.subr.mxu0 0.0
      %1227 = vmatpush1.msra.mxu0 0.0
      %1228 = vmatprep.subr.mxu0 0.0
      %1229 = vmatpush1.msra.mxu0 0.0
      %1230 = vmatprep.subr.mxu0 0.0
      %1231 = vmatpush1.msra.mxu0 0.0
      %1232 = vmatprep.subr.mxu0 0.0
      %1233 = vmatpush1.msra.mxu0 0.0
      %1234 = vmatprep.subr.mxu0 0.0
      %1235 = vmatpush1.msra.mxu0 0.0
      %1236 = vmatprep.subr.mxu0 0.0
      %1237 = vmatpush1.msra.mxu0 0.0
      %1238 = vmatprep.subr.mxu0 0.0
      %1239 = vmatpush1.msra.mxu0 0.0
      %1240 = vmatprep.subr.mxu0 0.0
      %1241 = vmatpush1.msra.mxu0 0.0
      %1242 = vmatprep.subr.mxu0 0.0
      %1243 = vmatpush1.msra.mxu0 0.0
      %1244 = vmatprep.subr.mxu0 0.0
      %1245 = vmatpush1.msra.mxu0 0.0
      %1246 = vmatprep.subr.mxu0 0.0
      %1247 = vmatpush1.msra.mxu0 0.0
      %1248 = vmatprep.subr.mxu0 0.0
      %1249 = vmatpush1.msra.mxu0 0.0
      %1250 = vmatprep.subr.mxu0 0.0
      %1251 = vmatpush1.msra.mxu0 0.0
      %1252 = vmatprep.subr.mxu0 0.0
      %1253 = vmatpush1.msra.mxu0 0.0
      %1254 = vmatprep.subr.mxu0 0.0
      %1255 = vmatpush1.msra.mxu0 0.0
      %1256 = vmatprep.subr.mxu0 0.0
      %1257 = vmatpush1.msra.mxu0 0.0
      %1258 = vmatprep.subr.mxu0 0.0
      %1259 = vmatpush1.msra.mxu0 0.0
      %1260 = vmatprep.subr.mxu0 0.0
      %1261 = vmatpush1.msra.mxu0 0.0
      %1262 = vmatprep.mubr.f32.mxu0 0.0
      %1263 = vmatmul.mubr.f32.gmra.mrb[0].mxu0 %v563
      %v1264 = vpop.f32.mrb[0].mxu0
      %v1265 = vadd.f32 0.0, %v1264
      %v1266 = vpop.f32.mrb[0].mxu0
      %1267 = vmatprep.mubr.f32.mxu0 0.0
      %1268 = vmatmul.mubr.f32.gmra.mrb[0].mxu0 %v566
      %v1269 = vpop.f32.mrb[0].mxu0
      %v1270 = vadd.f32 0.0, %v1269
      %v1271 = vpop.f32.mrb[0].mxu0
      %1272 = vdwg.mxu0
      %1273 = vmatprep.subr.mxu0 0.0
      %1274 = vmatpush1.msra.mxu0 %v378
      %1275 = vmatprep.subr.mxu0 0.0
      %1276 = vmatpush1.msra.mxu0 0.0
      %1277 = vmatprep.subr.mxu0 0.0
      %1278 = vmatpush1.msra.mxu0 0.0
      %1279 = vmatprep.subr.mxu0 0.0
      %1280 = vmatpush1.msra.mxu0 0.0
      %1281 = vmatprep.subr.mxu0 0.0
      %1282 = vmatpush1.msra.mxu0 0.0
      %1283 = vmatprep.subr.mxu0 0.0
      %1284 = vmatpush1.msra.mxu0 0.0
      %1285 = vmatprep.subr.mxu0 0.0
      %1286 = vmatpush1.msra.mxu0 0.0
      %1287 = vmatprep.subr.mxu0 0.0
      %1288 = vmatpush1.msra.mxu0 0.0
      %1289 = vmatprep.subr.mxu0 0.0
      %1290 = vmatpush1.msra.mxu0 0.0
      %1291 = vmatprep.subr.mxu0 0.0
      %1292 = vmatpush1.msra.mxu0 0.0
      %1293 = vmatprep.subr.mxu0 0.0
      %1294 = vmatpush1.msra.mxu0 0.0
      %1295 = vmatprep.subr.mxu0 0.0
      %1296 = vmatpush1.msra.mxu0 0.0
      %1297 = vmatprep.subr.mxu0 0.0
      %1298 = vmatpush1.msra.mxu0 0.0
      %1299 = vmatprep.subr.mxu0 0.0
      %1300 = vmatpush1.msra.mxu0 0.0
      %1301 = vmatprep.subr.mxu0 0.0
      %1302 = vmatpush1.msra.mxu0 0.0
      %1303 = vmatprep.subr.mxu0 0.0
      %1304 = vmatpush1.msra.mxu0 0.0
      %1305 = vmatprep.subr.mxu0 0.0
      %1306 = vmatpush1.msra.mxu0 0.0
      %1307 = vmatprep.subr.mxu0 0.0
      %1308 = vmatpush1.msra.mxu0 0.0
      %1309 = vmatprep.subr.mxu0 0.0
      %1310 = vmatpush1.msra.mxu0 0.0
      %1311 = vmatprep.subr.mxu0 0.0
      %1312 = vmatpush1.msra.mxu0 0.0
      %1313 = vmatprep.subr.mxu0 0.0
      %1314 = vmatpush1.msra.mxu0 0.0
      %1315 = vmatprep.subr.mxu0 0.0
      %1316 = vmatpush1.msra.mxu0 0.0
      %1317 = vmatprep.subr.mxu0 0.0
      %1318 = vmatpush1.msra.mxu0 0.0
      %1319 = vmatprep.subr.mxu0 0.0
      %1320 = vmatpush1.msra.mxu0 0.0
      %1321 = vmatprep.subr.mxu0 0.0
      %1322 = vmatpush1.msra.mxu0 0.0
      %1323 = vmatprep.subr.mxu0 0.0
      %1324 = vmatpush1.msra.mxu0 0.0
      %1325 = vmatprep.subr.mxu0 0.0
      %1326 = vmatpush1.msra.mxu0 0.0
      %1327 = vmatprep.subr.mxu0 0.0
      %1328 = vmatpush1.msra.mxu0 0.0
      %1329 = vmatprep.subr.mxu0 0.0
      %1330 = vmatpush1.msra.mxu0 0.0
      %1331 = vmatprep.subr.mxu0 0.0
      %1332 = vmatpush1.msra.mxu0 0.0
      %1333 = vmatprep.subr.mxu0 0.0
      %1334 = vmatpush1.msra.mxu0 0.0
      %1335 = vmatprep.subr.mxu0 0.0
      %1336 = vmatpush1.msra.mxu0 0.0
      %1337 = vmatprep.mubr.f32.mxu0 0.0
      %1338 = vmatmul.mubr.f32.gmra.mrb[0].mxu0 %v644
      %v1339 = vpop.f32.mrb[0].mxu0
      %v1340 = vadd.f32 0.0, %v1339
      %v1341 = vpop.f32.mrb[0].mxu0
      %1342 = vmatprep.mubr.f32.mxu0 0.0
      %1343 = vmatmul.mubr.f32.gmra.mrb[0].mxu0 %v647
      %v1344 = vpop.f32.mrb[0].mxu0
      %v1345 = vadd.f32 0.0, %v1344
      %v1346 = vpop.f32.mrb[0].mxu0
      %1347 = vdwg.mxu0
      %1348 = vmatprep.subr.mxu0 0.0
      %1349 = vmatpush1.msra.mxu0 %v379
      %1350 = vmatprep.subr.mxu0 0.0
      %1351 = vmatpush1.msra.mxu0 0.0
      %1352 = vmatprep.subr.mxu0 0.0
      %1353 = vmatpush1.msra.mxu0 0.0
      %1354 = vmatprep.subr.mxu0 0.0
      %1355 = vmatpush1.msra.mxu0 0.0
      %1356 = vmatprep.subr.mxu0 0.0
      %1357 = vmatpush1.msra.mxu0 0.0
      %1358 = vmatprep.subr.mxu0 0.0
      %1359 = vmatpush1.msra.mxu0 0.0
      %1360 = vmatprep.subr.mxu0 0.0
      %1361 = vmatpush1.msra.mxu0 0.0
      %1362 = vmatprep.subr.mxu0 0.0
      %1363 = vmatpush1.msra.mxu0 0.0
      %1364 = vmatprep.subr.mxu0 0.0
      %1365 = vmatpush1.msra.mxu0 0.0
      %1366 = vmatprep.subr.mxu0 0.0
      %1367 = vmatpush1.msra.mxu0 0.0
      %1368 = vmatprep.subr.mxu0 0.0
      %1369 = vmatpush1.msra.mxu0 0.0
      %1370 = vmatprep.subr.mxu0 0.0
      %1371 = vmatpush1.msra.mxu0 0.0
      %1372 = vmatprep.subr.mxu0 0.0
      %1373 = vmatpush1.msra.mxu0 0.0
      %1374 = vmatprep.subr.mxu0 0.0
      %1375 = vmatpush1.msra.mxu0 0.0
      %1376 = vmatprep.subr.mxu0 0.0
      %1377 = vmatpush1.msra.mxu0 0.0
      %1378 = vmatprep.subr.mxu0 0.0
      %1379 = vmatpush1.msra.mxu0 0.0
      %1380 = vmatprep.subr.mxu0 0.0
      %1381 = vmatpush1.msra.mxu0 0.0
      %1382 = vmatprep.subr.mxu0 0.0
      %1383 = vmatpush1.msra.mxu0 0.0
      %1384 = vmatprep.subr.mxu0 0.0
      %1385 = vmatpush1.msra.mxu0 0.0
      %1386 = vmatprep.subr.mxu0 0.0
      %1387 = vmatpush1.msra.mxu0 0.0
      %1388 = vmatprep.subr.mxu0 0.0
      %1389 = vmatpush1.msra.mxu0 0.0
      %1390 = vmatprep.subr.mxu0 0.0
      %1391 = vmatpush1.msra.mxu0 0.0
      %1392 = vmatprep.subr.mxu0 0.0
      %1393 = vmatpush1.msra.mxu0 0.0
      %1394 = vmatprep.subr.mxu0 0.0
      %1395 = vmatpush1.msra.mxu0 0.0
      %1396 = vmatprep.subr.mxu0 0.0
      %1397 = vmatpush1.msra.mxu0 0.0
      %1398 = vmatprep.subr.mxu0 0.0
      %1399 = vmatpush1.msra.mxu0 0.0
      %1400 = vmatprep.subr.mxu0 0.0
      %1401 = vmatpush1.msra.mxu0 0.0
      %1402 = vmatprep.subr.mxu0 0.0
      %1403 = vmatpush1.msra.mxu0 0.0
      %1404 = vmatprep.subr.mxu0 0.0
      %1405 = vmatpush1.msra.mxu0 0.0
      %1406 = vmatprep.subr.mxu0 0.0
      %1407 = vmatpush1.msra.mxu0 0.0
      %1408 = vmatprep.subr.mxu0 0.0
      %1409 = vmatpush1.msra.mxu0 0.0
      %1410 = vmatprep.subr.mxu0 0.0
      %1411 = vmatpush1.msra.mxu0 0.0
      %1412 = vmatprep.mubr.f32.mxu0 0.0
      %1413 = vmatmul.mubr.f32.gmra.mrb[0].mxu0 %v725
      %v1414 = vpop.f32.mrb[0].mxu0
      %v1415 = vadd.f32 0.0, %v1414
      %v1416 = vpop.f32.mrb[0].mxu0
      %1417 = vmatprep.mubr.f32.mxu0 0.0
      %1418 = vmatmul.mubr.f32.gmra.mrb[0].mxu0 %v728
      %v1419 = vpop.f32.mrb[0].mxu0
      %v1420 = vadd.f32 0.0, %v1419
      %v1421 = vpop.f32.mrb[0].mxu0
      %1422 = vdwg.mxu0
      %1423 = vmatprep.subr.mxu0 0.0
      %1424 = vmatpush1.msra.mxu0 %v380
      %1425 = vmatprep.subr.mxu0 0.0
      %1426 = vmatpush1.msra.mxu0 0.0
      %1427 = vmatprep.subr.mxu0 0.0
      %1428 = vmatpush1.msra.mxu0 0.0
      %1429 = vmatprep.subr.mxu0 0.0
      %1430 = vmatpush1.msra.mxu0 0.0
      %1431 = vmatprep.subr.mxu0 0.0
      %1432 = vmatpush1.msra.mxu0 0.0
      %1433 = vmatprep.subr.mxu0 0.0
      %1434 = vmatpush1.msra.mxu0 0.0
      %1435 = vmatprep.subr.mxu0 0.0
      %1436 = vmatpush1.msra.mxu0 0.0
      %1437 = vmatprep.subr.mxu0 0.0
      %1438 = vmatpush1.msra.mxu0 0.0
      %1439 = vmatprep.subr.mxu0 0.0
      %1440 = vmatpush1.msra.mxu0 0.0
      %1441 = vmatprep.subr.mxu0 0.0
      %1442 = vmatpush1.msra.mxu0 0.0
      %1443 = vmatprep.subr.mxu0 0.0
      %1444 = vmatpush1.msra.mxu0 0.0
      %1445 = vmatprep.subr.mxu0 0.0
      %1446 = vmatpush1.msra.mxu0 0.0
      %1447 = vmatprep.subr.mxu0 0.0
      %1448 = vmatpush1.msra.mxu0 0.0
      %1449 = vmatprep.subr.mxu0 0.0
      %1450 = vmatpush1.msra.mxu0 0.0
      %1451 = vmatprep.subr.mxu0 0.0
      %1452 = vmatpush1.msra.mxu0 0.0
      %1453 = vmatprep.subr.mxu0 0.0
      %1454 = vmatpush1.msra.mxu0 0.0
      %1455 = vmatprep.subr.mxu0 0.0
      %1456 = vmatpush1.msra.mxu0 0.0
      %1457 = vmatprep.subr.mxu0 0.0
      %1458 = vmatpush1.msra.mxu0 0.0
      %1459 = vmatprep.subr.mxu0 0.0
      %1460 = vmatpush1.msra.mxu0 0.0
      %1461 = vmatprep.subr.mxu0 0.0
      %1462 = vmatpush1.msra.mxu0 0.0
      %1463 = vmatprep.subr.mxu0 0.0
      %1464 = vmatpush1.msra.mxu0 0.0
      %1465 = vmatprep.subr.mxu0 0.0
      %1466 = vmatpush1.msra.mxu0 0.0
      %1467 = vmatprep.subr.mxu0 0.0
      %1468 = vmatpush1.msra.mxu0 0.0
      %1469 = vmatprep.subr.mxu0 0.0
      %1470 = vmatpush1.msra.mxu0 0.0
      %1471 = vmatprep.subr.mxu0 0.0
      %1472 = vmatpush1.msra.mxu0 0.0
      %1473 = vmatprep.subr.mxu0 0.0
      %1474 = vmatpush1.msra.mxu0 0.0
      %1475 = vmatprep.subr.mxu0 0.0
      %1476 = vmatpush1.msra.mxu0 0.0
      %1477 = vmatprep.subr.mxu0 0.0
      %1478 = vmatpush1.msra.mxu0 0.0
      %1479 = vmatprep.subr.mxu0 0.0
      %1480 = vmatpush1.msra.mxu0 0.0
      %1481 = vmatprep.subr.mxu0 0.0
      %1482 = vmatpush1.msra.mxu0 0.0
      %1483 = vmatprep.subr.mxu0 0.0
      %1484 = vmatpush1.msra.mxu0 0.0
      %1485 = vmatprep.subr.mxu0 0.0
      %1486 = vmatpush1.msra.mxu0 0.0
      %1487 = vmatprep.mubr.f32.mxu0 0.0
      %1488 = vmatmul.mubr.f32.gmra.mrb[0].mxu0 %v806
      %v1489 = vpop.f32.mrb[0].mxu0
      %v1490 = vadd.f32 0.0, %v1489
      %v1491 = vpop.f32.mrb[0].mxu0
      %1492 = vmatprep.mubr.f32.mxu0 0.0
      %1493 = vmatmul.mubr.f32.gmra.mrb[0].mxu0 %v809
      %v1494 = vpop.f32.mrb[0].mxu0
      %v1495 = vadd.f32 0.0, %v1494
      %v1496 = vpop.f32.mrb[0].mxu0
      %1497 = vdwg.mxu0
      %1498 = vmatprep.subr.mxu0 0.0
      %1499 = vmatpush1.msra.mxu0 %v381
      %1500 = vmatprep.subr.mxu0 0.0
      %1501 = vmatpush1.msra.mxu0 0.0
      %1502 = vmatprep.subr.mxu0 0.0
      %1503 = vmatpush1.msra.mxu0 0.0
      %1504 = vmatprep.subr.mxu0 0.0
      %1505 = vmatpush1.msra.mxu0 0.0
      %1506 = vmatprep.subr.mxu0 0.0
      %1507 = vmatpush1.msra.mxu0 0.0
      %1508 = vmatprep.subr.mxu0 0.0
      %1509 = vmatpush1.msra.mxu0 0.0
      %1510 = vmatprep.subr.mxu0 0.0
      %1511 = vmatpush1.msra.mxu0 0.0
      %1512 = vmatprep.subr.mxu0 0.0
      %1513 = vmatpush1.msra.mxu0 0.0
      %1514 = vmatprep.subr.mxu0 0.0
      %1515 = vmatpush1.msra.mxu0 0.0
      %1516 = vmatprep.subr.mxu0 0.0
      %1517 = vmatpush1.msra.mxu0 0.0
      %1518 = vmatprep.subr.mxu0 0.0
      %1519 = vmatpush1.msra.mxu0 0.0
      %1520 = vmatprep.subr.mxu0 0.0
      %1521 = vmatpush1.msra.mxu0 0.0
      %1522 = vmatprep.subr.mxu0 0.0
      %1523 = vmatpush1.msra.mxu0 0.0
      %1524 = vmatprep.subr.mxu0 0.0
      %1525 = vmatpush1.msra.mxu0 0.0
      %1526 = vmatprep.subr.mxu0 0.0
      %1527 = vmatpush1.msra.mxu0 0.0
      %1528 = vmatprep.subr.mxu0 0.0
      %1529 = vmatpush1.msra.mxu0 0.0
      %1530 = vmatprep.subr.mxu0 0.0
      %1531 = vmatpush1.msra.mxu0 0.0
      %1532 = vmatprep.subr.mxu0 0.0
      %1533 = vmatpush1.msra.mxu0 0.0
      %1534 = vmatprep.subr.mxu0 0.0
      %1535 = vmatpush1.msra.mxu0 0.0
      %1536 = vmatprep.subr.mxu0 0.0
      %1537 = vmatpush1.msra.mxu0 0.0
      %1538 = vmatprep.subr.mxu0 0.0
      %1539 = vmatpush1.msra.mxu0 0.0
      %1540 = vmatprep.subr.mxu0 0.0
      %1541 = vmatpush1.msra.mxu0 0.0
      %1542 = vmatprep.subr.mxu0 0.0
      %1543 = vmatpush1.msra.mxu0 0.0
      %1544 = vmatprep.subr.mxu0 0.0
      %1545 = vmatpush1.msra.mxu0 0.0
      %1546 = vmatprep.subr.mxu0 0.0
      %1547 = vmatpush1.msra.mxu0 0.0
      %1548 = vmatprep.subr.mxu0 0.0
      %1549 = vmatpush1.msra.mxu0 0.0
      %1550 = vmatprep.subr.mxu0 0.0
      %1551 = vmatpush1.msra.mxu0 0.0
      %1552 = vmatprep.subr.mxu0 0.0
      %1553 = vmatpush1.msra.mxu0 0.0
      %1554 = vmatprep.subr.mxu0 0.0
      %1555 = vmatpush1.msra.mxu0 0.0
      %1556 = vmatprep.subr.mxu0 0.0
      %1557 = vmatpush1.msra.mxu0 0.0
      %1558 = vmatprep.subr.mxu0 0.0
      %1559 = vmatpush1.msra.mxu0 0.0
      %1560 = vmatprep.subr.mxu0 0.0
      %1561 = vmatpush1.msra.mxu0 0.0
      %1562 = vmatprep.mubr.f32.mxu0 0.0
      %1563 = vmatmul.mubr.f32.gmra.mrb[0].mxu0 %v887
      %v1564 = vpop.f32.mrb[0].mxu0
      %v1565 = vadd.f32 0.0, %v1564
      %v1566 = vpop.f32.mrb[0].mxu0
      %1567 = vmatprep.mubr.f32.mxu0 0.0
      %1568 = vmatmul.mubr.f32.gmra.mrb[0].mxu0 %v890
      %v1569 = vpop.f32.mrb[0].mxu0
      %v1570 = vadd.f32 0.0, %v1569
      %v1571 = vpop.f32.mrb[0].mxu0
      %1572 = vdwg.mxu0
      %1573 = vmatprep.subr.mxu0 0.0
      %1574 = vmatpush1.msra.mxu0 %v382
      %1575 = vmatprep.subr.mxu0 0.0
      %1576 = vmatpush1.msra.mxu0 0.0
      %1577 = vmatprep.subr.mxu0 0.0
      %1578 = vmatpush1.msra.mxu0 0.0
      %1579 = vmatprep.subr.mxu0 0.0
      %1580 = vmatpush1.msra.mxu0 0.0
      %1581 = vmatprep.subr.mxu0 0.0
      %1582 = vmatpush1.msra.mxu0 0.0
      %1583 = vmatprep.subr.mxu0 0.0
      %1584 = vmatpush1.msra.mxu0 0.0
      %1585 = vmatprep.subr.mxu0 0.0
      %1586 = vmatpush1.msra.mxu0 0.0
      %1587 = vmatprep.subr.mxu0 0.0
      %1588 = vmatpush1.msra.mxu0 0.0
      %1589 = vmatprep.subr.mxu0 0.0
      %1590 = vmatpush1.msra.mxu0 0.0
      %1591 = vmatprep.subr.mxu0 0.0
      %1592 = vmatpush1.msra.mxu0 0.0
      %1593 = vmatprep.subr.mxu0 0.0
      %1594 = vmatpush1.msra.mxu0 0.0
      %1595 = vmatprep.subr.mxu0 0.0
      %1596 = vmatpush1.msra.mxu0 0.0
      %1597 = vmatprep.subr.mxu0 0.0
      %1598 = vmatpush1.msra.mxu0 0.0
      %1599 = vmatprep.subr.mxu0 0.0
      %1600 = vmatpush1.msra.mxu0 0.0
      %1601 = vmatprep.subr.mxu0 0.0
      %1602 = vmatpush1.msra.mxu0 0.0
      %1603 = vmatprep.subr.mxu0 0.0
      %1604 = vmatpush1.msra.mxu0 0.0
      %1605 = vmatprep.subr.mxu0 0.0
      %1606 = vmatpush1.msra.mxu0 0.0
      %1607 = vmatprep.subr.mxu0 0.0
      %1608 = vmatpush1.msra.mxu0 0.0
      %1609 = vmatprep.subr.mxu0 0.0
      %1610 = vmatpush1.msra.mxu0 0.0
      %1611 = vmatprep.subr.mxu0 0.0
      %1612 = vmatpush1.msra.mxu0 0.0
      %1613 = vmatprep.subr.mxu0 0.0
      %1614 = vmatpush1.msra.mxu0 0.0
      %1615 = vmatprep.subr.mxu0 0.0
      %1616 = vmatpush1.msra.mxu0 0.0
      %1617 = vmatprep.subr.mxu0 0.0
      %1618 = vmatpush1.msra.mxu0 0.0
      %1619 = vmatprep.subr.mxu0 0.0
      %1620 = vmatpush1.msra.mxu0 0.0
      %1621 = vmatprep.subr.mxu0 0.0
      %1622 = vmatpush1.msra.mxu0 0.0
      %1623 = vmatprep.subr.mxu0 0.0
      %1624 = vmatpush1.msra.mxu0 0.0
      %1625 = vmatprep.subr.mxu0 0.0
      %1626 = vmatpush1.msra.mxu0 0.0
      %1627 = vmatprep.subr.mxu0 0.0
      %1628 = vmatpush1.msra.mxu0 0.0
      %1629 = vmatprep.subr.mxu0 0.0
      %1630 = vmatpush1.msra.mxu0 0.0
      %1631 = vmatprep.subr.mxu0 0.0
      %1632 = vmatpush1.msra.mxu0 0.0
      %1633 = vmatprep.subr.mxu0 0.0
      %1634 = vmatpush1.msra.mxu0 0.0
      %1635 = vmatprep.subr.mxu0 0.0
      %1636 = vmatpush1.msra.mxu0 0.0
      %1637 = vmatprep.mubr.f32.mxu0 0.0
      %1638 = vmatmul.mubr.f32.gmra.mrb[0].mxu0 %v968
      %v1639 = vpop.f32.mrb[0].mxu0
      %v1640 = vadd.f32 0.0, %v1639
      %v1641 = vpop.f32.mrb[0].mxu0
      %1642 = vmatprep.mubr.f32.mxu0 0.0
      %1643 = vmatmul.mubr.f32.gmra.mrb[0].mxu0 %v971
      %v1644 = vpop.f32.mrb[0].mxu0
      %v1645 = vadd.f32 0.0, %v1644
      %v1646 = vpop.f32.mrb[0].mxu0
      %1647 = vdwg.mxu0
      %v1649 = vsel %vm399, %v335, 0
      %v1652 = vsel %vm399, %v336, 0
      %1654 = vmatprep.subr.mxu0 0.0
      %1655 = vmatpush1.msra.mxu0 %v367
      %1656 = vmatprep.subr.mxu0 0.0
      %1657 = vmatpush1.msra.mxu0 0.0
      %1658 = vmatprep.subr.mxu0 0.0
      %1659 = vmatpush1.msra.mxu0 0.0
      %1660 = vmatprep.subr.mxu0 0.0
      %1661 = vmatpush1.msra.mxu0 0.0
      %1662 = vmatprep.subr.mxu0 0.0
      %1663 = vmatpush1.msra.mxu0 0.0
      %1664 = vmatprep.subr.mxu0 0.0
      %1665 = vmatpush1.msra.mxu0 0.0
      %1666 = vmatprep.subr.mxu0 0.0
      %1667 = vmatpush1.msra.mxu0 0.0
      %1668 = vmatprep.subr.mxu0 0.0
      %1669 = vmatpush1.msra.mxu0 0.0
      %1670 = vmatprep.subr.mxu0 0.0
      %1671 = vmatpush1.msra.mxu0 0.0
      %1672 = vmatprep.subr.mxu0 0.0
      %1673 = vmatpush1.msra.mxu0 0.0
      %1674 = vmatprep.subr.mxu0 0.0
      %1675 = vmatpush1.msra.mxu0 0.0
      %1676 = vmatprep.subr.mxu0 0.0
      %1677 = vmatpush1.msra.mxu0 0.0
      %1678 = vmatprep.subr.mxu0 0.0
      %1679 = vmatpush1.msra.mxu0 0.0
      %1680 = vmatprep.subr.mxu0 0.0
      %1681 = vmatpush1.msra.mxu0 0.0
      %1682 = vmatprep.subr.mxu0 0.0
      %1683 = vmatpush1.msra.mxu0 0.0
      %1684 = vmatprep.subr.mxu0 0.0
      %1685 = vmatpush1.msra.mxu0 0.0
      %1686 = vmatprep.subr.mxu0 0.0
      %1687 = vmatpush1.msra.mxu0 0.0
      %1688 = vmatprep.subr.mxu0 0.0
      %1689 = vmatpush1.msra.mxu0 0.0
      %1690 = vmatprep.subr.mxu0 0.0
      %1691 = vmatpush1.msra.mxu0 0.0
      %1692 = vmatprep.subr.mxu0 0.0
      %1693 = vmatpush1.msra.mxu0 0.0
      %1694 = vmatprep.subr.mxu0 0.0
      %1695 = vmatpush1.msra.mxu0 0.0
      %1696 = vmatprep.subr.mxu0 0.0
      %1697 = vmatpush1.msra.mxu0 0.0
      %1698 = vmatprep.subr.mxu0 0.0
      %1699 = vmatpush1.msra.mxu0 0.0
      %1700 = vmatprep.subr.mxu0 0.0
      %1701 = vmatpush1.msra.mxu0 0.0
      %1702 = vmatprep.subr.mxu0 0.0
      %1703 = vmatpush1.msra.mxu0 0.0
      %1704 = vmatprep.subr.mxu0 0.0
      %1705 = vmatpush1.msra.mxu0 0.0
      %1706 = vmatprep.subr.mxu0 0.0
      %1707 = vmatpush1.msra.mxu0 0.0
      %1708 = vmatprep.subr.mxu0 0.0
      %1709 = vmatpush1.msra.mxu0 0.0
      %1710 = vmatprep.subr.mxu0 0.0
      %1711 = vmatpush1.msra.mxu0 0.0
      %1712 = vmatprep.subr.mxu0 0.0
      %1713 = vmatpush1.msra.mxu0 0.0
      %1714 = vmatprep.subr.mxu0 0.0
      %1715 = vmatpush1.msra.mxu0 0.0
      %1716 = vmatprep.subr.mxu0 0.0
      %1717 = vmatpush1.msra.mxu0 0.0
      %1718 = vmatprep.mubr.f32.mxu0 0.0
      %1719 = vmatmul.mubr.f32.gmra.mrb[0].mxu0 %v1649
      %v1720 = vpop.f32.mrb[0].mxu0
      %v1721 = vadd.f32 0.0, %v1720
      %v1722 = vpop.f32.mrb[0].mxu0
      %1723 = vmatprep.mubr.f32.mxu0 0.0
      %1724 = vmatmul.mubr.f32.gmra.mrb[0].mxu0 %v1652
      %v1725 = vpop.f32.mrb[0].mxu0
      %v1726 = vadd.f32 0.0, %v1725
      %v1727 = vpop.f32.mrb[0].mxu0
      %1728 = vdwg.mxu0
      %v1730 = vsel %vm399, %v337, 0
      %v1733 = vsel %vm399, %v338, 0
      %1735 = vmatprep.subr.mxu0 0.0
      %1736 = vmatpush1.msra.mxu0 %v368
      %1737 = vmatprep.subr.mxu0 0.0
      %1738 = vmatpush1.msra.mxu0 0.0
      %1739 = vmatprep.subr.mxu0 0.0
      %1740 = vmatpush1.msra.mxu0 0.0
      %1741 = vmatprep.subr.mxu0 0.0
      %1742 = vmatpush1.msra.mxu0 0.0
      %1743 = vmatprep.subr.mxu0 0.0
      %1744 = vmatpush1.msra.mxu0 0.0
      %1745 = vmatprep.subr.mxu0 0.0
      %1746 = vmatpush1.msra.mxu0 0.0
      %1747 = vmatprep.subr.mxu0 0.0
      %1748 = vmatpush1.msra.mxu0 0.0
      %1749 = vmatprep.subr.mxu0 0.0
      %1750 = vmatpush1.msra.mxu0 0.0
      %1751 = vmatprep.subr.mxu0 0.0
      %1752 = vmatpush1.msra.mxu0 0.0
      %1753 = vmatprep.subr.mxu0 0.0
      %1754 = vmatpush1.msra.mxu0 0.0
      %1755 = vmatprep.subr.mxu0 0.0
      %1756 = vmatpush1.msra.mxu0 0.0
      %1757 = vmatprep.subr.mxu0 0.0
      %1758 = vmatpush1.msra.mxu0 0.0
      %1759 = vmatprep.subr.mxu0 0.0
      %1760 = vmatpush1.msra.mxu0 0.0
      %1761 = vmatprep.subr.mxu0 0.0
      %1762 = vmatpush1.msra.mxu0 0.0
      %1763 = vmatprep.subr.mxu0 0.0
      %1764 = vmatpush1.msra.mxu0 0.0
      %1765 = vmatprep.subr.mxu0 0.0
      %1766 = vmatpush1.msra.mxu0 0.0
      %1767 = vmatprep.subr.mxu0 0.0
      %1768 = vmatpush1.msra.mxu0 0.0
      %1769 = vmatprep.subr.mxu0 0.0
      %1770 = vmatpush1.msra.mxu0 0.0
      %1771 = vmatprep.subr.mxu0 0.0
      %1772 = vmatpush1.msra.mxu0 0.0
      %1773 = vmatprep.subr.mxu0 0.0
      %1774 = vmatpush1.msra.mxu0 0.0
      %1775 = vmatprep.subr.mxu0 0.0
      %1776 = vmatpush1.msra.mxu0 0.0
      %1777 = vmatprep.subr.mxu0 0.0
      %1778 = vmatpush1.msra.mxu0 0.0
      %1779 = vmatprep.subr.mxu0 0.0
      %1780 = vmatpush1.msra.mxu0 0.0
      %1781 = vmatprep.subr.mxu0 0.0
      %1782 = vmatpush1.msra.mxu0 0.0
      %1783 = vmatprep.subr.mxu0 0.0
      %1784 = vmatpush1.msra.mxu0 0.0
      %1785 = vmatprep.subr.mxu0 0.0
      %1786 = vmatpush1.msra.mxu0 0.0
      %1787 = vmatprep.subr.mxu0 0.0
      %1788 = vmatpush1.msra.mxu0 0.0
      %1789 = vmatprep.subr.mxu0 0.0
      %1790 = vmatpush1.msra.mxu0 0.0
      %1791 = vmatprep.subr.mxu0 0.0
      %1792 = vmatpush1.msra.mxu0 0.0
      %1793 = vmatprep.subr.mxu0 0.0
      %1794 = vmatpush1.msra.mxu0 0.0
      %1795 = vmatprep.subr.mxu0 0.0
      %1796 = vmatpush1.msra.mxu0 0.0
      %1797 = vmatprep.subr.mxu0 0.0
      %1798 = vmatpush1.msra.mxu0 0.0
      %1799 = vmatprep.mubr.f32.mxu0 0.0
      %1800 = vmatmul.mubr.f32.gmra.mrb[0].mxu0 %v1730
      %v1801 = vpop.f32.mrb[0].mxu0
      %v1802 = vadd.f32 0.0, %v1801
      %v1803 = vpop.f32.mrb[0].mxu0
      %1804 = vmatprep.mubr.f32.mxu0 0.0
      %1805 = vmatmul.mubr.f32.gmra.mrb[0].mxu0 %v1733
      %v1806 = vpop.f32.mrb[0].mxu0
      %v1807 = vadd.f32 0.0, %v1806
      %v1808 = vpop.f32.mrb[0].mxu0
      %1809 = vdwg.mxu0
      %v1811 = vsel %vm399, %v339, 0
      %v1814 = vsel %vm399, %v340, 0
      %1816 = vmatprep.subr.mxu0 0.0
      %1817 = vmatpush1.msra.mxu0 %v369
      %1818 = vmatprep.subr.mxu0 0.0
      %1819 = vmatpush1.msra.mxu0 0.0
      %1820 = vmatprep.subr.mxu0 0.0
      %1821 = vmatpush1.msra.mxu0 0.0
      %1822 = vmatprep.subr.mxu0 0.0
      %1823 = vmatpush1.msra.mxu0 0.0
      %1824 = vmatprep.subr.mxu0 0.0
      %1825 = vmatpush1.msra.mxu0 0.0
      %1826 = vmatprep.subr.mxu0 0.0
      %1827 = vmatpush1.msra.mxu0 0.0
      %1828 = vmatprep.subr.mxu0 0.0
      %1829 = vmatpush1.msra.mxu0 0.0
      %1830 = vmatprep.subr.mxu0 0.0
      %1831 = vmatpush1.msra.mxu0 0.0
      %1832 = vmatprep.subr.mxu0 0.0
      %1833 = vmatpush1.msra.mxu0 0.0
      %1834 = vmatprep.subr.mxu0 0.0
      %1835 = vmatpush1.msra.mxu0 0.0
      %1836 = vmatprep.subr.mxu0 0.0
      %1837 = vmatpush1.msra.mxu0 0.0
      %1838 = vmatprep.subr.mxu0 0.0
      %1839 = vmatpush1.msra.mxu0 0.0
      %1840 = vmatprep.subr.mxu0 0.0
      %1841 = vmatpush1.msra.mxu0 0.0
      %1842 = vmatprep.subr.mxu0 0.0
      %1843 = vmatpush1.msra.mxu0 0.0
      %1844 = vmatprep.subr.mxu0 0.0
      %1845 = vmatpush1.msra.mxu0 0.0
      %1846 = vmatprep.subr.mxu0 0.0
      %1847 = vmatpush1.msra.mxu0 0.0
      %1848 = vmatprep.subr.mxu0 0.0
      %1849 = vmatpush1.msra.mxu0 0.0
      %1850 = vmatprep.subr.mxu0 0.0
      %1851 = vmatpush1.msra.mxu0 0.0
      %1852 = vmatprep.subr.mxu0 0.0
      %1853 = vmatpush1.msra.mxu0 0.0
      %1854 = vmatprep.subr.mxu0 0.0
      %1855 = vmatpush1.msra.mxu0 0.0
      %1856 = vmatprep.subr.mxu0 0.0
      %1857 = vmatpush1.msra.mxu0 0.0
      %1858 = vmatprep.subr.mxu0 0.0
      %1859 = vmatpush1.msra.mxu0 0.0
      %1860 = vmatprep.subr.mxu0 0.0
      %1861 = vmatpush1.msra.mxu0 0.0
      %1862 = vmatprep.subr.mxu0 0.0
      %1863 = vmatpush1.msra.mxu0 0.0
      %1864 = vmatprep.subr.mxu0 0.0
      %1865 = vmatpush1.msra.mxu0 0.0
      %1866 = vmatprep.subr.mxu0 0.0
      %1867 = vmatpush1.msra.mxu0 0.0
      %1868 = vmatprep.subr.mxu0 0.0
      %1869 = vmatpush1.msra.mxu0 0.0
      %1870 = vmatprep.subr.mxu0 0.0
      %1871 = vmatpush1.msra.mxu0 0.0
      %1872 = vmatprep.subr.mxu0 0.0
      %1873 = vmatpush1.msra.mxu0 0.0
      %1874 = vmatprep.subr.mxu0 0.0
      %1875 = vmatpush1.msra.mxu0 0.0
      %1876 = vmatprep.subr.mxu0 0.0
      %1877 = vmatpush1.msra.mxu0 0.0
      %1878 = vmatprep.subr.mxu0 0.0
      %1879 = vmatpush1.msra.mxu0 0.0
      %1880 = vmatprep.mubr.f32.mxu0 0.0
      %1881 = vmatmul.mubr.f32.gmra.mrb[0].mxu0 %v1811
      %v1882 = vpop.f32.mrb[0].mxu0
      %v1883 = vadd.f32 0.0, %v1882
      %v1884 = vpop.f32.mrb[0].mxu0
      %1885 = vmatprep.mubr.f32.mxu0 0.0
      %1886 = vmatmul.mubr.f32.gmra.mrb[0].mxu0 %v1814
      %v1887 = vpop.f32.mrb[0].mxu0
      %v1888 = vadd.f32 0.0, %v1887
      %v1889 = vpop.f32.mrb[0].mxu0
      %1890 = vdwg.mxu0
      %v1892 = vsel %vm399, %v341, 0
      %v1895 = vsel %vm399, %v342, 0
      %1897 = vmatprep.subr.mxu0 0.0
      %1898 = vmatpush1.msra.mxu0 %v370
      %1899 = vmatprep.subr.mxu0 0.0
      %1900 = vmatpush1.msra.mxu0 0.0
      %1901 = vmatprep.subr.mxu0 0.0
      %1902 = vmatpush1.msra.mxu0 0.0
      %1903 = vmatprep.subr.mxu0 0.0
      %1904 = vmatpush1.msra.mxu0 0.0
      %1905 = vmatprep.subr.mxu0 0.0
      %1906 = vmatpush1.msra.mxu0 0.0
      %1907 = vmatprep.subr.mxu0 0.0
      %1908 = vmatpush1.msra.mxu0 0.0
      %1909 = vmatprep.subr.mxu0 0.0
      %1910 = vmatpush1.msra.mxu0 0.0
      %1911 = vmatprep.subr.mxu0 0.0
      %1912 = vmatpush1.msra.mxu0 0.0
      %1913 = vmatprep.subr.mxu0 0.0
      %1914 = vmatpush1.msra.mxu0 0.0
      %1915 = vmatprep.subr.mxu0 0.0
      %1916 = vmatpush1.msra.mxu0 0.0
      %1917 = vmatprep.subr.mxu0 0.0
      %1918 = vmatpush1.msra.mxu0 0.0
      %1919 = vmatprep.subr.mxu0 0.0
      %1920 = vmatpush1.msra.mxu0 0.0
      %1921 = vmatprep.subr.mxu0 0.0
      %1922 = vmatpush1.msra.mxu0 0.0
      %1923 = vmatprep.subr.mxu0 0.0
      %1924 = vmatpush1.msra.mxu0 0.0
      %1925 = vmatprep.subr.mxu0 0.0
      %1926 = vmatpush1.msra.mxu0 0.0
      %1927 = vmatprep.subr.mxu0 0.0
      %1928 = vmatpush1.msra.mxu0 0.0
      %1929 = vmatprep.subr.mxu0 0.0
      %1930 = vmatpush1.msra.mxu0 0.0
      %1931 = vmatprep.subr.mxu0 0.0
      %1932 = vmatpush1.msra.mxu0 0.0
      %1933 = vmatprep.subr.mxu0 0.0
      %1934 = vmatpush1.msra.mxu0 0.0
      %1935 = vmatprep.subr.mxu0 0.0
      %1936 = vmatpush1.msra.mxu0 0.0
      %1937 = vmatprep.subr.mxu0 0.0
      %1938 = vmatpush1.msra.mxu0 0.0
      %1939 = vmatprep.subr.mxu0 0.0
      %1940 = vmatpush1.msra.mxu0 0.0
      %1941 = vmatprep.subr.mxu0 0.0
      %1942 = vmatpush1.msra.mxu0 0.0
      %1943 = vmatprep.subr.mxu0 0.0
      %1944 = vmatpush1.msra.mxu0 0.0
      %1945 = vmatprep.subr.mxu0 0.0
      %1946 = vmatpush1.msra.mxu0 0.0
      %1947 = vmatprep.subr.mxu0 0.0
      %1948 = vmatpush1.msra.mxu0 0.0
      %1949 = vmatprep.subr.mxu0 0.0
      %1950 = vmatpush1.msra.mxu0 0.0
      %1951 = vmatprep.subr.mxu0 0.0
      %1952 = vmatpush1.msra.mxu0 0.0
      %1953 = vmatprep.subr.mxu0 0.0
      %1954 = vmatpush1.msra.mxu0 0.0
      %1955 = vmatprep.subr.mxu0 0.0
      %1956 = vmatpush1.msra.mxu0 0.0
      %1957 = vmatprep.subr.mxu0 0.0
      %1958 = vmatpush1.msra.mxu0 0.0
      %1959 = vmatprep.subr.mxu0 0.0
      %1960 = vmatpush1.msra.mxu0 0.0
      %1961 = vmatprep.mubr.f32.mxu0 0.0
      %1962 = vmatmul.mubr.f32.gmra.mrb[0].mxu0 %v1892
      %v1963 = vpop.f32.mrb[0].mxu0
      %v1964 = vadd.f32 0.0, %v1963
      %v1965 = vpop.f32.mrb[0].mxu0
      %1966 = vmatprep.mubr.f32.mxu0 0.0
      %1967 = vmatmul.mubr.f32.gmra.mrb[0].mxu0 %v1895
      %v1968 = vpop.f32.mrb[0].mxu0
      %v1969 = vadd.f32 0.0, %v1968
      %v1970 = vpop.f32.mrb[0].mxu0
      %1971 = vdwg.mxu0
      %v1973 = vsel %vm399, %v343, 0
      %v1976 = vsel %vm399, %v344, 0
      %1978 = vmatprep.subr.mxu0 0.0
      %1979 = vmatpush1.msra.mxu0 %v371
      %1980 = vmatprep.subr.mxu0 0.0
      %1981 = vmatpush1.msra.mxu0 0.0
      %1982 = vmatprep.subr.mxu0 0.0
      %1983 = vmatpush1.msra.mxu0 0.0
      %1984 = vmatprep.subr.mxu0 0.0
      %1985 = vmatpush1.msra.mxu0 0.0
      %1986 = vmatprep.subr.mxu0 0.0
      %1987 = vmatpush1.msra.mxu0 0.0
      %1988 = vmatprep.subr.mxu0 0.0
      %1989 = vmatpush1.msra.mxu0 0.0
      %1990 = vmatprep.subr.mxu0 0.0
      %1991 = vmatpush1.msra.mxu0 0.0
      %1992 = vmatprep.subr.mxu0 0.0
      %1993 = vmatpush1.msra.mxu0 0.0
      %1994 = vmatprep.subr.mxu0 0.0
      %1995 = vmatpush1.msra.mxu0 0.0
      %1996 = vmatprep.subr.mxu0 0.0
      %1997 = vmatpush1.msra.mxu0 0.0
      %1998 = vmatprep.subr.mxu0 0.0
      %1999 = vmatpush1.msra.mxu0 0.0
      %2000 = vmatprep.subr.mxu0 0.0
      %2001 = vmatpush1.msra.mxu0 0.0
      %2002 = vmatprep.subr.mxu0 0.0
      %2003 = vmatpush1.msra.mxu0 0.0
      %2004 = vmatprep.subr.mxu0 0.0
      %2005 = vmatpush1.msra.mxu0 0.0
      %2006 = vmatprep.subr.mxu0 0.0
      %2007 = vmatpush1.msra.mxu0 0.0
      %2008 = vmatprep.subr.mxu0 0.0
      %2009 = vmatpush1.msra.mxu0 0.0
      %2010 = vmatprep.subr.mxu0 0.0
      %2011 = vmatpush1.msra.mxu0 0.0
      %2012 = vmatprep.subr.mxu0 0.0
      %2013 = vmatpush1.msra.mxu0 0.0
      %2014 = vmatprep.subr.mxu0 0.0
      %2015 = vmatpush1.msra.mxu0 0.0
      %2016 = vmatprep.subr.mxu0 0.0
      %2017 = vmatpush1.msra.mxu0 0.0
      %2018 = vmatprep.subr.mxu0 0.0
      %2019 = vmatpush1.msra.mxu0 0.0
      %2020 = vmatprep.subr.mxu0 0.0
      %2021 = vmatpush1.msra.mxu0 0.0
      %2022 = vmatprep.subr.mxu0 0.0
      %2023 = vmatpush1.msra.mxu0 0.0
      %2024 = vmatprep.subr.mxu0 0.0
      %2025 = vmatpush1.msra.mxu0 0.0
      %2026 = vmatprep.subr.mxu0 0.0
      %2027 = vmatpush1.msra.mxu0 0.0
      %2028 = vmatprep.subr.mxu0 0.0
      %2029 = vmatpush1.msra.mxu0 0.0
      %2030 = vmatprep.subr.mxu0 0.0
      %2031 = vmatpush1.msra.mxu0 0.0
      %2032 = vmatprep.subr.mxu0 0.0
      %2033 = vmatpush1.msra.mxu0 0.0
      %2034 = vmatprep.subr.mxu0 0.0
      %2035 = vmatpush1.msra.mxu0 0.0
      %2036 = vmatprep.subr.mxu0 0.0
      %2037 = vmatpush1.msra.mxu0 0.0
      %2038 = vmatprep.subr.mxu0 0.0
      %2039 = vmatpush1.msra.mxu0 0.0
      %2040 = vmatprep.subr.mxu0 0.0
      %2041 = vmatpush1.msra.mxu0 0.0
      %2042 = vmatprep.mubr.f32.mxu0 0.0
      %2043 = vmatmul.mubr.f32.gmra.mrb[0].mxu0 %v1973
      %v2044 = vpop.f32.mrb[0].mxu0
      %v2045 = vadd.f32 0.0, %v2044
      %v2046 = vpop.f32.mrb[0].mxu0
      %2047 = vmatprep.mubr.f32.mxu0 0.0
      %2048 = vmatmul.mubr.f32.gmra.mrb[0].mxu0 %v1976
      %v2049 = vpop.f32.mrb[0].mxu0
      %v2050 = vadd.f32 0.0, %v2049
      %v2051 = vpop.f32.mrb[0].mxu0
      %2052 = vdwg.mxu0
      %v2054 = vsel %vm399, %v345, 0
      %v2057 = vsel %vm399, %v346, 0
      %2059 = vmatprep.subr.mxu0 0.0
      %2060 = vmatpush1.msra.mxu0 %v372
      %2061 = vmatprep.subr.mxu0 0.0
      %2062 = vmatpush1.msra.mxu0 0.0
      %2063 = vmatprep.subr.mxu0 0.0
      %2064 = vmatpush1.msra.mxu0 0.0
      %2065 = vmatprep.subr.mxu0 0.0
      %2066 = vmatpush1.msra.mxu0 0.0
      %2067 = vmatprep.subr.mxu0 0.0
      %2068 = vmatpush1.msra.mxu0 0.0
      %2069 = vmatprep.subr.mxu0 0.0
      %2070 = vmatpush1.msra.mxu0 0.0
      %2071 = vmatprep.subr.mxu0 0.0
      %2072 = vmatpush1.msra.mxu0 0.0
      %2073 = vmatprep.subr.mxu0 0.0
      %2074 = vmatpush1.msra.mxu0 0.0
      %2075 = vmatprep.subr.mxu0 0.0
      %2076 = vmatpush1.msra.mxu0 0.0
      %2077 = vmatprep.subr.mxu0 0.0
      %2078 = vmatpush1.msra.mxu0 0.0
      %2079 = vmatprep.subr.mxu0 0.0
      %2080 = vmatpush1.msra.mxu0 0.0
      %2081 = vmatprep.subr.mxu0 0.0
      %2082 = vmatpush1.msra.mxu0 0.0
      %2083 = vmatprep.subr.mxu0 0.0
      %2084 = vmatpush1.msra.mxu0 0.0
      %2085 = vmatprep.subr.mxu0 0.0
      %2086 = vmatpush1.msra.mxu0 0.0
      %2087 = vmatprep.subr.mxu0 0.0
      %2088 = vmatpush1.msra.mxu0 0.0
      %2089 = vmatprep.subr.mxu0 0.0
      %2090 = vmatpush1.msra.mxu0 0.0
      %2091 = vmatprep.subr.mxu0 0.0
      %2092 = vmatpush1.msra.mxu0 0.0
      %2093 = vmatprep.subr.mxu0 0.0
      %2094 = vmatpush1.msra.mxu0 0.0
      %2095 = vmatprep.subr.mxu0 0.0
      %2096 = vmatpush1.msra.mxu0 0.0
      %2097 = vmatprep.subr.mxu0 0.0
      %2098 = vmatpush1.msra.mxu0 0.0
      %2099 = vmatprep.subr.mxu0 0.0
      %2100 = vmatpush1.msra.mxu0 0.0
      %2101 = vmatprep.subr.mxu0 0.0
      %2102 = vmatpush1.msra.mxu0 0.0
      %2103 = vmatprep.subr.mxu0 0.0
      %2104 = vmatpush1.msra.mxu0 0.0
      %2105 = vmatprep.subr.mxu0 0.0
      %2106 = vmatpush1.msra.mxu0 0.0
      %2107 = vmatprep.subr.mxu0 0.0
      %2108 = vmatpush1.msra.mxu0 0.0
      %2109 = vmatprep.subr.mxu0 0.0
      %2110 = vmatpush1.msra.mxu0 0.0
      %2111 = vmatprep.subr.mxu0 0.0
      %2112 = vmatpush1.msra.mxu0 0.0
      %2113 = vmatprep.subr.mxu0 0.0
      %2114 = vmatpush1.msra.mxu0 0.0
      %2115 = vmatprep.subr.mxu0 0.0
      %2116 = vmatpush1.msra.mxu0 0.0
      %2117 = vmatprep.subr.mxu0 0.0
      %2118 = vmatpush1.msra.mxu0 0.0
      %2119 = vmatprep.subr.mxu0 0.0
      %2120 = vmatpush1.msra.mxu0 0.0
      %2121 = vmatprep.subr.mxu0 0.0
      %2122 = vmatpush1.msra.mxu0 0.0
      %2123 = vmatprep.mubr.f32.mxu0 0.0
      %2124 = vmatmul.mubr.f32.gmra.mrb[0].mxu0 %v2054
      %v2125 = vpop.f32.mrb[0].mxu0
      %v2126 = vadd.f32 0.0, %v2125
      %v2127 = vpop.f32.mrb[0].mxu0
      %2128 = vmatprep.mubr.f32.mxu0 0.0
      %2129 = vmatmul.mubr.f32.gmra.mrb[0].mxu0 %v2057
      %v2130 = vpop.f32.mrb[0].mxu0
      %v2131 = vadd.f32 0.0, %v2130
      %v2132 = vpop.f32.mrb[0].mxu0
      %2133 = vdwg.mxu0
      %v2135 = vsel %vm399, %v347, 0
      %v2138 = vsel %vm399, %v348, 0
      %2140 = vmatprep.subr.mxu0 0.0
      %2141 = vmatpush1.msra.mxu0 %v373
      %2142 = vmatprep.subr.mxu0 0.0
      %2143 = vmatpush1.msra.mxu0 0.0
      %2144 = vmatprep.subr.mxu0 0.0
      %2145 = vmatpush1.msra.mxu0 0.0
      %2146 = vmatprep.subr.mxu0 0.0
      %2147 = vmatpush1.msra.mxu0 0.0
      %2148 = vmatprep.subr.mxu0 0.0
      %2149 = vmatpush1.msra.mxu0 0.0
      %2150 = vmatprep.subr.mxu0 0.0
      %2151 = vmatpush1.msra.mxu0 0.0
      %2152 = vmatprep.subr.mxu0 0.0
      %2153 = vmatpush1.msra.mxu0 0.0
      %2154 = vmatprep.subr.mxu0 0.0
      %2155 = vmatpush1.msra.mxu0 0.0
      %2156 = vmatprep.subr.mxu0 0.0
      %2157 = vmatpush1.msra.mxu0 0.0
      %2158 = vmatprep.subr.mxu0 0.0
      %2159 = vmatpush1.msra.mxu0 0.0
      %2160 = vmatprep.subr.mxu0 0.0
      %2161 = vmatpush1.msra.mxu0 0.0
      %2162 = vmatprep.subr.mxu0 0.0
      %2163 = vmatpush1.msra.mxu0 0.0
      %2164 = vmatprep.subr.mxu0 0.0
      %2165 = vmatpush1.msra.mxu0 0.0
      %2166 = vmatprep.subr.mxu0 0.0
      %2167 = vmatpush1.msra.mxu0 0.0
      %2168 = vmatprep.subr.mxu0 0.0
      %2169 = vmatpush1.msra.mxu0 0.0
      %2170 = vmatprep.subr.mxu0 0.0
      %2171 = vmatpush1.msra.mxu0 0.0
      %2172 = vmatprep.subr.mxu0 0.0
      %2173 = vmatpush1.msra.mxu0 0.0
      %2174 = vmatprep.subr.mxu0 0.0
      %2175 = vmatpush1.msra.mxu0 0.0
      %2176 = vmatprep.subr.mxu0 0.0
      %2177 = vmatpush1.msra.mxu0 0.0
      %2178 = vmatprep.subr.mxu0 0.0
      %2179 = vmatpush1.msra.mxu0 0.0
      %2180 = vmatprep.subr.mxu0 0.0
      %2181 = vmatpush1.msra.mxu0 0.0
      %2182 = vmatprep.subr.mxu0 0.0
      %2183 = vmatpush1.msra.mxu0 0.0
      %2184 = vmatprep.subr.mxu0 0.0
      %2185 = vmatpush1.msra.mxu0 0.0
      %2186 = vmatprep.subr.mxu0 0.0
      %2187 = vmatpush1.msra.mxu0 0.0
      %2188 = vmatprep.subr.mxu0 0.0
      %2189 = vmatpush1.msra.mxu0 0.0
      %2190 = vmatprep.subr.mxu0 0.0
      %2191 = vmatpush1.msra.mxu0 0.0
      %2192 = vmatprep.subr.mxu0 0.0
      %2193 = vmatpush1.msra.mxu0 0.0
      %2194 = vmatprep.subr.mxu0 0.0
      %2195 = vmatpush1.msra.mxu0 0.0
      %2196 = vmatprep.subr.mxu0 0.0
      %2197 = vmatpush1.msra.mxu0 0.0
      %2198 = vmatprep.subr.mxu0 0.0
      %2199 = vmatpush1.msra.mxu0 0.0
      %2200 = vmatprep.subr.mxu0 0.0
      %2201 = vmatpush1.msra.mxu0 0.0
      %2202 = vmatprep.subr.mxu0 0.0
      %2203 = vmatpush1.msra.mxu0 0.0
      %2204 = vmatprep.mubr.f32.mxu0 0.0
      %2205 = vmatmul.mubr.f32.gmra.mrb[0].mxu0 %v2135
      %v2206 = vpop.f32.mrb[0].mxu0
      %v2207 = vadd.f32 0.0, %v2206
      %v2208 = vpop.f32.mrb[0].mxu0
      %2209 = vmatprep.mubr.f32.mxu0 0.0
      %2210 = vmatmul.mubr.f32.gmra.mrb[0].mxu0 %v2138
      %v2211 = vpop.f32.mrb[0].mxu0
      %v2212 = vadd.f32 0.0, %v2211
      %v2213 = vpop.f32.mrb[0].mxu0
      %2214 = vdwg.mxu0
      %v2216 = vsel %vm399, %v349, 0
      %v2219 = vsel %vm399, %v350, 0
      %2221 = vmatprep.subr.mxu0 0.0
      %2222 = vmatpush1.msra.mxu0 %v374
      %2223 = vmatprep.subr.mxu0 0.0
      %2224 = vmatpush1.msra.mxu0 0.0
      %2225 = vmatprep.subr.mxu0 0.0
      %2226 = vmatpush1.msra.mxu0 0.0
      %2227 = vmatprep.subr.mxu0 0.0
      %2228 = vmatpush1.msra.mxu0 0.0
      %2229 = vmatprep.subr.mxu0 0.0
      %2230 = vmatpush1.msra.mxu0 0.0
      %2231 = vmatprep.subr.mxu0 0.0
      %2232 = vmatpush1.msra.mxu0 0.0
      %2233 = vmatprep.subr.mxu0 0.0
      %2234 = vmatpush1.msra.mxu0 0.0
      %2235 = vmatprep.subr.mxu0 0.0
      %2236 = vmatpush1.msra.mxu0 0.0
      %2237 = vmatprep.subr.mxu0 0.0
      %2238 = vmatpush1.msra.mxu0 0.0
      %2239 = vmatprep.subr.mxu0 0.0
      %2240 = vmatpush1.msra.mxu0 0.0
      %2241 = vmatprep.subr.mxu0 0.0
      %2242 = vmatpush1.msra.mxu0 0.0
      %2243 = vmatprep.subr.mxu0 0.0
      %2244 = vmatpush1.msra.mxu0 0.0
      %2245 = vmatprep.subr.mxu0 0.0
      %2246 = vmatpush1.msra.mxu0 0.0
      %2247 = vmatprep.subr.mxu0 0.0
      %2248 = vmatpush1.msra.mxu0 0.0
      %2249 = vmatprep.subr.mxu0 0.0
      %2250 = vmatpush1.msra.mxu0 0.0
      %2251 = vmatprep.subr.mxu0 0.0
      %2252 = vmatpush1.msra.mxu0 0.0
      %2253 = vmatprep.subr.mxu0 0.0
      %2254 = vmatpush1.msra.mxu0 0.0
      %2255 = vmatprep.subr.mxu0 0.0
      %2256 = vmatpush1.msra.mxu0 0.0
      %2257 = vmatprep.subr.mxu0 0.0
      %2258 = vmatpush1.msra.mxu0 0.0
      %2259 = vmatprep.subr.mxu0 0.0
      %2260 = vmatpush1.msra.mxu0 0.0
      %2261 = vmatprep.subr.mxu0 0.0
      %2262 = vmatpush1.msra.mxu0 0.0
      %2263 = vmatprep.subr.mxu0 0.0
      %2264 = vmatpush1.msra.mxu0 0.0
      %2265 = vmatprep.subr.mxu0 0.0
      %2266 = vmatpush1.msra.mxu0 0.0
      %2267 = vmatprep.subr.mxu0 0.0
      %2268 = vmatpush1.msra.mxu0 0.0
      %2269 = vmatprep.subr.mxu0 0.0
      %2270 = vmatpush1.msra.mxu0 0.0
      %2271 = vmatprep.subr.mxu0 0.0
      %2272 = vmatpush1.msra.mxu0 0.0
      %2273 = vmatprep.subr.mxu0 0.0
      %2274 = vmatpush1.msra.mxu0 0.0
      %2275 = vmatprep.subr.mxu0 0.0
      %2276 = vmatpush1.msra.mxu0 0.0
      %2277 = vmatprep.subr.mxu0 0.0
      %2278 = vmatpush1.msra.mxu0 0.0
      %2279 = vmatprep.subr.mxu0 0.0
      %2280 = vmatpush1.msra.mxu0 0.0
      %2281 = vmatprep.subr.mxu0 0.0
      %2282 = vmatpush1.msra.mxu0 0.0
      %2283 = vmatprep.subr.mxu0 0.0
      %2284 = vmatpush1.msra.mxu0 0.0
      %2285 = vmatprep.mubr.f32.mxu0 0.0
      %2286 = vmatmul.mubr.f32.gmra.mrb[0].mxu0 %v2216
      %v2287 = vpop.f32.mrb[0].mxu0
      %v2288 = vadd.f32 0.0, %v2287
      %v2289 = vpop.f32.mrb[0].mxu0
      %2290 = vmatprep.mubr.f32.mxu0 0.0
      %2291 = vmatmul.mubr.f32.gmra.mrb[0].mxu0 %v2219
      %v2292 = vpop.f32.mrb[0].mxu0
      %v2293 = vadd.f32 0.0, %v2292
      %v2294 = vpop.f32.mrb[0].mxu0
      %2295 = vdwg.mxu0
      %2296 = vmatprep.subr.mxu0 0.0
      %2297 = vmatpush1.msra.mxu0 %v375
      %2298 = vmatprep.subr.mxu0 0.0
      %2299 = vmatpush1.msra.mxu0 0.0
      %2300 = vmatprep.subr.mxu0 0.0
      %2301 = vmatpush1.msra.mxu0 0.0
      %2302 = vmatprep.subr.mxu0 0.0
      %2303 = vmatpush1.msra.mxu0 0.0
      %2304 = vmatprep.subr.mxu0 0.0
      %2305 = vmatpush1.msra.mxu0 0.0
      %2306 = vmatprep.subr.mxu0 0.0
      %2307 = vmatpush1.msra.mxu0 0.0
      %2308 = vmatprep.subr.mxu0 0.0
      %2309 = vmatpush1.msra.mxu0 0.0
      %2310 = vmatprep.subr.mxu0 0.0
      %2311 = vmatpush1.msra.mxu0 0.0
      %2312 = vmatprep.subr.mxu0 0.0
      %2313 = vmatpush1.msra.mxu0 0.0
      %2314 = vmatprep.subr.mxu0 0.0
      %2315 = vmatpush1.msra.mxu0 0.0
      %2316 = vmatprep.subr.mxu0 0.0
      %2317 = vmatpush1.msra.mxu0 0.0
      %2318 = vmatprep.subr.mxu0 0.0
      %2319 = vmatpush1.msra.mxu0 0.0
      %2320 = vmatprep.subr.mxu0 0.0
      %2321 = vmatpush1.msra.mxu0 0.0
      %2322 = vmatprep.subr.mxu0 0.0
      %2323 = vmatpush1.msra.mxu0 0.0
      %2324 = vmatprep.subr.mxu0 0.0
      %2325 = vmatpush1.msra.mxu0 0.0
      %2326 = vmatprep.subr.mxu0 0.0
      %2327 = vmatpush1.msra.mxu0 0.0
      %2328 = vmatprep.subr.mxu0 0.0
      %2329 = vmatpush1.msra.mxu0 0.0
      %2330 = vmatprep.subr.mxu0 0.0
      %2331 = vmatpush1.msra.mxu0 0.0
      %2332 = vmatprep.subr.mxu0 0.0
      %2333 = vmatpush1.msra.mxu0 0.0
      %2334 = vmatprep.subr.mxu0 0.0
      %2335 = vmatpush1.msra.mxu0 0.0
      %2336 = vmatprep.subr.mxu0 0.0
      %2337 = vmatpush1.msra.mxu0 0.0
      %2338 = vmatprep.subr.mxu0 0.0
      %2339 = vmatpush1.msra.mxu0 0.0
      %2340 = vmatprep.subr.mxu0 0.0
      %2341 = vmatpush1.msra.mxu0 0.0
      %2342 = vmatprep.subr.mxu0 0.0
      %2343 = vmatpush1.msra.mxu0 0.0
      %2344 = vmatprep.subr.mxu0 0.0
      %2345 = vmatpush1.msra.mxu0 0.0
      %2346 = vmatprep.subr.mxu0 0.0
      %2347 = vmatpush1.msra.mxu0 0.0
      %2348 = vmatprep.subr.mxu0 0.0
      %2349 = vmatpush1.msra.mxu0 0.0
      %2350 = vmatprep.subr.mxu0 0.0
      %2351 = vmatpush1.msra.mxu0 0.0
      %2352 = vmatprep.subr.mxu0 0.0
      %2353 = vmatpush1.msra.mxu0 0.0
      %2354 = vmatprep.subr.mxu0 0.0
      %2355 = vmatpush1.msra.mxu0 0.0
      %2356 = vmatprep.subr.mxu0 0.0
      %2357 = vmatpush1.msra.mxu0 0.0
      %2358 = vmatprep.subr.mxu0 0.0
      %2359 = vmatpush1.msra.mxu0 0.0
      %2360 = vmatprep.mubr.f32.mxu0 0.0
      %2361 = vmatmul.mubr.f32.gmra.mrb[0].mxu0 %v1649
      %v2362 = vpop.f32.mrb[0].mxu0
      %v2363 = vadd.f32 0.0, %v2362
      %v2364 = vpop.f32.mrb[0].mxu0
      %2365 = vmatprep.mubr.f32.mxu0 0.0
      %2366 = vmatmul.mubr.f32.gmra.mrb[0].mxu0 %v1652
      %v2367 = vpop.f32.mrb[0].mxu0
      %v2368 = vadd.f32 0.0, %v2367
      %v2369 = vpop.f32.mrb[0].mxu0
      %2370 = vdwg.mxu0
      %2371 = vmatprep.subr.mxu0 0.0
      %2372 = vmatpush1.msra.mxu0 %v376
      %2373 = vmatprep.subr.mxu0 0.0
      %2374 = vmatpush1.msra.mxu0 0.0
      %2375 = vmatprep.subr.mxu0 0.0
      %2376 = vmatpush1.msra.mxu0 0.0
      %2377 = vmatprep.subr.mxu0 0.0
      %2378 = vmatpush1.msra.mxu0 0.0
      %2379 = vmatprep.subr.mxu0 0.0
      %2380 = vmatpush1.msra.mxu0 0.0
      %2381 = vmatprep.subr.mxu0 0.0
      %2382 = vmatpush1.msra.mxu0 0.0
      %2383 = vmatprep.subr.mxu0 0.0
      %2384 = vmatpush1.msra.mxu0 0.0
      %2385 = vmatprep.subr.mxu0 0.0
      %2386 = vmatpush1.msra.mxu0 0.0
      %2387 = vmatprep.subr.mxu0 0.0
      %2388 = vmatpush1.msra.mxu0 0.0
      %2389 = vmatprep.subr.mxu0 0.0
      %2390 = vmatpush1.msra.mxu0 0.0
      %2391 = vmatprep.subr.mxu0 0.0
      %2392 = vmatpush1.msra.mxu0 0.0
      %2393 = vmatprep.subr.mxu0 0.0
      %2394 = vmatpush1.msra.mxu0 0.0
      %2395 = vmatprep.subr.mxu0 0.0
      %2396 = vmatpush1.msra.mxu0 0.0
      %2397 = vmatprep.subr.mxu0 0.0
      %2398 = vmatpush1.msra.mxu0 0.0
      %2399 = vmatprep.subr.mxu0 0.0
      %2400 = vmatpush1.msra.mxu0 0.0
      %2401 = vmatprep.subr.mxu0 0.0
      %2402 = vmatpush1.msra.mxu0 0.0
      %2403 = vmatprep.subr.mxu0 0.0
      %2404 = vmatpush1.msra.mxu0 0.0
      %2405 = vmatprep.subr.mxu0 0.0
      %2406 = vmatpush1.msra.mxu0 0.0
      %2407 = vmatprep.subr.mxu0 0.0
      %2408 = vmatpush1.msra.mxu0 0.0
      %2409 = vmatprep.subr.mxu0 0.0
      %2410 = vmatpush1.msra.mxu0 0.0
      %2411 = vmatprep.subr.mxu0 0.0
      %2412 = vmatpush1.msra.mxu0 0.0
      %2413 = vmatprep.subr.mxu0 0.0
      %2414 = vmatpush1.msra.mxu0 0.0
      %2415 = vmatprep.subr.mxu0 0.0
      %2416 = vmatpush1.msra.mxu0 0.0
      %2417 = vmatprep.subr.mxu0 0.0
      %2418 = vmatpush1.msra.mxu0 0.0
      %2419 = vmatprep.subr.mxu0 0.0
      %2420 = vmatpush1.msra.mxu0 0.0
      %2421 = vmatprep.subr.mxu0 0.0
      %2422 = vmatpush1.msra.mxu0 0.0
      %2423 = vmatprep.subr.mxu0 0.0
      %2424 = vmatpush1.msra.mxu0 0.0
      %2425 = vmatprep.subr.mxu0 0.0
      %2426 = vmatpush1.msra.mxu0 0.0
      %2427 = vmatprep.subr.mxu0 0.0
      %2428 = vmatpush1.msra.mxu0 0.0
      %2429 = vmatprep.subr.mxu0 0.0
      %2430 = vmatpush1.msra.mxu0 0.0
      %2431 = vmatprep.subr.mxu0 0.0
      %2432 = vmatpush1.msra.mxu0 0.0
      %2433 = vmatprep.subr.mxu0 0.0
      %2434 = vmatpush1.msra.mxu0 0.0
      %2435 = vmatprep.mubr.f32.mxu0 0.0
      %2436 = vmatmul.mubr.f32.gmra.mrb[0].mxu0 %v1730
      %v2437 = vpop.f32.mrb[0].mxu0
      %v2438 = vadd.f32 0.0, %v2437
      %v2439 = vpop.f32.mrb[0].mxu0
      %2440 = vmatprep.mubr.f32.mxu0 0.0
      %2441 = vmatmul.mubr.f32.gmra.mrb[0].mxu0 %v1733
      %v2442 = vpop.f32.mrb[0].mxu0
      %v2443 = vadd.f32 0.0, %v2442
      %v2444 = vpop.f32.mrb[0].mxu0
      %2445 = vdwg.mxu0
      %2446 = vmatprep.subr.mxu0 0.0
      %2447 = vmatpush1.msra.mxu0 %v377
      %2448 = vmatprep.subr.mxu0 0.0
      %2449 = vmatpush1.msra.mxu0 0.0
      %2450 = vmatprep.subr.mxu0 0.0
      %2451 = vmatpush1.msra.mxu0 0.0
      %2452 = vmatprep.subr.mxu0 0.0
      %2453 = vmatpush1.msra.mxu0 0.0
      %2454 = vmatprep.subr.mxu0 0.0
      %2455 = vmatpush1.msra.mxu0 0.0
      %2456 = vmatprep.subr.mxu0 0.0
      %2457 = vmatpush1.msra.mxu0 0.0
      %2458 = vmatprep.subr.mxu0 0.0
      %2459 = vmatpush1.msra.mxu0 0.0
      %2460 = vmatprep.subr.mxu0 0.0
      %2461 = vmatpush1.msra.mxu0 0.0
      %2462 = vmatprep.subr.mxu0 0.0
      %2463 = vmatpush1.msra.mxu0 0.0
      %2464 = vmatprep.subr.mxu0 0.0
      %2465 = vmatpush1.msra.mxu0 0.0
      %2466 = vmatprep.subr.mxu0 0.0
      %2467 = vmatpush1.msra.mxu0 0.0
      %2468 = vmatprep.subr.mxu0 0.0
      %2469 = vmatpush1.msra.mxu0 0.0
      %2470 = vmatprep.subr.mxu0 0.0
      %2471 = vmatpush1.msra.mxu0 0.0
      %2472 = vmatprep.subr.mxu0 0.0
      %2473 = vmatpush1.msra.mxu0 0.0
      %2474 = vmatprep.subr.mxu0 0.0
      %2475 = vmatpush1.msra.mxu0 0.0
      %2476 = vmatprep.subr.mxu0 0.0
      %2477 = vmatpush1.msra.mxu0 0.0
      %2478 = vmatprep.subr.mxu0 0.0
      %2479 = vmatpush1.msra.mxu0 0.0
      %2480 = vmatprep.subr.mxu0 0.0
      %2481 = vmatpush1.msra.mxu0 0.0
      %2482 = vmatprep.subr.mxu0 0.0
      %2483 = vmatpush1.msra.mxu0 0.0
      %2484 = vmatprep.subr.mxu0 0.0
      %2485 = vmatpush1.msra.mxu0 0.0
      %2486 = vmatprep.subr.mxu0 0.0
      %2487 = vmatpush1.msra.mxu0 0.0
      %2488 = vmatprep.subr.mxu0 0.0
      %2489 = vmatpush1.msra.mxu0 0.0
      %2490 = vmatprep.subr.mxu0 0.0
      %2491 = vmatpush1.msra.mxu0 0.0
      %2492 = vmatprep.subr.mxu0 0.0
      %2493 = vmatpush1.msra.mxu0 0.0
      %2494 = vmatprep.subr.mxu0 0.0
      %2495 = vmatpush1.msra.mxu0 0.0
      %2496 = vmatprep.subr.mxu0 0.0
      %2497 = vmatpush1.msra.mxu0 0.0
      %2498 = vmatprep.subr.mxu0 0.0
      %2499 = vmatpush1.msra.mxu0 0.0
      %2500 = vmatprep.subr.mxu0 0.0
      %2501 = vmatpush1.msra.mxu0 0.0
      %2502 = vmatprep.subr.mxu0 0.0
      %2503 = vmatpush1.msra.mxu0 0.0
      %2504 = vmatprep.subr.mxu0 0.0
      %2505 = vmatpush1.msra.mxu0 0.0
      %2506 = vmatprep.subr.mxu0 0.0
      %2507 = vmatpush1.msra.mxu0 0.0
      %2508 = vmatprep.subr.mxu0 0.0
      %2509 = vmatpush1.msra.mxu0 0.0
      %2510 = vmatprep.mubr.f32.mxu0 0.0
      %2511 = vmatmul.mubr.f32.gmra.mrb[0].mxu0 %v1811
      %v2512 = vpop.f32.mrb[0].mxu0
      %v2513 = vadd.f32 0.0, %v2512
      %v2514 = vpop.f32.mrb[0].mxu0
      %2515 = vmatprep.mubr.f32.mxu0 0.0
      %2516 = vmatmul.mubr.f32.gmra.mrb[0].mxu0 %v1814
      %v2517 = vpop.f32.mrb[0].mxu0
      %v2518 = vadd.f32 0.0, %v2517
      %v2519 = vpop.f32.mrb[0].mxu0
      %2520 = vdwg.mxu0
      %2521 = vmatprep.subr.mxu0 0.0
      %2522 = vmatpush1.msra.mxu0 %v378
      %2523 = vmatprep.subr.mxu0 0.0
      %2524 = vmatpush1.msra.mxu0 0.0
      %2525 = vmatprep.subr.mxu0 0.0
      %2526 = vmatpush1.msra.mxu0 0.0
      %2527 = vmatprep.subr.mxu0 0.0
      %2528 = vmatpush1.msra.mxu0 0.0
      %2529 = vmatprep.subr.mxu0 0.0
      %2530 = vmatpush1.msra.mxu0 0.0
      %2531 = vmatprep.subr.mxu0 0.0
      %2532 = vmatpush1.msra.mxu0 0.0
      %2533 = vmatprep.subr.mxu0 0.0
      %2534 = vmatpush1.msra.mxu0 0.0
      %2535 = vmatprep.subr.mxu0 0.0
      %2536 = vmatpush1.msra.mxu0 0.0
      %2537 = vmatprep.subr.mxu0 0.0
      %2538 = vmatpush1.msra.mxu0 0.0
      %2539 = vmatprep.subr.mxu0 0.0
      %2540 = vmatpush1.msra.mxu0 0.0
      %2541 = vmatprep.subr.mxu0 0.0
      %2542 = vmatpush1.msra.mxu0 0.0
      %2543 = vmatprep.subr.mxu0 0.0
      %2544 = vmatpush1.msra.mxu0 0.0
      %2545 = vmatprep.subr.mxu0 0.0
      %2546 = vmatpush1.msra.mxu0 0.0
      %2547 = vmatprep.subr.mxu0 0.0
      %2548 = vmatpush1.msra.mxu0 0.0
      %2549 = vmatprep.subr.mxu0 0.0
      %2550 = vmatpush1.msra.mxu0 0.0
      %2551 = vmatprep.subr.mxu0 0.0
      %2552 = vmatpush1.msra.mxu0 0.0
      %2553 = vmatprep.subr.mxu0 0.0
      %2554 = vmatpush1.msra.mxu0 0.0
      %2555 = vmatprep.subr.mxu0 0.0
      %2556 = vmatpush1.msra.mxu0 0.0
      %2557 = vmatprep.subr.mxu0 0.0
      %2558 = vmatpush1.msra.mxu0 0.0
      %2559 = vmatprep.subr.mxu0 0.0
      %2560 = vmatpush1.msra.mxu0 0.0
      %2561 = vmatprep.subr.mxu0 0.0
      %2562 = vmatpush1.msra.mxu0 0.0
      %2563 = vmatprep.subr.mxu0 0.0
      %2564 = vmatpush1.msra.mxu0 0.0
      %2565 = vmatprep.subr.mxu0 0.0
      %2566 = vmatpush1.msra.mxu0 0.0
      %2567 = vmatprep.subr.mxu0 0.0
      %2568 = vmatpush1.msra.mxu0 0.0
      %2569 = vmatprep.subr.mxu0 0.0
      %2570 = vmatpush1.msra.mxu0 0.0
      %2571 = vmatprep.subr.mxu0 0.0
      %2572 = vmatpush1.msra.mxu0 0.0
      %2573 = vmatprep.subr.mxu0 0.0
      %2574 = vmatpush1.msra.mxu0 0.0
      %2575 = vmatprep.subr.mxu0 0.0
      %2576 = vmatpush1.msra.mxu0 0.0
      %2577 = vmatprep.subr.mxu0 0.0
      %2578 = vmatpush1.msra.mxu0 0.0
      %2579 = vmatprep.subr.mxu0 0.0
      %2580 = vmatpush1.msra.mxu0 0.0
      %2581 = vmatprep.subr.mxu0 0.0
      %2582 = vmatpush1.msra.mxu0 0.0
      %2583 = vmatprep.subr.mxu0 0.0
      %2584 = vmatpush1.msra.mxu0 0.0
      %2585 = vmatprep.mubr.f32.mxu0 0.0
      %2586 = vmatmul.mubr.f32.gmra.mrb[0].mxu0 %v1892
      %v2587 = vpop.f32.mrb[0].mxu0
      %v2588 = vadd.f32 0.0, %v2587
      %v2589 = vpop.f32.mrb[0].mxu0
      %2590 = vmatprep.mubr.f32.mxu0 0.0
      %2591 = vmatmul.mubr.f32.gmra.mrb[0].mxu0 %v1895
      %v2592 = vpop.f32.mrb[0].mxu0
      %v2593 = vadd.f32 0.0, %v2592
      %v2594 = vpop.f32.mrb[0].mxu0
      %2595 = vdwg.mxu0
      %2596 = vmatprep.subr.mxu0 0.0
      %2597 = vmatpush1.msra.mxu0 %v379
      %2598 = vmatprep.subr.mxu0 0.0
      %2599 = vmatpush1.msra.mxu0 0.0
      %2600 = vmatprep.subr.mxu0 0.0
      %2601 = vmatpush1.msra.mxu0 0.0
      %2602 = vmatprep.subr.mxu0 0.0
      %2603 = vmatpush1.msra.mxu0 0.0
      %2604 = vmatprep.subr.mxu0 0.0
      %2605 = vmatpush1.msra.mxu0 0.0
      %2606 = vmatprep.subr.mxu0 0.0
      %2607 = vmatpush1.msra.mxu0 0.0
      %2608 = vmatprep.subr.mxu0 0.0
      %2609 = vmatpush1.msra.mxu0 0.0
      %2610 = vmatprep.subr.mxu0 0.0
      %2611 = vmatpush1.msra.mxu0 0.0
      %2612 = vmatprep.subr.mxu0 0.0
      %2613 = vmatpush1.msra.mxu0 0.0
      %2614 = vmatprep.subr.mxu0 0.0
      %2615 = vmatpush1.msra.mxu0 0.0
      %2616 = vmatprep.subr.mxu0 0.0
      %2617 = vmatpush1.msra.mxu0 0.0
      %2618 = vmatprep.subr.mxu0 0.0
      %2619 = vmatpush1.msra.mxu0 0.0
      %2620 = vmatprep.subr.mxu0 0.0
      %2621 = vmatpush1.msra.mxu0 0.0
      %2622 = vmatprep.subr.mxu0 0.0
      %2623 = vmatpush1.msra.mxu0 0.0
      %2624 = vmatprep.subr.mxu0 0.0
      %2625 = vmatpush1.msra.mxu0 0.0
      %2626 = vmatprep.subr.mxu0 0.0
      %2627 = vmatpush1.msra.mxu0 0.0
      %2628 = vmatprep.subr.mxu0 0.0
      %2629 = vmatpush1.msra.mxu0 0.0
      %2630 = vmatprep.subr.mxu0 0.0
      %2631 = vmatpush1.msra.mxu0 0.0
      %2632 = vmatprep.subr.mxu0 0.0
      %2633 = vmatpush1.msra.mxu0 0.0
      %2634 = vmatprep.subr.mxu0 0.0
      %2635 = vmatpush1.msra.mxu0 0.0
      %2636 = vmatprep.subr.mxu0 0.0
      %2637 = vmatpush1.msra.mxu0 0.0
      %2638 = vmatprep.subr.mxu0 0.0
      %2639 = vmatpush1.msra.mxu0 0.0
      %2640 = vmatprep.subr.mxu0 0.0
      %2641 = vmatpush1.msra.mxu0 0.0
      %2642 = vmatprep.subr.mxu0 0.0
      %2643 = vmatpush1.msra.mxu0 0.0
      %2644 = vmatprep.subr.mxu0 0.0
      %2645 = vmatpush1.msra.mxu0 0.0
      %2646 = vmatprep.subr.mxu0 0.0
      %2647 = vmatpush1.msra.mxu0 0.0
      %2648 = vmatprep.subr.mxu0 0.0
      %2649 = vmatpush1.msra.mxu0 0.0
      %2650 = vmatprep.subr.mxu0 0.0
      %2651 = vmatpush1.msra.mxu0 0.0
      %2652 = vmatprep.subr.mxu0 0.0
      %2653 = vmatpush1.msra.mxu0 0.0
      %2654 = vmatprep.subr.mxu0 0.0
      %2655 = vmatpush1.msra.mxu0 0.0
      %2656 = vmatprep.subr.mxu0 0.0
      %2657 = vmatpush1.msra.mxu0 0.0
      %2658 = vmatprep.subr.mxu0 0.0
      %2659 = vmatpush1.msra.mxu0 0.0
      %2660 = vmatprep.mubr.f32.mxu0 0.0
      %2661 = vmatmul.mubr.f32.gmra.mrb[0].mxu0 %v1973
      %v2662 = vpop.f32.mrb[0].mxu0
      %v2663 = vadd.f32 0.0, %v2662
      %v2664 = vpop.f32.mrb[0].mxu0
      %2665 = vmatprep.mubr.f32.mxu0 0.0
      %2666 = vmatmul.mubr.f32.gmra.mrb[0].mxu0 %v1976
      %v2667 = vpop.f32.mrb[0].mxu0
      %v2668 = vadd.f32 0.0, %v2667
      %v2669 = vpop.f32.mrb[0].mxu0
      %2670 = vdwg.mxu0
      %2671 = vmatprep.subr.mxu0 0.0
      %2672 = vmatpush1.msra.mxu0 %v380
      %2673 = vmatprep.subr.mxu0 0.0
      %2674 = vmatpush1.msra.mxu0 0.0
      %2675 = vmatprep.subr.mxu0 0.0
      %2676 = vmatpush1.msra.mxu0 0.0
      %2677 = vmatprep.subr.mxu0 0.0
      %2678 = vmatpush1.msra.mxu0 0.0
      %2679 = vmatprep.subr.mxu0 0.0
      %2680 = vmatpush1.msra.mxu0 0.0
      %2681 = vmatprep.subr.mxu0 0.0
      %2682 = vmatpush1.msra.mxu0 0.0
      %2683 = vmatprep.subr.mxu0 0.0
      %2684 = vmatpush1.msra.mxu0 0.0
      %2685 = vmatprep.subr.mxu0 0.0
      %2686 = vmatpush1.msra.mxu0 0.0
      %2687 = vmatprep.subr.mxu0 0.0
      %2688 = vmatpush1.msra.mxu0 0.0
      %2689 = vmatprep.subr.mxu0 0.0
      %2690 = vmatpush1.msra.mxu0 0.0
      %2691 = vmatprep.subr.mxu0 0.0
      %2692 = vmatpush1.msra.mxu0 0.0
      %2693 = vmatprep.subr.mxu0 0.0
      %2694 = vmatpush1.msra.mxu0 0.0
      %2695 = vmatprep.subr.mxu0 0.0
      %2696 = vmatpush1.msra.mxu0 0.0
      %2697 = vmatprep.subr.mxu0 0.0
      %2698 = vmatpush1.msra.mxu0 0.0
      %2699 = vmatprep.subr.mxu0 0.0
      %2700 = vmatpush1.msra.mxu0 0.0
      %2701 = vmatprep.subr.mxu0 0.0
      %2702 = vmatpush1.msra.mxu0 0.0
      %2703 = vmatprep.subr.mxu0 0.0
      %2704 = vmatpush1.msra.mxu0 0.0
      %2705 = vmatprep.subr.mxu0 0.0
      %2706 = vmatpush1.msra.mxu0 0.0
      %2707 = vmatprep.subr.mxu0 0.0
      %2708 = vmatpush1.msra.mxu0 0.0
      %2709 = vmatprep.subr.mxu0 0.0
      %2710 = vmatpush1.msra.mxu0 0.0
      %2711 = vmatprep.subr.mxu0 0.0
      %2712 = vmatpush1.msra.mxu0 0.0
      %2713 = vmatprep.subr.mxu0 0.0
      %2714 = vmatpush1.msra.mxu0 0.0
      %2715 = vmatprep.subr.mxu0 0.0
      %2716 = vmatpush1.msra.mxu0 0.0
      %2717 = vmatprep.subr.mxu0 0.0
      %2718 = vmatpush1.msra.mxu0 0.0
      %2719 = vmatprep.subr.mxu0 0.0
      %2720 = vmatpush1.msra.mxu0 0.0
      %2721 = vmatprep.subr.mxu0 0.0
      %2722 = vmatpush1.msra.mxu0 0.0
      %2723 = vmatprep.subr.mxu0 0.0
      %2724 = vmatpush1.msra.mxu0 0.0
      %2725 = vmatprep.subr.mxu0 0.0
      %2726 = vmatpush1.msra.mxu0 0.0
      %2727 = vmatprep.subr.mxu0 0.0
      %2728 = vmatpush1.msra.mxu0 0.0
      %2729 = vmatprep.subr.mxu0 0.0
      %2730 = vmatpush1.msra.mxu0 0.0
      %2731 = vmatprep.subr.mxu0 0.0
      %2732 = vmatpush1.msra.mxu0 0.0
      %2733 = vmatprep.subr.mxu0 0.0
      %2734 = vmatpush1.msra.mxu0 0.0
      %2735 = vmatprep.mubr.f32.mxu0 0.0
      %2736 = vmatmul.mubr.f32.gmra.mrb[0].mxu0 %v2054
      %v2737 = vpop.f32.mrb[0].mxu0
      %v2738 = vadd.f32 0.0, %v2737
      %v2739 = vpop.f32.mrb[0].mxu0
      %2740 = vmatprep.mubr.f32.mxu0 0.0
      %2741 = vmatmul.mubr.f32.gmra.mrb[0].mxu0 %v2057
      %v2742 = vpop.f32.mrb[0].mxu0
      %v2743 = vadd.f32 0.0, %v2742
      %v2744 = vpop.f32.mrb[0].mxu0
      %2745 = vdwg.mxu0
      %2746 = vmatprep.subr.mxu0 0.0
      %2747 = vmatpush1.msra.mxu0 %v381
      %2748 = vmatprep.subr.mxu0 0.0
      %2749 = vmatpush1.msra.mxu0 0.0
      %2750 = vmatprep.subr.mxu0 0.0
      %2751 = vmatpush1.msra.mxu0 0.0
      %2752 = vmatprep.subr.mxu0 0.0
      %2753 = vmatpush1.msra.mxu0 0.0
      %2754 = vmatprep.subr.mxu0 0.0
      %2755 = vmatpush1.msra.mxu0 0.0
      %2756 = vmatprep.subr.mxu0 0.0
      %2757 = vmatpush1.msra.mxu0 0.0
      %2758 = vmatprep.subr.mxu0 0.0
      %2759 = vmatpush1.msra.mxu0 0.0
      %2760 = vmatprep.subr.mxu0 0.0
      %2761 = vmatpush1.msra.mxu0 0.0
      %2762 = vmatprep.subr.mxu0 0.0
      %2763 = vmatpush1.msra.mxu0 0.0
      %2764 = vmatprep.subr.mxu0 0.0
      %2765 = vmatpush1.msra.mxu0 0.0
      %2766 = vmatprep.subr.mxu0 0.0
      %2767 = vmatpush1.msra.mxu0 0.0
      %2768 = vmatprep.subr.mxu0 0.0
      %2769 = vmatpush1.msra.mxu0 0.0
      %2770 = vmatprep.subr.mxu0 0.0
      %2771 = vmatpush1.msra.mxu0 0.0
      %2772 = vmatprep.subr.mxu0 0.0
      %2773 = vmatpush1.msra.mxu0 0.0
      %2774 = vmatprep.subr.mxu0 0.0
      %2775 = vmatpush1.msra.mxu0 0.0
      %2776 = vmatprep.subr.mxu0 0.0
      %2777 = vmatpush1.msra.mxu0 0.0
      %2778 = vmatprep.subr.mxu0 0.0
      %2779 = vmatpush1.msra.mxu0 0.0
      %2780 = vmatprep.subr.mxu0 0.0
      %2781 = vmatpush1.msra.mxu0 0.0
      %2782 = vmatprep.subr.mxu0 0.0
      %2783 = vmatpush1.msra.mxu0 0.0
      %2784 = vmatprep.subr.mxu0 0.0
      %2785 = vmatpush1.msra.mxu0 0.0
      %2786 = vmatprep.subr.mxu0 0.0
      %2787 = vmatpush1.msra.mxu0 0.0
      %2788 = vmatprep.subr.mxu0 0.0
      %2789 = vmatpush1.msra.mxu0 0.0
      %2790 = vmatprep.subr.mxu0 0.0
      %2791 = vmatpush1.msra.mxu0 0.0
      %2792 = vmatprep.subr.mxu0 0.0
      %2793 = vmatpush1.msra.mxu0 0.0
      %2794 = vmatprep.subr.mxu0 0.0
      %2795 = vmatpush1.msra.mxu0 0.0
      %2796 = vmatprep.subr.mxu0 0.0
      %2797 = vmatpush1.msra.mxu0 0.0
      %2798 = vmatprep.subr.mxu0 0.0
      %2799 = vmatpush1.msra.mxu0 0.0
      %2800 = vmatprep.subr.mxu0 0.0
      %2801 = vmatpush1.msra.mxu0 0.0
      %2802 = vmatprep.subr.mxu0 0.0
      %2803 = vmatpush1.msra.mxu0 0.0
      %2804 = vmatprep.subr.mxu0 0.0
      %2805 = vmatpush1.msra.mxu0 0.0
      %2806 = vmatprep.subr.mxu0 0.0
      %2807 = vmatpush1.msra.mxu0 0.0
      %2808 = vmatprep.subr.mxu0 0.0
      %2809 = vmatpush1.msra.mxu0 0.0
      %2810 = vmatprep.mubr.f32.mxu0 0.0
      %2811 = vmatmul.mubr.f32.gmra.mrb[0].mxu0 %v2135
      %v2812 = vpop.f32.mrb[0].mxu0
      %v2813 = vadd.f32 0.0, %v2812
      %v2814 = vpop.f32.mrb[0].mxu0
      %2815 = vmatprep.mubr.f32.mxu0 0.0
      %2816 = vmatmul.mubr.f32.gmra.mrb[0].mxu0 %v2138
      %v2817 = vpop.f32.mrb[0].mxu0
      %v2818 = vadd.f32 0.0, %v2817
      %v2819 = vpop.f32.mrb[0].mxu0
      %2820 = vdwg.mxu0
      %2821 = vmatprep.subr.mxu0 0.0
      %2822 = vmatpush1.msra.mxu0 %v382
      %2823 = vmatprep.subr.mxu0 0.0
      %2824 = vmatpush1.msra.mxu0 0.0
      %2825 = vmatprep.subr.mxu0 0.0
      %2826 = vmatpush1.msra.mxu0 0.0
      %2827 = vmatprep.subr.mxu0 0.0
      %2828 = vmatpush1.msra.mxu0 0.0
      %2829 = vmatprep.subr.mxu0 0.0
      %2830 = vmatpush1.msra.mxu0 0.0
      %2831 = vmatprep.subr.mxu0 0.0
      %2832 = vmatpush1.msra.mxu0 0.0
      %2833 = vmatprep.subr.mxu0 0.0
      %2834 = vmatpush1.msra.mxu0 0.0
      %2835 = vmatprep.subr.mxu0 0.0
      %2836 = vmatpush1.msra.mxu0 0.0
      %2837 = vmatprep.subr.mxu0 0.0
      %2838 = vmatpush1.msra.mxu0 0.0
      %2839 = vmatprep.subr.mxu0 0.0
      %2840 = vmatpush1.msra.mxu0 0.0
      %2841 = vmatprep.subr.mxu0 0.0
      %2842 = vmatpush1.msra.mxu0 0.0
      %2843 = vmatprep.subr.mxu0 0.0
      %2844 = vmatpush1.msra.mxu0 0.0
      %2845 = vmatprep.subr.mxu0 0.0
      %2846 = vmatpush1.msra.mxu0 0.0
      %2847 = vmatprep.subr.mxu0 0.0
      %2848 = vmatpush1.msra.mxu0 0.0
      %2849 = vmatprep.subr.mxu0 0.0
      %2850 = vmatpush1.msra.mxu0 0.0
      %2851 = vmatprep.subr.mxu0 0.0
      %2852 = vmatpush1.msra.mxu0 0.0
      %2853 = vmatprep.subr.mxu0 0.0
      %2854 = vmatpush1.msra.mxu0 0.0
      %2855 = vmatprep.subr.mxu0 0.0
      %2856 = vmatpush1.msra.mxu0 0.0
      %2857 = vmatprep.subr.mxu0 0.0
      %2858 = vmatpush1.msra.mxu0 0.0
      %2859 = vmatprep.subr.mxu0 0.0
      %2860 = vmatpush1.msra.mxu0 0.0
      %2861 = vmatprep.subr.mxu0 0.0
      %2862 = vmatpush1.msra.mxu0 0.0
      %2863 = vmatprep.subr.mxu0 0.0
      %2864 = vmatpush1.msra.mxu0 0.0
      %2865 = vmatprep.subr.mxu0 0.0
      %2866 = vmatpush1.msra.mxu0 0.0
      %2867 = vmatprep.subr.mxu0 0.0
      %2868 = vmatpush1.msra.mxu0 0.0
      %2869 = vmatprep.subr.mxu0 0.0
      %2870 = vmatpush1.msra.mxu0 0.0
      %2871 = vmatprep.subr.mxu0 0.0
      %2872 = vmatpush1.msra.mxu0 0.0
      %2873 = vmatprep.subr.mxu0 0.0
      %2874 = vmatpush1.msra.mxu0 0.0
      %2875 = vmatprep.subr.mxu0 0.0
      %2876 = vmatpush1.msra.mxu0 0.0
      %2877 = vmatprep.subr.mxu0 0.0
      %2878 = vmatpush1.msra.mxu0 0.0
      %2879 = vmatprep.subr.mxu0 0.0
      %2880 = vmatpush1.msra.mxu0 0.0
      %2881 = vmatprep.subr.mxu0 0.0
      %2882 = vmatpush1.msra.mxu0 0.0
      %2883 = vmatprep.subr.mxu0 0.0
      %2884 = vmatpush1.msra.mxu0 0.0
      %2885 = vmatprep.mubr.f32.mxu0 0.0
      %2886 = vmatmul.mubr.f32.gmra.mrb[0].mxu0 %v2216
      %v2887 = vpop.f32.mrb[0].mxu0
      %v2888 = vadd.f32 0.0, %v2887
      %v2889 = vpop.f32.mrb[0].mxu0
      %2890 = vmatprep.mubr.f32.mxu0 0.0
      %2891 = vmatmul.mubr.f32.gmra.mrb[0].mxu0 %v2219
      %v2892 = vpop.f32.mrb[0].mxu0
      %v2893 = vadd.f32 0.0, %v2892
      %v2894 = vpop.f32.mrb[0].mxu0
      %2895 = vdwg.mxu0
      %v2896 = vmul.f32 %v473, %v1721
      %v2897 = vmul.f32 %v478, %v1726
      %v2898 = vmul.f32 %v554, %v1802
      %v2899 = vmul.f32 %v559, %v1807
      %v2900 = vmul.f32 %v635, %v1883
      %v2901 = vmul.f32 %v640, %v1888
      %v2902 = vmul.f32 %v716, %v1964
      %v2903 = vmul.f32 %v721, %v1969
      %v2904 = vmul.f32 %v797, %v2045
      %v2905 = vmul.f32 %v802, %v2050
      %v2906 = vmul.f32 %v878, %v2126
      %v2907 = vmul.f32 %v883, %v2131
      %v2908 = vmul.f32 %v959, %v2207
      %v2909 = vmul.f32 %v964, %v2212
      %v2910 = vmul.f32 %v1040, %v2288
      %v2911 = vmul.f32 %v1045, %v2293
      %v2912 = vmul.f32 %v1115, %v2363
      %v2913 = vmul.f32 %v1120, %v2368
      %v2914 = vmul.f32 %v1190, %v2438
      %v2915 = vmul.f32 %v1195, %v2443
      %v2916 = vmul.f32 %v1265, %v2513
      %v2917 = vmul.f32 %v1270, %v2518
      %v2918 = vmul.f32 %v1340, %v2588
      %v2919 = vmul.f32 %v1345, %v2593
      %v2920 = vmul.f32 %v1415, %v2663
      %v2921 = vmul.f32 %v1420, %v2668
      %v2922 = vmul.f32 %v1490, %v2738
      %v2923 = vmul.f32 %v1495, %v2743
      %v2924 = vmul.f32 %v1565, %v2813
      %v2925 = vmul.f32 %v1570, %v2818
      %v2926 = vmul.f32 %v1640, %v2888
      %v2927 = vmul.f32 %v1645, %v2893
      %v2928 = vadd.f32 %v2896, %v2912
      %v2929 = vadd.f32 %v2897, %v2913
      %v2930 = vadd.f32 %v2898, %v2914
      %v2931 = vadd.f32 %v2899, %v2915
      %v2932 = vadd.f32 %v2900, %v2916
      %v2933 = vadd.f32 %v2901, %v2917
      %v2934 = vadd.f32 %v2902, %v2918
      %v2935 = vadd.f32 %v2903, %v2919
      %v2936 = vadd.f32 %v2904, %v2920
      %v2937 = vadd.f32 %v2905, %v2921
      %v2938 = vadd.f32 %v2906, %v2922
      %v2939 = vadd.f32 %v2907, %v2923
      %v2940 = vadd.f32 %v2908, %v2924
      %v2941 = vadd.f32 %v2909, %v2925
      %v2942 = vadd.f32 %v2910, %v2926
      %v2943 = vadd.f32 %v2911, %v2927
      %v2944 = vmul.f32 %v1115, %v1721
      %v2945 = vmul.f32 %v1120, %v1726
      %v2946 = vmul.f32 %v1190, %v1802
      %v2947 = vmul.f32 %v1195, %v1807
      %v2948 = vmul.f32 %v1265, %v1883
      %v2949 = vmul.f32 %v1270, %v1888
      %v2950 = vmul.f32 %v1340, %v1964
      %v2951 = vmul.f32 %v1345, %v1969
      %v2952 = vmul.f32 %v1415, %v2045
      %v2953 = vmul.f32 %v1420, %v2050
      %v2954 = vmul.f32 %v1490, %v2126
      %v2955 = vmul.f32 %v1495, %v2131
      %v2956 = vmul.f32 %v1565, %v2207
      %v2957 = vmul.f32 %v1570, %v2212
      %v2958 = vmul.f32 %v1640, %v2288
      %v2959 = vmul.f32 %v1645, %v2293
      %v2960 = vmul.f32 %v473, %v2363
      %v2961 = vmul.f32 %v478, %v2368
      %v2962 = vmul.f32 %v554, %v2438
      %v2963 = vmul.f32 %v559, %v2443
      %v2964 = vmul.f32 %v635, %v2513
      %v2965 = vmul.f32 %v640, %v2518
      %v2966 = vmul.f32 %v716, %v2588
      %v2967 = vmul.f32 %v721, %v2593
      %v2968 = vmul.f32 %v797, %v2663
      %v2969 = vmul.f32 %v802, %v2668
      %v2970 = vmul.f32 %v878, %v2738
      %v2971 = vmul.f32 %v883, %v2743
      %v2972 = vmul.f32 %v959, %v2813
      %v2973 = vmul.f32 %v964, %v2818
      %v2974 = vmul.f32 %v1040, %v2888
      %v2975 = vmul.f32 %v1045, %v2893
      %v2976 = vsub.f32 %v2944, %v2960
      %v2977 = vsub.f32 %v2945, %v2961
      %v2978 = vsub.f32 %v2946, %v2962
      %v2979 = vsub.f32 %v2947, %v2963
      %v2980 = vsub.f32 %v2948, %v2964
      %v2981 = vsub.f32 %v2949, %v2965
      %v2982 = vsub.f32 %v2950, %v2966
      %v2983 = vsub.f32 %v2951, %v2967
      %v2984 = vsub.f32 %v2952, %v2968
      %v2985 = vsub.f32 %v2953, %v2969
      %v2986 = vsub.f32 %v2954, %v2970
      %v2987 = vsub.f32 %v2955, %v2971
      %v2988 = vsub.f32 %v2956, %v2972
      %v2989 = vsub.f32 %v2957, %v2973
      %v2990 = vsub.f32 %v2958, %v2974
      %v2991 = vsub.f32 %v2959, %v2975
      %vm2992 = vcmask 39936
      %v2994 = vsel %vm2992, %v2976, 0
      %v2997 = vsel %vm2992, %v2977, 0
      %vm2999 = vcmask 1044480
      %v3001 = vsel %vm2999, %v391, 0
      %3003 = vmatprep.subr.mxu0 0.0
      %3004 = vmatpush1.msra.mxu0 %v3001
      %3005 = vmatprep.subr.mxu0 0.0
      %3006 = vmatpush1.msra.mxu0 0.0
      %3007 = vmatprep.subr.mxu0 0.0
      %3008 = vmatpush1.msra.mxu0 0.0
      %3009 = vmatprep.subr.mxu0 0.0
      %3010 = vmatpush1.msra.mxu0 0.0
      %3011 = vmatprep.subr.mxu0 0.0
      %3012 = vmatpush1.msra.mxu0 0.0
      %3013 = vmatprep.subr.mxu0 0.0
      %3014 = vmatpush1.msra.mxu0 0.0
      %3015 = vmatprep.subr.mxu0 0.0
      %3016 = vmatpush1.msra.mxu0 0.0
      %3017 = vmatprep.subr.mxu0 0.0
      %3018 = vmatpush1.msra.mxu0 0.0
      %3019 = vmatprep.subr.mxu0 0.0
      %3020 = vmatpush1.msra.mxu0 0.0
      %3021 = vmatprep.subr.mxu0 0.0
      %3022 = vmatpush1.msra.mxu0 0.0
      %3023 = vmatprep.subr.mxu0 0.0
      %3024 = vmatpush1.msra.mxu0 0.0
      %3025 = vmatprep.subr.mxu0 0.0
      %3026 = vmatpush1.msra.mxu0 0.0
      %3027 = vmatprep.subr.mxu0 0.0
      %3028 = vmatpush1.msra.mxu0 0.0
      %3029 = vmatprep.subr.mxu0 0.0
      %3030 = vmatpush1.msra.mxu0 0.0
      %3031 = vmatprep.subr.mxu0 0.0
      %3032 = vmatpush1.msra.mxu0 0.0
      %3033 = vmatprep.subr.mxu0 0.0
      %3034 = vmatpush1.msra.mxu0 0.0
      %3035 = vmatprep.subr.mxu0 0.0
      %3036 = vmatpush1.msra.mxu0 0.0
      %3037 = vmatprep.subr.mxu0 0.0
      %3038 = vmatpush1.msra.mxu0 0.0
      %3039 = vmatprep.subr.mxu0 0.0
      %3040 = vmatpush1.msra.mxu0 0.0
      %3041 = vmatprep.subr.mxu0 0.0
      %3042 = vmatpush1.msra.mxu0 0.0
      %3043 = vmatprep.subr.mxu0 0.0
      %3044 = vmatpush1.msra.mxu0 0.0
      %3045 = vmatprep.subr.mxu0 0.0
      %3046 = vmatpush1.msra.mxu0 0.0
      %3047 = vmatprep.subr.mxu0 0.0
      %3048 = vmatpush1.msra.mxu0 0.0
      %3049 = vmatprep.subr.mxu0 0.0
      %3050 = vmatpush1.msra.mxu0 0.0
      %3051 = vmatprep.subr.mxu0 0.0
      %3052 = vmatpush1.msra.mxu0 0.0
      %3053 = vmatprep.subr.mxu0 0.0
      %3054 = vmatpush1.msra.mxu0 0.0
      %3055 = vmatprep.subr.mxu0 0.0
      %3056 = vmatpush1.msra.mxu0 0.0
      %3057 = vmatprep.subr.mxu0 0.0
      %3058 = vmatpush1.msra.mxu0 0.0
      %3059 = vmatprep.subr.mxu0 0.0
      %3060 = vmatpush1.msra.mxu0 0.0
      %3061 = vmatprep.subr.mxu0 0.0
      %3062 = vmatpush1.msra.mxu0 0.0
      %3063 = vmatprep.subr.mxu0 0.0
      %3064 = vmatpush1.msra.mxu0 0.0
      %3065 = vmatprep.subr.mxu0 0.0
      %3066 = vmatpush1.msra.mxu0 0.0
      %3067 = vmatprep.mubr.f32.mxu0 0.0
      %3068 = vmatmul.mubr.f32.gmra.mrb[0].mxu0 %v2994
      %v3069 = vpop.f32.mrb[0].mxu0
      %v3070 = vadd.f32 0.0, %v3069
      %v3071 = vpop.f32.mrb[0].mxu0
      %3072 = vmatprep.mubr.f32.mxu0 0.0
      %3073 = vmatmul.mubr.f32.gmra.mrb[0].mxu0 %v2997
      %v3074 = vpop.f32.mrb[0].mxu0
      %v3075 = vadd.f32 0.0, %v3074
      %v3076 = vpop.f32.mrb[0].mxu0
      %3077 = vdwg.mxu0
      %v3079 = vsel %vm2992, %v2978, 0
      %v3082 = vsel %vm2992, %v2979, 0
      %v3085 = vsel %vm2999, %v392, 0
      %3087 = vmatprep.subr.mxu0 0.0
      %3088 = vmatpush1.msra.mxu0 %v3085
      %3089 = vmatprep.subr.mxu0 0.0
      %3090 = vmatpush1.msra.mxu0 0.0
      %3091 = vmatprep.subr.mxu0 0.0
      %3092 = vmatpush1.msra.mxu0 0.0
      %3093 = vmatprep.subr.mxu0 0.0
      %3094 = vmatpush1.msra.mxu0 0.0
      %3095 = vmatprep.subr.mxu0 0.0
      %3096 = vmatpush1.msra.mxu0 0.0
      %3097 = vmatprep.subr.mxu0 0.0
      %3098 = vmatpush1.msra.mxu0 0.0
      %3099 = vmatprep.subr.mxu0 0.0
      %3100 = vmatpush1.msra.mxu0 0.0
      %3101 = vmatprep.subr.mxu0 0.0
      %3102 = vmatpush1.msra.mxu0 0.0
      %3103 = vmatprep.subr.mxu0 0.0
      %3104 = vmatpush1.msra.mxu0 0.0
      %3105 = vmatprep.subr.mxu0 0.0
      %3106 = vmatpush1.msra.mxu0 0.0
      %3107 = vmatprep.subr.mxu0 0.0
      %3108 = vmatpush1.msra.mxu0 0.0
      %3109 = vmatprep.subr.mxu0 0.0
      %3110 = vmatpush1.msra.mxu0 0.0
      %3111 = vmatprep.subr.mxu0 0.0
      %3112 = vmatpush1.msra.mxu0 0.0
      %3113 = vmatprep.subr.mxu0 0.0
      %3114 = vmatpush1.msra.mxu0 0.0
      %3115 = vmatprep.subr.mxu0 0.0
      %3116 = vmatpush1.msra.mxu0 0.0
      %3117 = vmatprep.subr.mxu0 0.0
      %3118 = vmatpush1.msra.mxu0 0.0
      %3119 = vmatprep.subr.mxu0 0.0
      %3120 = vmatpush1.msra.mxu0 0.0
      %3121 = vmatprep.subr.mxu0 0.0
      %3122 = vmatpush1.msra.mxu0 0.0
      %3123 = vmatprep.subr.mxu0 0.0
      %3124 = vmatpush1.msra.mxu0 0.0
      %3125 = vmatprep.subr.mxu0 0.0
      %3126 = vmatpush1.msra.mxu0 0.0
      %3127 = vmatprep.subr.mxu0 0.0
      %3128 = vmatpush1.msra.mxu0 0.0
      %3129 = vmatprep.subr.mxu0 0.0
      %3130 = vmatpush1.msra.mxu0 0.0
      %3131 = vmatprep.subr.mxu0 0.0
      %3132 = vmatpush1.msra.mxu0 0.0
      %3133 = vmatprep.subr.mxu0 0.0
      %3134 = vmatpush1.msra.mxu0 0.0
      %3135 = vmatprep.subr.mxu0 0.0
      %3136 = vmatpush1.msra.mxu0 0.0
      %3137 = vmatprep.subr.mxu0 0.0
      %3138 = vmatpush1.msra.mxu0 0.0
      %3139 = vmatprep.subr.mxu0 0.0
      %3140 = vmatpush1.msra.mxu0 0.0
      %3141 = vmatprep.subr.mxu0 0.0
      %3142 = vmatpush1.msra.mxu0 0.0
      %3143 = vmatprep.subr.mxu0 0.0
      %3144 = vmatpush1.msra.mxu0 0.0
      %3145 = vmatprep.subr.mxu0 0.0
      %3146 = vmatpush1.msra.mxu0 0.0
      %3147 = vmatprep.subr.mxu0 0.0
      %3148 = vmatpush1.msra.mxu0 0.0
      %3149 = vmatprep.subr.mxu0 0.0
      %3150 = vmatpush1.msra.mxu0 0.0
      %3151 = vmatprep.mubr.f32.mxu0 0.0
      %3152 = vmatmul.mubr.f32.gmra.mrb[0].mxu0 %v3079
      %v3153 = vpop.f32.mrb[0].mxu0
      %v3154 = vadd.f32 0.0, %v3153
      %v3155 = vpop.f32.mrb[0].mxu0
      %3156 = vmatprep.mubr.f32.mxu0 0.0
      %3157 = vmatmul.mubr.f32.gmra.mrb[0].mxu0 %v3082
      %v3158 = vpop.f32.mrb[0].mxu0
      %v3159 = vadd.f32 0.0, %v3158
      %v3160 = vpop.f32.mrb[0].mxu0
      %3161 = vdwg.mxu0
      %v3163 = vsel %vm2992, %v2980, 0
      %v3166 = vsel %vm2992, %v2981, 0
      %v3169 = vsel %vm2999, %v393, 0
      %3171 = vmatprep.subr.mxu0 0.0
      %3172 = vmatpush1.msra.mxu0 %v3169
      %3173 = vmatprep.subr.mxu0 0.0
      %3174 = vmatpush1.msra.mxu0 0.0
      %3175 = vmatprep.subr.mxu0 0.0
      %3176 = vmatpush1.msra.mxu0 0.0
      %3177 = vmatprep.subr.mxu0 0.0
      %3178 = vmatpush1.msra.mxu0 0.0
      %3179 = vmatprep.subr.mxu0 0.0
      %3180 = vmatpush1.msra.mxu0 0.0
      %3181 = vmatprep.subr.mxu0 0.0
      %3182 = vmatpush1.msra.mxu0 0.0
      %3183 = vmatprep.subr.mxu0 0.0
      %3184 = vmatpush1.msra.mxu0 0.0
      %3185 = vmatprep.subr.mxu0 0.0
      %3186 = vmatpush1.msra.mxu0 0.0
      %3187 = vmatprep.subr.mxu0 0.0
      %3188 = vmatpush1.msra.mxu0 0.0
      %3189 = vmatprep.subr.mxu0 0.0
      %3190 = vmatpush1.msra.mxu0 0.0
      %3191 = vmatprep.subr.mxu0 0.0
      %3192 = vmatpush1.msra.mxu0 0.0
      %3193 = vmatprep.subr.mxu0 0.0
      %3194 = vmatpush1.msra.mxu0 0.0
      %3195 = vmatprep.subr.mxu0 0.0
      %3196 = vmatpush1.msra.mxu0 0.0
      %3197 = vmatprep.subr.mxu0 0.0
      %3198 = vmatpush1.msra.mxu0 0.0
      %3199 = vmatprep.subr.mxu0 0.0
      %3200 = vmatpush1.msra.mxu0 0.0
      %3201 = vmatprep.subr.mxu0 0.0
      %3202 = vmatpush1.msra.mxu0 0.0
      %3203 = vmatprep.subr.mxu0 0.0
      %3204 = vmatpush1.msra.mxu0 0.0
      %3205 = vmatprep.subr.mxu0 0.0
      %3206 = vmatpush1.msra.mxu0 0.0
      %3207 = vmatprep.subr.mxu0 0.0
      %3208 = vmatpush1.msra.mxu0 0.0
      %3209 = vmatprep.subr.mxu0 0.0
      %3210 = vmatpush1.msra.mxu0 0.0
      %3211 = vmatprep.subr.mxu0 0.0
      %3212 = vmatpush1.msra.mxu0 0.0
      %3213 = vmatprep.subr.mxu0 0.0
      %3214 = vmatpush1.msra.mxu0 0.0
      %3215 = vmatprep.subr.mxu0 0.0
      %3216 = vmatpush1.msra.mxu0 0.0
      %3217 = vmatprep.subr.mxu0 0.0
      %3218 = vmatpush1.msra.mxu0 0.0
      %3219 = vmatprep.subr.mxu0 0.0
      %3220 = vmatpush1.msra.mxu0 0.0
      %3221 = vmatprep.subr.mxu0 0.0
      %3222 = vmatpush1.msra.mxu0 0.0
      %3223 = vmatprep.subr.mxu0 0.0
      %3224 = vmatpush1.msra.mxu0 0.0
      %3225 = vmatprep.subr.mxu0 0.0
      %3226 = vmatpush1.msra.mxu0 0.0
      %3227 = vmatprep.subr.mxu0 0.0
      %3228 = vmatpush1.msra.mxu0 0.0
      %3229 = vmatprep.subr.mxu0 0.0
      %3230 = vmatpush1.msra.mxu0 0.0
      %3231 = vmatprep.subr.mxu0 0.0
      %3232 = vmatpush1.msra.mxu0 0.0
      %3233 = vmatprep.subr.mxu0 0.0
      %3234 = vmatpush1.msra.mxu0 0.0
      %3235 = vmatprep.mubr.f32.mxu0 0.0
      %3236 = vmatmul.mubr.f32.gmra.mrb[0].mxu0 %v3163
      %v3237 = vpop.f32.mrb[0].mxu0
      %v3238 = vadd.f32 0.0, %v3237
      %v3239 = vpop.f32.mrb[0].mxu0
      %3240 = vmatprep.mubr.f32.mxu0 0.0
      %3241 = vmatmul.mubr.f32.gmra.mrb[0].mxu0 %v3166
      %v3242 = vpop.f32.mrb[0].mxu0
      %v3243 = vadd.f32 0.0, %v3242
      %v3244 = vpop.f32.mrb[0].mxu0
      %3245 = vdwg.mxu0
      %v3247 = vsel %vm2992, %v2982, 0
      %v3250 = vsel %vm2992, %v2983, 0
      %v3253 = vsel %vm2999, %v394, 0
      %3255 = vmatprep.subr.mxu0 0.0
      %3256 = vmatpush1.msra.mxu0 %v3253
      %3257 = vmatprep.subr.mxu0 0.0
      %3258 = vmatpush1.msra.mxu0 0.0
      %3259 = vmatprep.subr.mxu0 0.0
      %3260 = vmatpush1.msra.mxu0 0.0
      %3261 = vmatprep.subr.mxu0 0.0
      %3262 = vmatpush1.msra.mxu0 0.0
      %3263 = vmatprep.subr.mxu0 0.0
      %3264 = vmatpush1.msra.mxu0 0.0
      %3265 = vmatprep.subr.mxu0 0.0
      %3266 = vmatpush1.msra.mxu0 0.0
      %3267 = vmatprep.subr.mxu0 0.0
      %3268 = vmatpush1.msra.mxu0 0.0
      %3269 = vmatprep.subr.mxu0 0.0
      %3270 = vmatpush1.msra.mxu0 0.0
      %3271 = vmatprep.subr.mxu0 0.0
      %3272 = vmatpush1.msra.mxu0 0.0
      %3273 = vmatprep.subr.mxu0 0.0
      %3274 = vmatpush1.msra.mxu0 0.0
      %3275 = vmatprep.subr.mxu0 0.0
      %3276 = vmatpush1.msra.mxu0 0.0
      %3277 = vmatprep.subr.mxu0 0.0
      %3278 = vmatpush1.msra.mxu0 0.0
      %3279 = vmatprep.subr.mxu0 0.0
      %3280 = vmatpush1.msra.mxu0 0.0
      %3281 = vmatprep.subr.mxu0 0.0
      %3282 = vmatpush1.msra.mxu0 0.0
      %3283 = vmatprep.subr.mxu0 0.0
      %3284 = vmatpush1.msra.mxu0 0.0
      %3285 = vmatprep.subr.mxu0 0.0
      %3286 = vmatpush1.msra.mxu0 0.0
      %3287 = vmatprep.subr.mxu0 0.0
      %3288 = vmatpush1.msra.mxu0 0.0
      %3289 = vmatprep.subr.mxu0 0.0
      %3290 = vmatpush1.msra.mxu0 0.0
      %3291 = vmatprep.subr.mxu0 0.0
      %3292 = vmatpush1.msra.mxu0 0.0
      %3293 = vmatprep.subr.mxu0 0.0
      %3294 = vmatpush1.msra.mxu0 0.0
      %3295 = vmatprep.subr.mxu0 0.0
      %3296 = vmatpush1.msra.mxu0 0.0
      %3297 = vmatprep.subr.mxu0 0.0
      %3298 = vmatpush1.msra.mxu0 0.0
      %3299 = vmatprep.subr.mxu0 0.0
      %3300 = vmatpush1.msra.mxu0 0.0
      %3301 = vmatprep.subr.mxu0 0.0
      %3302 = vmatpush1.msra.mxu0 0.0
      %3303 = vmatprep.subr.mxu0 0.0
      %3304 = vmatpush1.msra.mxu0 0.0
      %3305 = vmatprep.subr.mxu0 0.0
      %3306 = vmatpush1.msra.mxu0 0.0
      %3307 = vmatprep.subr.mxu0 0.0
      %3308 = vmatpush1.msra.mxu0 0.0
      %3309 = vmatprep.subr.mxu0 0.0
      %3310 = vmatpush1.msra.mxu0 0.0
      %3311 = vmatprep.subr.mxu0 0.0
      %3312 = vmatpush1.msra.mxu0 0.0
      %3313 = vmatprep.subr.mxu0 0.0
      %3314 = vmatpush1.msra.mxu0 0.0
      %3315 = vmatprep.subr.mxu0 0.0
      %3316 = vmatpush1.msra.mxu0 0.0
      %3317 = vmatprep.subr.mxu0 0.0
      %3318 = vmatpush1.msra.mxu0 0.0
      %3319 = vmatprep.mubr.f32.mxu0 0.0
      %3320 = vmatmul.mubr.f32.gmra.mrb[0].mxu0 %v3247
      %v3321 = vpop.f32.mrb[0].mxu0
      %v3322 = vadd.f32 0.0, %v3321
      %v3323 = vpop.f32.mrb[0].mxu0
      %3324 = vmatprep.mubr.f32.mxu0 0.0
      %3325 = vmatmul.mubr.f32.gmra.mrb[0].mxu0 %v3250
      %v3326 = vpop.f32.mrb[0].mxu0
      %v3327 = vadd.f32 0.0, %v3326
      %v3328 = vpop.f32.mrb[0].mxu0
      %3329 = vdwg.mxu0
      %v3331 = vsel %vm2992, %v2984, 0
      %v3334 = vsel %vm2992, %v2985, 0
      %v3337 = vsel %vm2999, %v395, 0
      %3339 = vmatprep.subr.mxu0 0.0
      %3340 = vmatpush1.msra.mxu0 %v3337
      %3341 = vmatprep.subr.mxu0 0.0
      %3342 = vmatpush1.msra.mxu0 0.0
      %3343 = vmatprep.subr.mxu0 0.0
      %3344 = vmatpush1.msra.mxu0 0.0
      %3345 = vmatprep.subr.mxu0 0.0
      %3346 = vmatpush1.msra.mxu0 0.0
      %3347 = vmatprep.subr.mxu0 0.0
      %3348 = vmatpush1.msra.mxu0 0.0
      %3349 = vmatprep.subr.mxu0 0.0
      %3350 = vmatpush1.msra.mxu0 0.0
      %3351 = vmatprep.subr.mxu0 0.0
      %3352 = vmatpush1.msra.mxu0 0.0
      %3353 = vmatprep.subr.mxu0 0.0
      %3354 = vmatpush1.msra.mxu0 0.0
      %3355 = vmatprep.subr.mxu0 0.0
      %3356 = vmatpush1.msra.mxu0 0.0
      %3357 = vmatprep.subr.mxu0 0.0
      %3358 = vmatpush1.msra.mxu0 0.0
      %3359 = vmatprep.subr.mxu0 0.0
      %3360 = vmatpush1.msra.mxu0 0.0
      %3361 = vmatprep.subr.mxu0 0.0
      %3362 = vmatpush1.msra.mxu0 0.0
      %3363 = vmatprep.subr.mxu0 0.0
      %3364 = vmatpush1.msra.mxu0 0.0
      %3365 = vmatprep.subr.mxu0 0.0
      %3366 = vmatpush1.msra.mxu0 0.0
      %3367 = vmatprep.subr.mxu0 0.0
      %3368 = vmatpush1.msra.mxu0 0.0
      %3369 = vmatprep.subr.mxu0 0.0
      %3370 = vmatpush1.msra.mxu0 0.0
      %3371 = vmatprep.subr.mxu0 0.0
      %3372 = vmatpush1.msra.mxu0 0.0
      %3373 = vmatprep.subr.mxu0 0.0
      %3374 = vmatpush1.msra.mxu0 0.0
      %3375 = vmatprep.subr.mxu0 0.0
      %3376 = vmatpush1.msra.mxu0 0.0
      %3377 = vmatprep.subr.mxu0 0.0
      %3378 = vmatpush1.msra.mxu0 0.0
      %3379 = vmatprep.subr.mxu0 0.0
      %3380 = vmatpush1.msra.mxu0 0.0
      %3381 = vmatprep.subr.mxu0 0.0
      %3382 = vmatpush1.msra.mxu0 0.0
      %3383 = vmatprep.subr.mxu0 0.0
      %3384 = vmatpush1.msra.mxu0 0.0
      %3385 = vmatprep.subr.mxu0 0.0
      %3386 = vmatpush1.msra.mxu0 0.0
      %3387 = vmatprep.subr.mxu0 0.0
      %3388 = vmatpush1.msra.mxu0 0.0
      %3389 = vmatprep.subr.mxu0 0.0
      %3390 = vmatpush1.msra.mxu0 0.0
      %3391 = vmatprep.subr.mxu0 0.0
      %3392 = vmatpush1.msra.mxu0 0.0
      %3393 = vmatprep.subr.mxu0 0.0
      %3394 = vmatpush1.msra.mxu0 0.0
      %3395 = vmatprep.subr.mxu0 0.0
      %3396 = vmatpush1.msra.mxu0 0.0
      %3397 = vmatprep.subr.mxu0 0.0
      %3398 = vmatpush1.msra.mxu0 0.0
      %3399 = vmatprep.subr.mxu0 0.0
      %3400 = vmatpush1.msra.mxu0 0.0
      %3401 = vmatprep.subr.mxu0 0.0
      %3402 = vmatpush1.msra.mxu0 0.0
      %3403 = vmatprep.mubr.f32.mxu0 0.0
      %3404 = vmatmul.mubr.f32.gmra.mrb[0].mxu0 %v3331
      %v3405 = vpop.f32.mrb[0].mxu0
      %v3406 = vadd.f32 0.0, %v3405
      %v3407 = vpop.f32.mrb[0].mxu0
      %3408 = vmatprep.mubr.f32.mxu0 0.0
      %3409 = vmatmul.mubr.f32.gmra.mrb[0].mxu0 %v3334
      %v3410 = vpop.f32.mrb[0].mxu0
      %v3411 = vadd.f32 0.0, %v3410
      %v3412 = vpop.f32.mrb[0].mxu0
      %3413 = vdwg.mxu0
      %v3415 = vsel %vm2992, %v2986, 0
      %v3418 = vsel %vm2992, %v2987, 0
      %v3421 = vsel %vm2999, %v396, 0
      %3423 = vmatprep.subr.mxu0 0.0
      %3424 = vmatpush1.msra.mxu0 %v3421
      %3425 = vmatprep.subr.mxu0 0.0
      %3426 = vmatpush1.msra.mxu0 0.0
      %3427 = vmatprep.subr.mxu0 0.0
      %3428 = vmatpush1.msra.mxu0 0.0
      %3429 = vmatprep.subr.mxu0 0.0
      %3430 = vmatpush1.msra.mxu0 0.0
      %3431 = vmatprep.subr.mxu0 0.0
      %3432 = vmatpush1.msra.mxu0 0.0
      %3433 = vmatprep.subr.mxu0 0.0
      %3434 = vmatpush1.msra.mxu0 0.0
      %3435 = vmatprep.subr.mxu0 0.0
      %3436 = vmatpush1.msra.mxu0 0.0
      %3437 = vmatprep.subr.mxu0 0.0
      %3438 = vmatpush1.msra.mxu0 0.0
      %3439 = vmatprep.subr.mxu0 0.0
      %3440 = vmatpush1.msra.mxu0 0.0
      %3441 = vmatprep.subr.mxu0 0.0
      %3442 = vmatpush1.msra.mxu0 0.0
      %3443 = vmatprep.subr.mxu0 0.0
      %3444 = vmatpush1.msra.mxu0 0.0
      %3445 = vmatprep.subr.mxu0 0.0
      %3446 = vmatpush1.msra.mxu0 0.0
      %3447 = vmatprep.subr.mxu0 0.0
      %3448 = vmatpush1.msra.mxu0 0.0
      %3449 = vmatprep.subr.mxu0 0.0
      %3450 = vmatpush1.msra.mxu0 0.0
      %3451 = vmatprep.subr.mxu0 0.0
      %3452 = vmatpush1.msra.mxu0 0.0
      %3453 = vmatprep.subr.mxu0 0.0
      %3454 = vmatpush1.msra.mxu0 0.0
      %3455 = vmatprep.subr.mxu0 0.0
      %3456 = vmatpush1.msra.mxu0 0.0
      %3457 = vmatprep.subr.mxu0 0.0
      %3458 = vmatpush1.msra.mxu0 0.0
      %3459 = vmatprep.subr.mxu0 0.0
      %3460 = vmatpush1.msra.mxu0 0.0
      %3461 = vmatprep.subr.mxu0 0.0
      %3462 = vmatpush1.msra.mxu0 0.0
      %3463 = vmatprep.subr.mxu0 0.0
      %3464 = vmatpush1.msra.mxu0 0.0
      %3465 = vmatprep.subr.mxu0 0.0
      %3466 = vmatpush1.msra.mxu0 0.0
      %3467 = vmatprep.subr.mxu0 0.0
      %3468 = vmatpush1.msra.mxu0 0.0
      %3469 = vmatprep.subr.mxu0 0.0
      %3470 = vmatpush1.msra.mxu0 0.0
      %3471 = vmatprep.subr.mxu0 0.0
      %3472 = vmatpush1.msra.mxu0 0.0
      %3473 = vmatprep.subr.mxu0 0.0
      %3474 = vmatpush1.msra.mxu0 0.0
      %3475 = vmatprep.subr.mxu0 0.0
      %3476 = vmatpush1.msra.mxu0 0.0
      %3477 = vmatprep.subr.mxu0 0.0
      %3478 = vmatpush1.msra.mxu0 0.0
      %3479 = vmatprep.subr.mxu0 0.0
      %3480 = vmatpush1.msra.mxu0 0.0
      %3481 = vmatprep.subr.mxu0 0.0
      %3482 = vmatpush1.msra.mxu0 0.0
      %3483 = vmatprep.subr.mxu0 0.0
      %3484 = vmatpush1.msra.mxu0 0.0
      %3485 = vmatprep.subr.mxu0 0.0
      %3486 = vmatpush1.msra.mxu0 0.0
      %3487 = vmatprep.mubr.f32.mxu0 0.0
      %3488 = vmatmul.mubr.f32.gmra.mrb[0].mxu0 %v3415
      %v3489 = vpop.f32.mrb[0].mxu0
      %v3490 = vadd.f32 0.0, %v3489
      %v3491 = vpop.f32.mrb[0].mxu0
      %3492 = vmatprep.mubr.f32.mxu0 0.0
      %3493 = vmatmul.mubr.f32.gmra.mrb[0].mxu0 %v3418
      %v3494 = vpop.f32.mrb[0].mxu0
      %v3495 = vadd.f32 0.0, %v3494
      %v3496 = vpop.f32.mrb[0].mxu0
      %3497 = vdwg.mxu0
      %v3499 = vsel %vm2992, %v2988, 0
      %v3502 = vsel %vm2992, %v2989, 0
      %v3505 = vsel %vm2999, %v397, 0
      %3507 = vmatprep.subr.mxu0 0.0
      %3508 = vmatpush1.msra.mxu0 %v3505
      %3509 = vmatprep.subr.mxu0 0.0
      %3510 = vmatpush1.msra.mxu0 0.0
      %3511 = vmatprep.subr.mxu0 0.0
      %3512 = vmatpush1.msra.mxu0 0.0
      %3513 = vmatprep.subr.mxu0 0.0
      %3514 = vmatpush1.msra.mxu0 0.0
      %3515 = vmatprep.subr.mxu0 0.0
      %3516 = vmatpush1.msra.mxu0 0.0
      %3517 = vmatprep.subr.mxu0 0.0
      %3518 = vmatpush1.msra.mxu0 0.0
      %3519 = vmatprep.subr.mxu0 0.0
      %3520 = vmatpush1.msra.mxu0 0.0
      %3521 = vmatprep.subr.mxu0 0.0
      %3522 = vmatpush1.msra.mxu0 0.0
      %3523 = vmatprep.subr.mxu0 0.0
      %3524 = vmatpush1.msra.mxu0 0.0
      %3525 = vmatprep.subr.mxu0 0.0
      %3526 = vmatpush1.msra.mxu0 0.0
      %3527 = vmatprep.subr.mxu0 0.0
      %3528 = vmatpush1.msra.mxu0 0.0
      %3529 = vmatprep.subr.mxu0 0.0
      %3530 = vmatpush1.msra.mxu0 0.0
      %3531 = vmatprep.subr.mxu0 0.0
      %3532 = vmatpush1.msra.mxu0 0.0
      %3533 = vmatprep.subr.mxu0 0.0
      %3534 = vmatpush1.msra.mxu0 0.0
      %3535 = vmatprep.subr.mxu0 0.0
      %3536 = vmatpush1.msra.mxu0 0.0
      %3537 = vmatprep.subr.mxu0 0.0
      %3538 = vmatpush1.msra.mxu0 0.0
      %3539 = vmatprep.subr.mxu0 0.0
      %3540 = vmatpush1.msra.mxu0 0.0
      %3541 = vmatprep.subr.mxu0 0.0
      %3542 = vmatpush1.msra.mxu0 0.0
      %3543 = vmatprep.subr.mxu0 0.0
      %3544 = vmatpush1.msra.mxu0 0.0
      %3545 = vmatprep.subr.mxu0 0.0
      %3546 = vmatpush1.msra.mxu0 0.0
      %3547 = vmatprep.subr.mxu0 0.0
      %3548 = vmatpush1.msra.mxu0 0.0
      %3549 = vmatprep.subr.mxu0 0.0
      %3550 = vmatpush1.msra.mxu0 0.0
      %3551 = vmatprep.subr.mxu0 0.0
      %3552 = vmatpush1.msra.mxu0 0.0
      %3553 = vmatprep.subr.mxu0 0.0
      %3554 = vmatpush1.msra.mxu0 0.0
      %3555 = vmatprep.subr.mxu0 0.0
      %3556 = vmatpush1.msra.mxu0 0.0
      %3557 = vmatprep.subr.mxu0 0.0
      %3558 = vmatpush1.msra.mxu0 0.0
      %3559 = vmatprep.subr.mxu0 0.0
      %3560 = vmatpush1.msra.mxu0 0.0
      %3561 = vmatprep.subr.mxu0 0.0
      %3562 = vmatpush1.msra.mxu0 0.0
      %3563 = vmatprep.subr.mxu0 0.0
      %3564 = vmatpush1.msra.mxu0 0.0
      %3565 = vmatprep.subr.mxu0 0.0
      %3566 = vmatpush1.msra.mxu0 0.0
      %3567 = vmatprep.subr.mxu0 0.0
      %3568 = vmatpush1.msra.mxu0 0.0
      %3569 = vmatprep.subr.mxu0 0.0
      %3570 = vmatpush1.msra.mxu0 0.0
      %3571 = vmatprep.mubr.f32.mxu0 0.0
      %3572 = vmatmul.mubr.f32.gmra.mrb[0].mxu0 %v3499
      %v3573 = vpop.f32.mrb[0].mxu0
      %v3574 = vadd.f32 0.0, %v3573
      %v3575 = vpop.f32.mrb[0].mxu0
      %3576 = vmatprep.mubr.f32.mxu0 0.0
      %3577 = vmatmul.mubr.f32.gmra.mrb[0].mxu0 %v3502
      %v3578 = vpop.f32.mrb[0].mxu0
      %v3579 = vadd.f32 0.0, %v3578
      %v3580 = vpop.f32.mrb[0].mxu0
      %3581 = vdwg.mxu0
      %v3583 = vsel %vm2992, %v2990, 0
      %v3586 = vsel %vm2992, %v2991, 0
      %v3589 = vsel %vm2999, %v398, 0
      %3591 = vmatprep.subr.mxu0 0.0
      %3592 = vmatpush1.msra.mxu0 %v3589
      %3593 = vmatprep.subr.mxu0 0.0
      %3594 = vmatpush1.msra.mxu0 0.0
      %3595 = vmatprep.subr.mxu0 0.0
      %3596 = vmatpush1.msra.mxu0 0.0
      %3597 = vmatprep.subr.mxu0 0.0
      %3598 = vmatpush1.msra.mxu0 0.0
      %3599 = vmatprep.subr.mxu0 0.0
      %3600 = vmatpush1.msra.mxu0 0.0
      %3601 = vmatprep.subr.mxu0 0.0
      %3602 = vmatpush1.msra.mxu0 0.0
      %3603 = vmatprep.subr.mxu0 0.0
      %3604 = vmatpush1.msra.mxu0 0.0
      %3605 = vmatprep.subr.mxu0 0.0
      %3606 = vmatpush1.msra.mxu0 0.0
      %3607 = vmatprep.subr.mxu0 0.0
      %3608 = vmatpush1.msra.mxu0 0.0
      %3609 = vmatprep.subr.mxu0 0.0
      %3610 = vmatpush1.msra.mxu0 0.0
      %3611 = vmatprep.subr.mxu0 0.0
      %3612 = vmatpush1.msra.mxu0 0.0
      %3613 = vmatprep.subr.mxu0 0.0
      %3614 = vmatpush1.msra.mxu0 0.0
      %3615 = vmatprep.subr.mxu0 0.0
      %3616 = vmatpush1.msra.mxu0 0.0
      %3617 = vmatprep.subr.mxu0 0.0
      %3618 = vmatpush1.msra.mxu0 0.0
      %3619 = vmatprep.subr.mxu0 0.0
      %3620 = vmatpush1.msra.mxu0 0.0
      %3621 = vmatprep.subr.mxu0 0.0
      %3622 = vmatpush1.msra.mxu0 0.0
      %3623 = vmatprep.subr.mxu0 0.0
      %3624 = vmatpush1.msra.mxu0 0.0
      %3625 = vmatprep.subr.mxu0 0.0
      %3626 = vmatpush1.msra.mxu0 0.0
      %3627 = vmatprep.subr.mxu0 0.0
      %3628 = vmatpush1.msra.mxu0 0.0
      %3629 = vmatprep.subr.mxu0 0.0
      %3630 = vmatpush1.msra.mxu0 0.0
      %3631 = vmatprep.subr.mxu0 0.0
      %3632 = vmatpush1.msra.mxu0 0.0
      %3633 = vmatprep.subr.mxu0 0.0
      %3634 = vmatpush1.msra.mxu0 0.0
      %3635 = vmatprep.subr.mxu0 0.0
      %3636 = vmatpush1.msra.mxu0 0.0
      %3637 = vmatprep.subr.mxu0 0.0
      %3638 = vmatpush1.msra.mxu0 0.0
      %3639 = vmatprep.subr.mxu0 0.0
      %3640 = vmatpush1.msra.mxu0 0.0
      %3641 = vmatprep.subr.mxu0 0.0
      %3642 = vmatpush1.msra.mxu0 0.0
      %3643 = vmatprep.subr.mxu0 0.0
      %3644 = vmatpush1.msra.mxu0 0.0
      %3645 = vmatprep.subr.mxu0 0.0
      %3646 = vmatpush1.msra.mxu0 0.0
      %3647 = vmatprep.subr.mxu0 0.0
      %3648 = vmatpush1.msra.mxu0 0.0
      %3649 = vmatprep.subr.mxu0 0.0
      %3650 = vmatpush1.msra.mxu0 0.0
      %3651 = vmatprep.subr.mxu0 0.0
      %3652 = vmatpush1.msra.mxu0 0.0
      %3653 = vmatprep.subr.mxu0 0.0
      %3654 = vmatpush1.msra.mxu0 0.0
      %3655 = vmatprep.mubr.f32.mxu0 0.0
      %3656 = vmatmul.mubr.f32.gmra.mrb[0].mxu0 %v3583
      %v3657 = vpop.f32.mrb[0].mxu0
      %v3658 = vadd.f32 0.0, %v3657
      %v3659 = vpop.f32.mrb[0].mxu0
      %3660 = vmatprep.mubr.f32.mxu0 0.0
      %3661 = vmatmul.mubr.f32.gmra.mrb[0].mxu0 %v3586
      %v3662 = vpop.f32.mrb[0].mxu0
      %v3663 = vadd.f32 0.0, %v3662
      %v3664 = vpop.f32.mrb[0].mxu0
      %3665 = vdwg.mxu0
      %v3667 = vsel %vm2992, %v2928, 0
      %v3670 = vsel %vm2992, %v2929, 0
      %v3673 = vsel %vm2999, %v383, 0
      %3675 = vmatprep.subr.mxu0 0.0
      %3676 = vmatpush1.msra.mxu0 %v3673
      %3677 = vmatprep.subr.mxu0 0.0
      %3678 = vmatpush1.msra.mxu0 0.0
      %3679 = vmatprep.subr.mxu0 0.0
      %3680 = vmatpush1.msra.mxu0 0.0
      %3681 = vmatprep.subr.mxu0 0.0
      %3682 = vmatpush1.msra.mxu0 0.0
      %3683 = vmatprep.subr.mxu0 0.0
      %3684 = vmatpush1.msra.mxu0 0.0
      %3685 = vmatprep.subr.mxu0 0.0
      %3686 = vmatpush1.msra.mxu0 0.0
      %3687 = vmatprep.subr.mxu0 0.0
      %3688 = vmatpush1.msra.mxu0 0.0
      %3689 = vmatprep.subr.mxu0 0.0
      %3690 = vmatpush1.msra.mxu0 0.0
      %3691 = vmatprep.subr.mxu0 0.0
      %3692 = vmatpush1.msra.mxu0 0.0
      %3693 = vmatprep.subr.mxu0 0.0
      %3694 = vmatpush1.msra.mxu0 0.0
      %3695 = vmatprep.subr.mxu0 0.0
      %3696 = vmatpush1.msra.mxu0 0.0
      %3697 = vmatprep.subr.mxu0 0.0
      %3698 = vmatpush1.msra.mxu0 0.0
      %3699 = vmatprep.subr.mxu0 0.0
      %3700 = vmatpush1.msra.mxu0 0.0
      %3701 = vmatprep.subr.mxu0 0.0
      %3702 = vmatpush1.msra.mxu0 0.0
      %3703 = vmatprep.subr.mxu0 0.0
      %3704 = vmatpush1.msra.mxu0 0.0
      %3705 = vmatprep.subr.mxu0 0.0
      %3706 = vmatpush1.msra.mxu0 0.0
      %3707 = vmatprep.subr.mxu0 0.0
      %3708 = vmatpush1.msra.mxu0 0.0
      %3709 = vmatprep.subr.mxu0 0.0
      %3710 = vmatpush1.msra.mxu0 0.0
      %3711 = vmatprep.subr.mxu0 0.0
      %3712 = vmatpush1.msra.mxu0 0.0
      %3713 = vmatprep.subr.mxu0 0.0
      %3714 = vmatpush1.msra.mxu0 0.0
      %3715 = vmatprep.subr.mxu0 0.0
      %3716 = vmatpush1.msra.mxu0 0.0
      %3717 = vmatprep.subr.mxu0 0.0
      %3718 = vmatpush1.msra.mxu0 0.0
      %3719 = vmatprep.subr.mxu0 0.0
      %3720 = vmatpush1.msra.mxu0 0.0
      %3721 = vmatprep.subr.mxu0 0.0
      %3722 = vmatpush1.msra.mxu0 0.0
      %3723 = vmatprep.subr.mxu0 0.0
      %3724 = vmatpush1.msra.mxu0 0.0
      %3725 = vmatprep.subr.mxu0 0.0
      %3726 = vmatpush1.msra.mxu0 0.0
      %3727 = vmatprep.subr.mxu0 0.0
      %3728 = vmatpush1.msra.mxu0 0.0
      %3729 = vmatprep.subr.mxu0 0.0
      %3730 = vmatpush1.msra.mxu0 0.0
      %3731 = vmatprep.subr.mxu0 0.0
      %3732 = vmatpush1.msra.mxu0 0.0
      %3733 = vmatprep.subr.mxu0 0.0
      %3734 = vmatpush1.msra.mxu0 0.0
      %3735 = vmatprep.subr.mxu0 0.0
      %3736 = vmatpush1.msra.mxu0 0.0
      %3737 = vmatprep.subr.mxu0 0.0
      %3738 = vmatpush1.msra.mxu0 0.0
      %3739 = vmatprep.mubr.f32.mxu0 0.0
      %3740 = vmatmul.mubr.f32.gmra.mrb[0].mxu0 %v3667
      %v3741 = vpop.f32.mrb[0].mxu0
      %v3742 = vadd.f32 %v3070, %v3741
      %v3743 = vpop.f32.mrb[0].mxu0
      %3744 = vmatprep.mubr.f32.mxu0 0.0
      %3745 = vmatmul.mubr.f32.gmra.mrb[0].mxu0 %v3670
      %v3746 = vpop.f32.mrb[0].mxu0
      %v3747 = vadd.f32 %v3075, %v3746
      %v3748 = vpop.f32.mrb[0].mxu0
      %3749 = vdwg.mxu0
      %v3751 = vsel %vm2992, %v2930, 0
      %v3754 = vsel %vm2992, %v2931, 0
      %v3757 = vsel %vm2999, %v384, 0
      %3759 = vmatprep.subr.mxu0 0.0
      %3760 = vmatpush1.msra.mxu0 %v3757
      %3761 = vmatprep.subr.mxu0 0.0
      %3762 = vmatpush1.msra.mxu0 0.0
      %3763 = vmatprep.subr.mxu0 0.0
      %3764 = vmatpush1.msra.mxu0 0.0
      %3765 = vmatprep.subr.mxu0 0.0
      %3766 = vmatpush1.msra.mxu0 0.0
      %3767 = vmatprep.subr.mxu0 0.0
      %3768 = vmatpush1.msra.mxu0 0.0
      %3769 = vmatprep.subr.mxu0 0.0
      %3770 = vmatpush1.msra.mxu0 0.0
      %3771 = vmatprep.subr.mxu0 0.0
      %3772 = vmatpush1.msra.mxu0 0.0
      %3773 = vmatprep.subr.mxu0 0.0
      %3774 = vmatpush1.msra.mxu0 0.0
      %3775 = vmatprep.subr.mxu0 0.0
      %3776 = vmatpush1.msra.mxu0 0.0
      %3777 = vmatprep.subr.mxu0 0.0
      %3778 = vmatpush1.msra.mxu0 0.0
      %3779 = vmatprep.subr.mxu0 0.0
      %3780 = vmatpush1.msra.mxu0 0.0
      %3781 = vmatprep.subr.mxu0 0.0
      %3782 = vmatpush1.msra.mxu0 0.0
      %3783 = vmatprep.subr.mxu0 0.0
      %3784 = vmatpush1.msra.mxu0 0.0
      %3785 = vmatprep.subr.mxu0 0.0
      %3786 = vmatpush1.msra.mxu0 0.0
      %3787 = vmatprep.subr.mxu0 0.0
      %3788 = vmatpush1.msra.mxu0 0.0
      %3789 = vmatprep.subr.mxu0 0.0
      %3790 = vmatpush1.msra.mxu0 0.0
      %3791 = vmatprep.subr.mxu0 0.0
      %3792 = vmatpush1.msra.mxu0 0.0
      %3793 = vmatprep.subr.mxu0 0.0
      %3794 = vmatpush1.msra.mxu0 0.0
      %3795 = vmatprep.subr.mxu0 0.0
      %3796 = vmatpush1.msra.mxu0 0.0
      %3797 = vmatprep.subr.mxu0 0.0
      %3798 = vmatpush1.msra.mxu0 0.0
      %3799 = vmatprep.subr.mxu0 0.0
      %3800 = vmatpush1.msra.mxu0 0.0
      %3801 = vmatprep.subr.mxu0 0.0
      %3802 = vmatpush1.msra.mxu0 0.0
      %3803 = vmatprep.subr.mxu0 0.0
      %3804 = vmatpush1.msra.mxu0 0.0
      %3805 = vmatprep.subr.mxu0 0.0
      %3806 = vmatpush1.msra.mxu0 0.0
      %3807 = vmatprep.subr.mxu0 0.0
      %3808 = vmatpush1.msra.mxu0 0.0
      %3809 = vmatprep.subr.mxu0 0.0
      %3810 = vmatpush1.msra.mxu0 0.0
      %3811 = vmatprep.subr.mxu0 0.0
      %3812 = vmatpush1.msra.mxu0 0.0
      %3813 = vmatprep.subr.mxu0 0.0
      %3814 = vmatpush1.msra.mxu0 0.0
      %3815 = vmatprep.subr.mxu0 0.0
      %3816 = vmatpush1.msra.mxu0 0.0
      %3817 = vmatprep.subr.mxu0 0.0
      %3818 = vmatpush1.msra.mxu0 0.0
      %3819 = vmatprep.subr.mxu0 0.0
      %3820 = vmatpush1.msra.mxu0 0.0
      %3821 = vmatprep.subr.mxu0 0.0
      %3822 = vmatpush1.msra.mxu0 0.0
      %3823 = vmatprep.mubr.f32.mxu0 0.0
      %3824 = vmatmul.mubr.f32.gmra.mrb[0].mxu0 %v3751
      %v3825 = vpop.f32.mrb[0].mxu0
      %v3826 = vadd.f32 %v3154, %v3825
      %v3827 = vpop.f32.mrb[0].mxu0
      %3828 = vmatprep.mubr.f32.mxu0 0.0
      %3829 = vmatmul.mubr.f32.gmra.mrb[0].mxu0 %v3754
      %v3830 = vpop.f32.mrb[0].mxu0
      %v3831 = vadd.f32 %v3159, %v3830
      %v3832 = vpop.f32.mrb[0].mxu0
      %3833 = vdwg.mxu0
      %v3835 = vsel %vm2992, %v2932, 0
      %v3838 = vsel %vm2992, %v2933, 0
      %v3841 = vsel %vm2999, %v385, 0
      %3843 = vmatprep.subr.mxu0 0.0
      %3844 = vmatpush1.msra.mxu0 %v3841
      %3845 = vmatprep.subr.mxu0 0.0
      %3846 = vmatpush1.msra.mxu0 0.0
      %3847 = vmatprep.subr.mxu0 0.0
      %3848 = vmatpush1.msra.mxu0 0.0
      %3849 = vmatprep.subr.mxu0 0.0
      %3850 = vmatpush1.msra.mxu0 0.0
      %3851 = vmatprep.subr.mxu0 0.0
      %3852 = vmatpush1.msra.mxu0 0.0
      %3853 = vmatprep.subr.mxu0 0.0
      %3854 = vmatpush1.msra.mxu0 0.0
      %3855 = vmatprep.subr.mxu0 0.0
      %3856 = vmatpush1.msra.mxu0 0.0
      %3857 = vmatprep.subr.mxu0 0.0
      %3858 = vmatpush1.msra.mxu0 0.0
      %3859 = vmatprep.subr.mxu0 0.0
      %3860 = vmatpush1.msra.mxu0 0.0
      %3861 = vmatprep.subr.mxu0 0.0
      %3862 = vmatpush1.msra.mxu0 0.0
      %3863 = vmatprep.subr.mxu0 0.0
      %3864 = vmatpush1.msra.mxu0 0.0
      %3865 = vmatprep.subr.mxu0 0.0
      %3866 = vmatpush1.msra.mxu0 0.0
      %3867 = vmatprep.subr.mxu0 0.0
      %3868 = vmatpush1.msra.mxu0 0.0
      %3869 = vmatprep.subr.mxu0 0.0
      %3870 = vmatpush1.msra.mxu0 0.0
      %3871 = vmatprep.subr.mxu0 0.0
      %3872 = vmatpush1.msra.mxu0 0.0
      %3873 = vmatprep.subr.mxu0 0.0
      %3874 = vmatpush1.msra.mxu0 0.0
      %3875 = vmatprep.subr.mxu0 0.0
      %3876 = vmatpush1.msra.mxu0 0.0
      %3877 = vmatprep.subr.mxu0 0.0
      %3878 = vmatpush1.msra.mxu0 0.0
      %3879 = vmatprep.subr.mxu0 0.0
      %3880 = vmatpush1.msra.mxu0 0.0
      %3881 = vmatprep.subr.mxu0 0.0
      %3882 = vmatpush1.msra.mxu0 0.0
      %3883 = vmatprep.subr.mxu0 0.0
      %3884 = vmatpush1.msra.mxu0 0.0
      %3885 = vmatprep.subr.mxu0 0.0
      %3886 = vmatpush1.msra.mxu0 0.0
      %3887 = vmatprep.subr.mxu0 0.0
      %3888 = vmatpush1.msra.mxu0 0.0
      %3889 = vmatprep.subr.mxu0 0.0
      %3890 = vmatpush1.msra.mxu0 0.0
      %3891 = vmatprep.subr.mxu0 0.0
      %3892 = vmatpush1.msra.mxu0 0.0
      %3893 = vmatprep.subr.mxu0 0.0
      %3894 = vmatpush1.msra.mxu0 0.0
      %3895 = vmatprep.subr.mxu0 0.0
      %3896 = vmatpush1.msra.mxu0 0.0
      %3897 = vmatprep.subr.mxu0 0.0
      %3898 = vmatpush1.msra.mxu0 0.0
      %3899 = vmatprep.subr.mxu0 0.0
      %3900 = vmatpush1.msra.mxu0 0.0
      %3901 = vmatprep.subr.mxu0 0.0
      %3902 = vmatpush1.msra.mxu0 0.0
      %3903 = vmatprep.subr.mxu0 0.0
      %3904 = vmatpush1.msra.mxu0 0.0
      %3905 = vmatprep.subr.mxu0 0.0
      %3906 = vmatpush1.msra.mxu0 0.0
      %3907 = vmatprep.mubr.f32.mxu0 0.0
      %3908 = vmatmul.mubr.f32.gmra.mrb[0].mxu0 %v3835
      %v3909 = vpop.f32.mrb[0].mxu0
      %v3910 = vadd.f32 %v3238, %v3909
      %v3911 = vpop.f32.mrb[0].mxu0
      %3912 = vmatprep.mubr.f32.mxu0 0.0
      %3913 = vmatmul.mubr.f32.gmra.mrb[0].mxu0 %v3838
      %v3914 = vpop.f32.mrb[0].mxu0
      %v3915 = vadd.f32 %v3243, %v3914
      %v3916 = vpop.f32.mrb[0].mxu0
      %3917 = vdwg.mxu0
      %v3919 = vsel %vm2992, %v2934, 0
      %v3922 = vsel %vm2992, %v2935, 0
      %v3925 = vsel %vm2999, %v386, 0
      %3927 = vmatprep.subr.mxu0 0.0
      %3928 = vmatpush1.msra.mxu0 %v3925
      %3929 = vmatprep.subr.mxu0 0.0
      %3930 = vmatpush1.msra.mxu0 0.0
      %3931 = vmatprep.subr.mxu0 0.0
      %3932 = vmatpush1.msra.mxu0 0.0
      %3933 = vmatprep.subr.mxu0 0.0
      %3934 = vmatpush1.msra.mxu0 0.0
      %3935 = vmatprep.subr.mxu0 0.0
      %3936 = vmatpush1.msra.mxu0 0.0
      %3937 = vmatprep.subr.mxu0 0.0
      %3938 = vmatpush1.msra.mxu0 0.0
      %3939 = vmatprep.subr.mxu0 0.0
      %3940 = vmatpush1.msra.mxu0 0.0
      %3941 = vmatprep.subr.mxu0 0.0
      %3942 = vmatpush1.msra.mxu0 0.0
      %3943 = vmatprep.subr.mxu0 0.0
      %3944 = vmatpush1.msra.mxu0 0.0
      %3945 = vmatprep.subr.mxu0 0.0
      %3946 = vmatpush1.msra.mxu0 0.0
      %3947 = vmatprep.subr.mxu0 0.0
      %3948 = vmatpush1.msra.mxu0 0.0
      %3949 = vmatprep.subr.mxu0 0.0
      %3950 = vmatpush1.msra.mxu0 0.0
      %3951 = vmatprep.subr.mxu0 0.0
      %3952 = vmatpush1.msra.mxu0 0.0
      %3953 = vmatprep.subr.mxu0 0.0
      %3954 = vmatpush1.msra.mxu0 0.0
      %3955 = vmatprep.subr.mxu0 0.0
      %3956 = vmatpush1.msra.mxu0 0.0
      %3957 = vmatprep.subr.mxu0 0.0
      %3958 = vmatpush1.msra.mxu0 0.0
      %3959 = vmatprep.subr.mxu0 0.0
      %3960 = vmatpush1.msra.mxu0 0.0
      %3961 = vmatprep.subr.mxu0 0.0
      %3962 = vmatpush1.msra.mxu0 0.0
      %3963 = vmatprep.subr.mxu0 0.0
      %3964 = vmatpush1.msra.mxu0 0.0
      %3965 = vmatprep.subr.mxu0 0.0
      %3966 = vmatpush1.msra.mxu0 0.0
      %3967 = vmatprep.subr.mxu0 0.0
      %3968 = vmatpush1.msra.mxu0 0.0
      %3969 = vmatprep.subr.mxu0 0.0
      %3970 = vmatpush1.msra.mxu0 0.0
      %3971 = vmatprep.subr.mxu0 0.0
      %3972 = vmatpush1.msra.mxu0 0.0
      %3973 = vmatprep.subr.mxu0 0.0
      %3974 = vmatpush1.msra.mxu0 0.0
      %3975 = vmatprep.subr.mxu0 0.0
      %3976 = vmatpush1.msra.mxu0 0.0
      %3977 = vmatprep.subr.mxu0 0.0
      %3978 = vmatpush1.msra.mxu0 0.0
      %3979 = vmatprep.subr.mxu0 0.0
      %3980 = vmatpush1.msra.mxu0 0.0
      %3981 = vmatprep.subr.mxu0 0.0
      %3982 = vmatpush1.msra.mxu0 0.0
      %3983 = vmatprep.subr.mxu0 0.0
      %3984 = vmatpush1.msra.mxu0 0.0
      %3985 = vmatprep.subr.mxu0 0.0
      %3986 = vmatpush1.msra.mxu0 0.0
      %3987 = vmatprep.subr.mxu0 0.0
      %3988 = vmatpush1.msra.mxu0 0.0
      %3989 = vmatprep.subr.mxu0 0.0
      %3990 = vmatpush1.msra.mxu0 0.0
      %3991 = vmatprep.mubr.f32.mxu0 0.0
      %3992 = vmatmul.mubr.f32.gmra.mrb[0].mxu0 %v3919
      %v3993 = vpop.f32.mrb[0].mxu0
      %v3994 = vadd.f32 %v3322, %v3993
      %v3995 = vpop.f32.mrb[0].mxu0
      %3996 = vmatprep.mubr.f32.mxu0 0.0
      %3997 = vmatmul.mubr.f32.gmra.mrb[0].mxu0 %v3922
      %v3998 = vpop.f32.mrb[0].mxu0
      %v3999 = vadd.f32 %v3327, %v3998
      %v4000 = vpop.f32.mrb[0].mxu0
      %4001 = vdwg.mxu0
      %v4003 = vsel %vm2992, %v2936, 0
      %v4006 = vsel %vm2992, %v2937, 0
      %v4009 = vsel %vm2999, %v387, 0
      %4011 = vmatprep.subr.mxu0 0.0
      %4012 = vmatpush1.msra.mxu0 %v4009
      %4013 = vmatprep.subr.mxu0 0.0
      %4014 = vmatpush1.msra.mxu0 0.0
      %4015 = vmatprep.subr.mxu0 0.0
      %4016 = vmatpush1.msra.mxu0 0.0
      %4017 = vmatprep.subr.mxu0 0.0
      %4018 = vmatpush1.msra.mxu0 0.0
      %4019 = vmatprep.subr.mxu0 0.0
      %4020 = vmatpush1.msra.mxu0 0.0
      %4021 = vmatprep.subr.mxu0 0.0
      %4022 = vmatpush1.msra.mxu0 0.0
      %4023 = vmatprep.subr.mxu0 0.0
      %4024 = vmatpush1.msra.mxu0 0.0
      %4025 = vmatprep.subr.mxu0 0.0
      %4026 = vmatpush1.msra.mxu0 0.0
      %4027 = vmatprep.subr.mxu0 0.0
      %4028 = vmatpush1.msra.mxu0 0.0
      %4029 = vmatprep.subr.mxu0 0.0
      %4030 = vmatpush1.msra.mxu0 0.0
      %4031 = vmatprep.subr.mxu0 0.0
      %4032 = vmatpush1.msra.mxu0 0.0
      %4033 = vmatprep.subr.mxu0 0.0
      %4034 = vmatpush1.msra.mxu0 0.0
      %4035 = vmatprep.subr.mxu0 0.0
      %4036 = vmatpush1.msra.mxu0 0.0
      %4037 = vmatprep.subr.mxu0 0.0
      %4038 = vmatpush1.msra.mxu0 0.0
      %4039 = vmatprep.subr.mxu0 0.0
      %4040 = vmatpush1.msra.mxu0 0.0
      %4041 = vmatprep.subr.mxu0 0.0
      %4042 = vmatpush1.msra.mxu0 0.0
      %4043 = vmatprep.subr.mxu0 0.0
      %4044 = vmatpush1.msra.mxu0 0.0
      %4045 = vmatprep.subr.mxu0 0.0
      %4046 = vmatpush1.msra.mxu0 0.0
      %4047 = vmatprep.subr.mxu0 0.0
      %4048 = vmatpush1.msra.mxu0 0.0
      %4049 = vmatprep.subr.mxu0 0.0
      %4050 = vmatpush1.msra.mxu0 0.0
      %4051 = vmatprep.subr.mxu0 0.0
      %4052 = vmatpush1.msra.mxu0 0.0
      %4053 = vmatprep.subr.mxu0 0.0
      %4054 = vmatpush1.msra.mxu0 0.0
      %4055 = vmatprep.subr.mxu0 0.0
      %4056 = vmatpush1.msra.mxu0 0.0
      %4057 = vmatprep.subr.mxu0 0.0
      %4058 = vmatpush1.msra.mxu0 0.0
      %4059 = vmatprep.subr.mxu0 0.0
      %4060 = vmatpush1.msra.mxu0 0.0
      %4061 = vmatprep.subr.mxu0 0.0
      %4062 = vmatpush1.msra.mxu0 0.0
      %4063 = vmatprep.subr.mxu0 0.0
      %4064 = vmatpush1.msra.mxu0 0.0
      %4065 = vmatprep.subr.mxu0 0.0
      %4066 = vmatpush1.msra.mxu0 0.0
      %4067 = vmatprep.subr.mxu0 0.0
      %4068 = vmatpush1.msra.mxu0 0.0
      %4069 = vmatprep.subr.mxu0 0.0
      %4070 = vmatpush1.msra.mxu0 0.0
      %4071 = vmatprep.subr.mxu0 0.0
      %4072 = vmatpush1.msra.mxu0 0.0
      %4073 = vmatprep.subr.mxu0 0.0
      %4074 = vmatpush1.msra.mxu0 0.0
      %4075 = vmatprep.mubr.f32.mxu0 0.0
      %4076 = vmatmul.mubr.f32.gmra.mrb[0].mxu0 %v4003
      %v4077 = vpop.f32.mrb[0].mxu0
      %v4078 = vadd.f32 %v3406, %v4077
      %v4079 = vpop.f32.mrb[0].mxu0
      %4080 = vmatprep.mubr.f32.mxu0 0.0
      %4081 = vmatmul.mubr.f32.gmra.mrb[0].mxu0 %v4006
      %v4082 = vpop.f32.mrb[0].mxu0
      %v4083 = vadd.f32 %v3411, %v4082
      %v4084 = vpop.f32.mrb[0].mxu0
      %4085 = vdwg.mxu0
      %v4087 = vsel %vm2992, %v2938, 0
      %v4090 = vsel %vm2992, %v2939, 0
      %v4093 = vsel %vm2999, %v388, 0
      %4095 = vmatprep.subr.mxu0 0.0
      %4096 = vmatpush1.msra.mxu0 %v4093
      %4097 = vmatprep.subr.mxu0 0.0
      %4098 = vmatpush1.msra.mxu0 0.0
      %4099 = vmatprep.subr.mxu0 0.0
      %4100 = vmatpush1.msra.mxu0 0.0
      %4101 = vmatprep.subr.mxu0 0.0
      %4102 = vmatpush1.msra.mxu0 0.0
      %4103 = vmatprep.subr.mxu0 0.0
      %4104 = vmatpush1.msra.mxu0 0.0
      %4105 = vmatprep.subr.mxu0 0.0
      %4106 = vmatpush1.msra.mxu0 0.0
      %4107 = vmatprep.subr.mxu0 0.0
      %4108 = vmatpush1.msra.mxu0 0.0
      %4109 = vmatprep.subr.mxu0 0.0
      %4110 = vmatpush1.msra.mxu0 0.0
      %4111 = vmatprep.subr.mxu0 0.0
      %4112 = vmatpush1.msra.mxu0 0.0
      %4113 = vmatprep.subr.mxu0 0.0
      %4114 = vmatpush1.msra.mxu0 0.0
      %4115 = vmatprep.subr.mxu0 0.0
      %4116 = vmatpush1.msra.mxu0 0.0
      %4117 = vmatprep.subr.mxu0 0.0
      %4118 = vmatpush1.msra.mxu0 0.0
      %4119 = vmatprep.subr.mxu0 0.0
      %4120 = vmatpush1.msra.mxu0 0.0
      %4121 = vmatprep.subr.mxu0 0.0
      %4122 = vmatpush1.msra.mxu0 0.0
      %4123 = vmatprep.subr.mxu0 0.0
      %4124 = vmatpush1.msra.mxu0 0.0
      %4125 = vmatprep.subr.mxu0 0.0
      %4126 = vmatpush1.msra.mxu0 0.0
      %4127 = vmatprep.subr.mxu0 0.0
      %4128 = vmatpush1.msra.mxu0 0.0
      %4129 = vmatprep.subr.mxu0 0.0
      %4130 = vmatpush1.msra.mxu0 0.0
      %4131 = vmatprep.subr.mxu0 0.0
      %4132 = vmatpush1.msra.mxu0 0.0
      %4133 = vmatprep.subr.mxu0 0.0
      %4134 = vmatpush1.msra.mxu0 0.0
      %4135 = vmatprep.subr.mxu0 0.0
      %4136 = vmatpush1.msra.mxu0 0.0
      %4137 = vmatprep.subr.mxu0 0.0
      %4138 = vmatpush1.msra.mxu0 0.0
      %4139 = vmatprep.subr.mxu0 0.0
      %4140 = vmatpush1.msra.mxu0 0.0
      %4141 = vmatprep.subr.mxu0 0.0
      %4142 = vmatpush1.msra.mxu0 0.0
      %4143 = vmatprep.subr.mxu0 0.0
      %4144 = vmatpush1.msra.mxu0 0.0
      %4145 = vmatprep.subr.mxu0 0.0
      %4146 = vmatpush1.msra.mxu0 0.0
      %4147 = vmatprep.subr.mxu0 0.0
      %4148 = vmatpush1.msra.mxu0 0.0
      %4149 = vmatprep.subr.mxu0 0.0
      %4150 = vmatpush1.msra.mxu0 0.0
      %4151 = vmatprep.subr.mxu0 0.0
      %4152 = vmatpush1.msra.mxu0 0.0
      %4153 = vmatprep.subr.mxu0 0.0
      %4154 = vmatpush1.msra.mxu0 0.0
      %4155 = vmatprep.subr.mxu0 0.0
      %4156 = vmatpush1.msra.mxu0 0.0
      %4157 = vmatprep.subr.mxu0 0.0
      %4158 = vmatpush1.msra.mxu0 0.0
      %4159 = vmatprep.mubr.f32.mxu0 0.0
      %4160 = vmatmul.mubr.f32.gmra.mrb[0].mxu0 %v4087
      %v4161 = vpop.f32.mrb[0].mxu0
      %v4162 = vadd.f32 %v3490, %v4161
      %v4163 = vpop.f32.mrb[0].mxu0
      %4164 = vmatprep.mubr.f32.mxu0 0.0
      %4165 = vmatmul.mubr.f32.gmra.mrb[0].mxu0 %v4090
      %v4166 = vpop.f32.mrb[0].mxu0
      %v4167 = vadd.f32 %v3495, %v4166
      %v4168 = vpop.f32.mrb[0].mxu0
      %4169 = vdwg.mxu0
      %v4171 = vsel %vm2992, %v2940, 0
      %v4174 = vsel %vm2992, %v2941, 0
      %v4177 = vsel %vm2999, %v389, 0
      %4179 = vmatprep.subr.mxu0 0.0
      %4180 = vmatpush1.msra.mxu0 %v4177
      %4181 = vmatprep.subr.mxu0 0.0
      %4182 = vmatpush1.msra.mxu0 0.0
      %4183 = vmatprep.subr.mxu0 0.0
      %4184 = vmatpush1.msra.mxu0 0.0
      %4185 = vmatprep.subr.mxu0 0.0
      %4186 = vmatpush1.msra.mxu0 0.0
      %4187 = vmatprep.subr.mxu0 0.0
      %4188 = vmatpush1.msra.mxu0 0.0
      %4189 = vmatprep.subr.mxu0 0.0
      %4190 = vmatpush1.msra.mxu0 0.0
      %4191 = vmatprep.subr.mxu0 0.0
      %4192 = vmatpush1.msra.mxu0 0.0
      %4193 = vmatprep.subr.mxu0 0.0
      %4194 = vmatpush1.msra.mxu0 0.0
      %4195 = vmatprep.subr.mxu0 0.0
      %4196 = vmatpush1.msra.mxu0 0.0
      %4197 = vmatprep.subr.mxu0 0.0
      %4198 = vmatpush1.msra.mxu0 0.0
      %4199 = vmatprep.subr.mxu0 0.0
      %4200 = vmatpush1.msra.mxu0 0.0
      %4201 = vmatprep.subr.mxu0 0.0
      %4202 = vmatpush1.msra.mxu0 0.0
      %4203 = vmatprep.subr.mxu0 0.0
      %4204 = vmatpush1.msra.mxu0 0.0
      %4205 = vmatprep.subr.mxu0 0.0
      %4206 = vmatpush1.msra.mxu0 0.0
      %4207 = vmatprep.subr.mxu0 0.0
      %4208 = vmatpush1.msra.mxu0 0.0
      %4209 = vmatprep.subr.mxu0 0.0
      %4210 = vmatpush1.msra.mxu0 0.0
      %4211 = vmatprep.subr.mxu0 0.0
      %4212 = vmatpush1.msra.mxu0 0.0
      %4213 = vmatprep.subr.mxu0 0.0
      %4214 = vmatpush1.msra.mxu0 0.0
      %4215 = vmatprep.subr.mxu0 0.0
      %4216 = vmatpush1.msra.mxu0 0.0
      %4217 = vmatprep.subr.mxu0 0.0
      %4218 = vmatpush1.msra.mxu0 0.0
      %4219 = vmatprep.subr.mxu0 0.0
      %4220 = vmatpush1.msra.mxu0 0.0
      %4221 = vmatprep.subr.mxu0 0.0
      %4222 = vmatpush1.msra.mxu0 0.0
      %4223 = vmatprep.subr.mxu0 0.0
      %4224 = vmatpush1.msra.mxu0 0.0
      %4225 = vmatprep.subr.mxu0 0.0
      %4226 = vmatpush1.msra.mxu0 0.0
      %4227 = vmatprep.subr.mxu0 0.0
      %4228 = vmatpush1.msra.mxu0 0.0
      %4229 = vmatprep.subr.mxu0 0.0
      %4230 = vmatpush1.msra.mxu0 0.0
      %4231 = vmatprep.subr.mxu0 0.0
      %4232 = vmatpush1.msra.mxu0 0.0
      %4233 = vmatprep.subr.mxu0 0.0
      %4234 = vmatpush1.msra.mxu0 0.0
      %4235 = vmatprep.subr.mxu0 0.0
      %4236 = vmatpush1.msra.mxu0 0.0
      %4237 = vmatprep.subr.mxu0 0.0
      %4238 = vmatpush1.msra.mxu0 0.0
      %4239 = vmatprep.subr.mxu0 0.0
      %4240 = vmatpush1.msra.mxu0 0.0
      %4241 = vmatprep.subr.mxu0 0.0
      %4242 = vmatpush1.msra.mxu0 0.0
      %4243 = vmatprep.mubr.f32.mxu0 0.0
      %4244 = vmatmul.mubr.f32.gmra.mrb[0].mxu0 %v4171
      %v4245 = vpop.f32.mrb[0].mxu0
      %v4246 = vadd.f32 %v3574, %v4245
      %v4247 = vpop.f32.mrb[0].mxu0
      %4248 = vmatprep.mubr.f32.mxu0 0.0
      %4249 = vmatmul.mubr.f32.gmra.mrb[0].mxu0 %v4174
      %v4250 = vpop.f32.mrb[0].mxu0
      %v4251 = vadd.f32 %v3579, %v4250
      %v4252 = vpop.f32.mrb[0].mxu0
      %4253 = vdwg.mxu0
      %v4255 = vsel %vm2992, %v2942, 0
      %v4258 = vsel %vm2992, %v2943, 0
      %v4261 = vsel %vm2999, %v390, 0
      %4263 = vmatprep.subr.mxu0 0.0
      %4264 = vmatpush1.msra.mxu0 %v4261
      %4265 = vmatprep.subr.mxu0 0.0
      %4266 = vmatpush1.msra.mxu0 0.0
      %4267 = vmatprep.subr.mxu0 0.0
      %4268 = vmatpush1.msra.mxu0 0.0
      %4269 = vmatprep.subr.mxu0 0.0
      %4270 = vmatpush1.msra.mxu0 0.0
      %4271 = vmatprep.subr.mxu0 0.0
      %4272 = vmatpush1.msra.mxu0 0.0
      %4273 = vmatprep.subr.mxu0 0.0
      %4274 = vmatpush1.msra.mxu0 0.0
      %4275 = vmatprep.subr.mxu0 0.0
      %4276 = vmatpush1.msra.mxu0 0.0
      %4277 = vmatprep.subr.mxu0 0.0
      %4278 = vmatpush1.msra.mxu0 0.0
      %4279 = vmatprep.subr.mxu0 0.0
      %4280 = vmatpush1.msra.mxu0 0.0
      %4281 = vmatprep.subr.mxu0 0.0
      %4282 = vmatpush1.msra.mxu0 0.0
      %4283 = vmatprep.subr.mxu0 0.0
      %4284 = vmatpush1.msra.mxu0 0.0
      %4285 = vmatprep.subr.mxu0 0.0
      %4286 = vmatpush1.msra.mxu0 0.0
      %4287 = vmatprep.subr.mxu0 0.0
      %4288 = vmatpush1.msra.mxu0 0.0
      %4289 = vmatprep.subr.mxu0 0.0
      %4290 = vmatpush1.msra.mxu0 0.0
      %4291 = vmatprep.subr.mxu0 0.0
      %4292 = vmatpush1.msra.mxu0 0.0
      %4293 = vmatprep.subr.mxu0 0.0
      %4294 = vmatpush1.msra.mxu0 0.0
      %4295 = vmatprep.subr.mxu0 0.0
      %4296 = vmatpush1.msra.mxu0 0.0
      %4297 = vmatprep.subr.mxu0 0.0
      %4298 = vmatpush1.msra.mxu0 0.0
      %4299 = vmatprep.subr.mxu0 0.0
      %4300 = vmatpush1.msra.mxu0 0.0
      %4301 = vmatprep.subr.mxu0 0.0
      %4302 = vmatpush1.msra.mxu0 0.0
      %4303 = vmatprep.subr.mxu0 0.0
      %4304 = vmatpush1.msra.mxu0 0.0
      %4305 = vmatprep.subr.mxu0 0.0
      %4306 = vmatpush1.msra.mxu0 0.0
      %4307 = vmatprep.subr.mxu0 0.0
      %4308 = vmatpush1.msra.mxu0 0.0
      %4309 = vmatprep.subr.mxu0 0.0
      %4310 = vmatpush1.msra.mxu0 0.0
      %4311 = vmatprep.subr.mxu0 0.0
      %4312 = vmatpush1.msra.mxu0 0.0
      %4313 = vmatprep.subr.mxu0 0.0
      %4314 = vmatpush1.msra.mxu0 0.0
      %4315 = vmatprep.subr.mxu0 0.0
      %4316 = vmatpush1.msra.mxu0 0.0
      %4317 = vmatprep.subr.mxu0 0.0
      %4318 = vmatpush1.msra.mxu0 0.0
      %4319 = vmatprep.subr.mxu0 0.0
      %4320 = vmatpush1.msra.mxu0 0.0
      %4321 = vmatprep.subr.mxu0 0.0
      %4322 = vmatpush1.msra.mxu0 0.0
      %4323 = vmatprep.subr.mxu0 0.0
      %4324 = vmatpush1.msra.mxu0 0.0
      %4325 = vmatprep.subr.mxu0 0.0
      %4326 = vmatpush1.msra.mxu0 0.0
      %4327 = vmatprep.mubr.f32.mxu0 0.0
      %4328 = vmatmul.mubr.f32.gmra.mrb[0].mxu0 %v4255
      %v4329 = vpop.f32.mrb[0].mxu0
      %v4330 = vadd.f32 %v3658, %v4329
      %v4331 = vpop.f32.mrb[0].mxu0
      %4332 = vmatprep.mubr.f32.mxu0 0.0
      %4333 = vmatmul.mubr.f32.gmra.mrb[0].mxu0 %v4258
      %v4334 = vpop.f32.mrb[0].mxu0
      %v4335 = vadd.f32 %v3663, %v4334
      %v4336 = vpop.f32.mrb[0].mxu0
      %4337 = vdwg.mxu0
      %vm4338 = vcmask 130048
      %v4339 = vsel %vm4338, %v3742, 0.0
      %v4340 = vsel %vm4338, %v3826, 0.0
      %v4341 = vadd.f32 %v4339, %v4340
      %v4342 = vsel %vm4338, %v3910, 0.0
      %v4343 = vadd.f32 %v4341, %v4342
      %v4344 = vsel %vm4338, %v3994, 0.0
      %v4345 = vadd.f32 %v4343, %v4344
      %v4346 = vsel %vm4338, %v4078, 0.0
      %v4347 = vadd.f32 %v4345, %v4346
      %v4348 = vsel %vm4338, %v4162, 0.0
      %v4349 = vadd.f32 %v4347, %v4348
      %v4350 = vsel %vm4338, %v4246, 0.0
      %v4351 = vadd.f32 %v4349, %v4350
      %v4352 = vsel %vm4338, %v4330, 0.0
      %v4353 = vadd.f32 %v4351, %v4352
      %v4354 = vsel %vm4338, %v3747, 0.0
      %v4355 = vsel %vm4338, %v3831, 0.0
      %v4356 = vadd.f32 %v4354, %v4355
      %v4357 = vsel %vm4338, %v3915, 0.0
      %v4358 = vadd.f32 %v4356, %v4357
      %v4359 = vsel %vm4338, %v3999, 0.0
      %v4360 = vadd.f32 %v4358, %v4359
      %v4361 = vsel %vm4338, %v4083, 0.0
      %v4362 = vadd.f32 %v4360, %v4361
      %v4363 = vsel %vm4338, %v4167, 0.0
      %v4364 = vadd.f32 %v4362, %v4363
      %v4365 = vsel %vm4338, %v4251, 0.0
      %v4366 = vadd.f32 %v4364, %v4365
      %v4367 = vsel %vm4338, %v4335, 0.0
      %v4368 = vadd.f32 %v4366, %v4367
      %v4369 = vrcp.pop 8.0
      %v4370 = vmul.f32 %v4353, %v4369
      %v4371 = vmul.f32 %v4368, %v4369
      %v4372 = vsub.f32 %v3742, %v4370
      %v4373 = vsub.f32 %v3747, %v4371
      %v4374 = vsub.f32 %v3826, %v4370
      %v4375 = vsub.f32 %v3831, %v4371
      %v4376 = vsub.f32 %v3910, %v4370
      %v4377 = vsub.f32 %v3915, %v4371
      %v4378 = vsub.f32 %v3994, %v4370
      %v4379 = vsub.f32 %v3999, %v4371
      %v4380 = vsub.f32 %v4078, %v4370
      %v4381 = vsub.f32 %v4083, %v4371
      %v4382 = vsub.f32 %v4162, %v4370
      %v4383 = vsub.f32 %v4167, %v4371
      %v4384 = vsub.f32 %v4246, %v4370
      %v4385 = vsub.f32 %v4251, %v4371
      %v4386 = vsub.f32 %v4330, %v4370
      %v4387 = vsub.f32 %v4335, %v4371
      %v4388 = vsel %vm4338, %v4372, -inf
      %4389 = vmax.xlane.f32.xlu0 %v4388
      %v4390 = vpop.xlane.xlu0 %4389
      %v4391 = vsel %vm4338, %v4373, -inf
      %4392 = vmax.xlane.f32.xlu0 %v4391
      %v4393 = vpop.xlane.xlu0 %4392
      %v4394 = vsel %vm4338, %v4374, -inf
      %4395 = vmax.xlane.f32.xlu0 %v4394
      %v4396 = vpop.xlane.xlu0 %4395
      %v4397 = vsel %vm4338, %v4375, -inf
      %4398 = vmax.xlane.f32.xlu0 %v4397
      %v4399 = vpop.xlane.xlu0 %4398
      %v4400 = vsel %vm4338, %v4376, -inf
      %4401 = vmax.xlane.f32.xlu0 %v4400
      %v4402 = vpop.xlane.xlu0 %4401
      %v4403 = vsel %vm4338, %v4377, -inf
      %4404 = vmax.xlane.f32.xlu0 %v4403
      %v4405 = vpop.xlane.xlu0 %4404
      %v4406 = vsel %vm4338, %v4378, -inf
      %4407 = vmax.xlane.f32.xlu0 %v4406
      %v4408 = vpop.xlane.xlu0 %4407
      %v4409 = vsel %vm4338, %v4379, -inf
      %4410 = vmax.xlane.f32.xlu0 %v4409
      %v4411 = vpop.xlane.xlu0 %4410
      %v4412 = vsel %vm4338, %v4380, -inf
      %4413 = vmax.xlane.f32.xlu0 %v4412
      %v4414 = vpop.xlane.xlu0 %4413
      %v4415 = vsel %vm4338, %v4381, -inf
      %4416 = vmax.xlane.f32.xlu0 %v4415
      %v4417 = vpop.xlane.xlu0 %4416
      %v4418 = vsel %vm4338, %v4382, -inf
      %4419 = vmax.xlane.f32.xlu0 %v4418
      %v4420 = vpop.xlane.xlu0 %4419
      %v4421 = vsel %vm4338, %v4383, -inf
      %4422 = vmax.xlane.f32.xlu0 %v4421
      %v4423 = vpop.xlane.xlu0 %4422
      %v4424 = vsel %vm4338, %v4384, -inf
      %4425 = vmax.xlane.f32.xlu0 %v4424
      %v4426 = vpop.xlane.xlu0 %4425
      %v4427 = vsel %vm4338, %v4385, -inf
      %4428 = vmax.xlane.f32.xlu0 %v4427
      %v4429 = vpop.xlane.xlu0 %4428
      %v4430 = vsel %vm4338, %v4386, -inf
      %4431 = vmax.xlane.f32.xlu0 %v4430
      %v4432 = vpop.xlane.xlu0 %4431
      %v4433 = vsel %vm4338, %v4387, -inf
      %4434 = vmax.xlane.f32.xlu0 %v4433
      %v4435 = vpop.xlane.xlu0 %4434
      %v4436 = vsub.f32 %v4372, %v4390
      %v4437 = vsub.f32 %v4373, %v4393
      %v4438 = vsub.f32 %v4374, %v4396
      %v4439 = vsub.f32 %v4375, %v4399
      %v4440 = vsub.f32 %v4376, %v4402
      %v4441 = vsub.f32 %v4377, %v4405
      %v4442 = vsub.f32 %v4378, %v4408
      %v4443 = vsub.f32 %v4379, %v4411
      %v4444 = vsub.f32 %v4380, %v4414
      %v4445 = vsub.f32 %v4381, %v4417
      %v4446 = vsub.f32 %v4382, %v4420
      %v4447 = vsub.f32 %v4383, %v4423
      %v4448 = vsub.f32 %v4384, %v4426
      %v4449 = vsub.f32 %v4385, %v4429
      %v4450 = vsub.f32 %v4386, %v4432
      %v4451 = vsub.f32 %v4387, %v4435
      %v4452 = vmul.f32 %v4436, 1.442695
      %v4453 = vpow.pop %v4452
      %v4454 = vmul.f32 %v4437, 1.442695
      %v4455 = vpow.pop %v4454
      %v4456 = vmul.f32 %v4438, 1.442695
      %v4457 = vpow.pop %v4456
      %v4458 = vmul.f32 %v4439, 1.442695
      %v4459 = vpow.pop %v4458
      %v4460 = vmul.f32 %v4440, 1.442695
      %v4461 = vpow.pop %v4460
      %v4462 = vmul.f32 %v4441, 1.442695
      %v4463 = vpow.pop %v4462
      %v4464 = vmul.f32 %v4442, 1.442695
      %v4465 = vpow.pop %v4464
      %v4466 = vmul.f32 %v4443, 1.442695
      %v4467 = vpow.pop %v4466
      %v4468 = vmul.f32 %v4444, 1.442695
      %v4469 = vpow.pop %v4468
      %v4470 = vmul.f32 %v4445, 1.442695
      %v4471 = vpow.pop %v4470
      %v4472 = vmul.f32 %v4446, 1.442695
      %v4473 = vpow.pop %v4472
      %v4474 = vmul.f32 %v4447, 1.442695
      %v4475 = vpow.pop %v4474
      %v4476 = vmul.f32 %v4448, 1.442695
      %v4477 = vpow.pop %v4476
      %v4478 = vmul.f32 %v4449, 1.442695
      %v4479 = vpow.pop %v4478
      %v4480 = vmul.f32 %v4450, 1.442695
      %v4481 = vpow.pop %v4480
      %v4482 = vmul.f32 %v4451, 1.442695
      %v4483 = vpow.pop %v4482
      %v4484 = vsel %vm4338, %v4453, 0.0
      %4485 = vadd.xlane.f32.xlu0 %v4484
      %v4486 = vpop.xlane.xlu0 %4485
      %v4487 = vsel %vm4338, %v4455, 0.0
      %4488 = vadd.xlane.f32.xlu0 %v4487
      %v4489 = vpop.xlane.xlu0 %4488
      %v4490 = vsel %vm4338, %v4457, 0.0
      %4491 = vadd.xlane.f32.xlu0 %v4490
      %v4492 = vpop.xlane.xlu0 %4491
      %v4493 = vsel %vm4338, %v4459, 0.0
      %4494 = vadd.xlane.f32.xlu0 %v4493
      %v4495 = vpop.xlane.xlu0 %4494
      %v4496 = vsel %vm4338, %v4461, 0.0
      %4497 = vadd.xlane.f32.xlu0 %v4496
      %v4498 = vpop.xlane.xlu0 %4497
      %v4499 = vsel %vm4338, %v4463, 0.0
      %4500 = vadd.xlane.f32.xlu0 %v4499
      %v4501 = vpop.xlane.xlu0 %4500
      %v4502 = vsel %vm4338, %v4465, 0.0
      %4503 = vadd.xlane.f32.xlu0 %v4502
      %v4504 = vpop.xlane.xlu0 %4503
      %v4505 = vsel %vm4338, %v4467, 0.0
      %4506 = vadd.xlane.f32.xlu0 %v4505
      %v4507 = vpop.xlane.xlu0 %4506
      %v4508 = vsel %vm4338, %v4469, 0.0
      %4509 = vadd.xlane.f32.xlu0 %v4508
      %v4510 = vpop.xlane.xlu0 %4509
      %v4511 = vsel %vm4338, %v4471, 0.0
      %4512 = vadd.xlane.f32.xlu0 %v4511
      %v4513 = vpop.xlane.xlu0 %4512
      %v4514 = vsel %vm4338, %v4473, 0.0
      %4515 = vadd.xlane.f32.xlu0 %v4514
      %v4516 = vpop.xlane.xlu0 %4515
      %v4517 = vsel %vm4338, %v4475, 0.0
      %4518 = vadd.xlane.f32.xlu0 %v4517
      %v4519 = vpop.xlane.xlu0 %4518
      %v4520 = vsel %vm4338, %v4477, 0.0
      %4521 = vadd.xlane.f32.xlu0 %v4520
      %v4522 = vpop.xlane.xlu0 %4521
      %v4523 = vsel %vm4338, %v4479, 0.0
      %4524 = vadd.xlane.f32.xlu0 %v4523
      %v4525 = vpop.xlane.xlu0 %4524
      %v4526 = vsel %vm4338, %v4481, 0.0
      %4527 = vadd.xlane.f32.xlu0 %v4526
      %v4528 = vpop.xlane.xlu0 %4527
      %v4529 = vsel %vm4338, %v4483, 0.0
      %4530 = vadd.xlane.f32.xlu0 %v4529
      %v4531 = vpop.xlane.xlu0 %4530
      %v4532 = vrcp.pop %v4486
      %v4533 = vmul.f32 %v4453, %v4532
      %v4534 = vrcp.pop %v4489
      %v4535 = vmul.f32 %v4455, %v4534
      %v4536 = vrcp.pop %v4492
      %v4537 = vmul.f32 %v4457, %v4536
      %v4538 = vrcp.pop %v4495
      %v4539 = vmul.f32 %v4459, %v4538
      %v4540 = vrcp.pop %v4498
      %v4541 = vmul.f32 %v4461, %v4540
      %v4542 = vrcp.pop %v4501
      %v4543 = vmul.f32 %v4463, %v4542
      %v4544 = vrcp.pop %v4504
      %v4545 = vmul.f32 %v4465, %v4544
      %v4546 = vrcp.pop %v4507
      %v4547 = vmul.f32 %v4467, %v4546
      %v4548 = vrcp.pop %v4510
      %v4549 = vmul.f32 %v4469, %v4548
      %v4550 = vrcp.pop %v4513
      %v4551 = vmul.f32 %v4471, %v4550
      %v4552 = vrcp.pop %v4516
      %v4553 = vmul.f32 %v4473, %v4552
      %v4554 = vrcp.pop %v4519
      %v4555 = vmul.f32 %v4475, %v4554
      %v4556 = vrcp.pop %v4522
      %v4557 = vmul.f32 %v4477, %v4556
      %v4558 = vrcp.pop %v4525
      %v4559 = vmul.f32 %v4479, %v4558
      %v4560 = vrcp.pop %v4528
      %v4561 = vmul.f32 %v4481, %v4560
      %v4562 = vrcp.pop %v4531
      %v4563 = vmul.f32 %v4483, %v4562
      %4564 = vxpose.xlu0.b32.start [1/16] %v4533, 128
      %4565 = vxpose.xlu0.b32.cont [2/16] %v4535, 128
      %4566 = vxpose.xlu0.b32.cont [3/16] 0.0, 128
      %4567 = vxpose.xlu0.b32.cont [4/16] 0.0, 128
      %4568 = vxpose.xlu0.b32.cont [5/16] 0.0, 128
      %4569 = vxpose.xlu0.b32.cont [6/16] 0.0, 128
      %4570 = vxpose.xlu0.b32.cont [7/16] 0.0, 128
      %4571 = vxpose.xlu0.b32.cont [8/16] 0.0, 128
      %4572 = vxpose.xlu0.b32.cont [9/16] 0.0, 128
      %4573 = vxpose.xlu0.b32.cont [10/16] 0.0, 128
      %4574 = vxpose.xlu0.b32.cont [11/16] 0.0, 128
      %4575 = vxpose.xlu0.b32.cont [12/16] 0.0, 128
      %4576 = vxpose.xlu0.b32.cont [13/16] 0.0, 128
      %4577 = vxpose.xlu0.b32.cont [14/16] 0.0, 128
      %4578 = vxpose.xlu0.b32.cont [15/16] 0.0, 128
      %4579 = vxpose.xlu0.b32.end [16/16] 0.0, 128
      %v4580 = vpop.trf.xlu0
      %v4581 = vpop.trf.xlu0
      %v4582 = vpop.trf.xlu0
      %v4583 = vpop.trf.xlu0
      %v4584 = vpop.trf.xlu0
      %v4585 = vpop.trf.xlu0
      %v4586 = vpop.trf.xlu0
      %v4587 = vpop.trf.xlu0
      %v4588 = vpop.trf.xlu0
      %v4589 = vpop.trf.xlu0
      %v4590 = vpop.trf.xlu0
      %v4591 = vpop.trf.xlu0
      %v4592 = vpop.trf.xlu0
      %v4593 = vpop.trf.xlu0
      %v4594 = vpop.trf.xlu0
      %v4595 = vpop.trf.xlu0
      %4596 = vxpose.xlu0.b32.start [1/16] %v4537, 128
      %4597 = vxpose.xlu0.b32.cont [2/16] %v4539, 128
      %4598 = vxpose.xlu0.b32.cont [3/16] 0.0, 128
      %4599 = vxpose.xlu0.b32.cont [4/16] 0.0, 128
      %4600 = vxpose.xlu0.b32.cont [5/16] 0.0, 128
      %4601 = vxpose.xlu0.b32.cont [6/16] 0.0, 128
      %4602 = vxpose.xlu0.b32.cont [7/16] 0.0, 128
      %4603 = vxpose.xlu0.b32.cont [8/16] 0.0, 128
      %4604 = vxpose.xlu0.b32.cont [9/16] 0.0, 128
      %4605 = vxpose.xlu0.b32.cont [10/16] 0.0, 128
      %4606 = vxpose.xlu0.b32.cont [11/16] 0.0, 128
      %4607 = vxpose.xlu0.b32.cont [12/16] 0.0, 128
      %4608 = vxpose.xlu0.b32.cont [13/16] 0.0, 128
      %4609 = vxpose.xlu0.b32.cont [14/16] 0.0, 128
      %4610 = vxpose.xlu0.b32.cont [15/16] 0.0, 128
      %4611 = vxpose.xlu0.b32.end [16/16] 0.0, 128
      %v4612 = vpop.trf.xlu0
      %v4613 = vpop.trf.xlu0
      %v4614 = vpop.trf.xlu0
      %v4615 = vpop.trf.xlu0
      %v4616 = vpop.trf.xlu0
      %v4617 = vpop.trf.xlu0
      %v4618 = vpop.trf.xlu0
      %v4619 = vpop.trf.xlu0
      %v4620 = vpop.trf.xlu0
      %v4621 = vpop.trf.xlu0
      %v4622 = vpop.trf.xlu0
      %v4623 = vpop.trf.xlu0
      %v4624 = vpop.trf.xlu0
      %v4625 = vpop.trf.xlu0
      %v4626 = vpop.trf.xlu0
      %v4627 = vpop.trf.xlu0
      %4628 = vxpose.xlu0.b32.start [1/16] %v4541, 128
      %4629 = vxpose.xlu0.b32.cont [2/16] %v4543, 128
      %4630 = vxpose.xlu0.b32.cont [3/16] 0.0, 128
      %4631 = vxpose.xlu0.b32.cont [4/16] 0.0, 128
      %4632 = vxpose.xlu0.b32.cont [5/16] 0.0, 128
      %4633 = vxpose.xlu0.b32.cont [6/16] 0.0, 128
      %4634 = vxpose.xlu0.b32.cont [7/16] 0.0, 128
      %4635 = vxpose.xlu0.b32.cont [8/16] 0.0, 128
      %4636 = vxpose.xlu0.b32.cont [9/16] 0.0, 128
      %4637 = vxpose.xlu0.b32.cont [10/16] 0.0, 128
      %4638 = vxpose.xlu0.b32.cont [11/16] 0.0, 128
      %4639 = vxpose.xlu0.b32.cont [12/16] 0.0, 128
      %4640 = vxpose.xlu0.b32.cont [13/16] 0.0, 128
      %4641 = vxpose.xlu0.b32.cont [14/16] 0.0, 128
      %4642 = vxpose.xlu0.b32.cont [15/16] 0.0, 128
      %4643 = vxpose.xlu0.b32.end [16/16] 0.0, 128
      %v4644 = vpop.trf.xlu0
      %v4645 = vpop.trf.xlu0
      %v4646 = vpop.trf.xlu0
      %v4647 = vpop.trf.xlu0
      %v4648 = vpop.trf.xlu0
      %v4649 = vpop.trf.xlu0
      %v4650 = vpop.trf.xlu0
      %v4651 = vpop.trf.xlu0
      %v4652 = vpop.trf.xlu0
      %v4653 = vpop.trf.xlu0
      %v4654 = vpop.trf.xlu0
      %v4655 = vpop.trf.xlu0
      %v4656 = vpop.trf.xlu0
      %v4657 = vpop.trf.xlu0
      %v4658 = vpop.trf.xlu0
      %v4659 = vpop.trf.xlu0
      %4660 = vxpose.xlu0.b32.start [1/16] %v4545, 128
      %4661 = vxpose.xlu0.b32.cont [2/16] %v4547, 128
      %4662 = vxpose.xlu0.b32.cont [3/16] 0.0, 128
      %4663 = vxpose.xlu0.b32.cont [4/16] 0.0, 128
      %4664 = vxpose.xlu0.b32.cont [5/16] 0.0, 128
      %4665 = vxpose.xlu0.b32.cont [6/16] 0.0, 128
      %4666 = vxpose.xlu0.b32.cont [7/16] 0.0, 128
      %4667 = vxpose.xlu0.b32.cont [8/16] 0.0, 128
      %4668 = vxpose.xlu0.b32.cont [9/16] 0.0, 128
      %4669 = vxpose.xlu0.b32.cont [10/16] 0.0, 128
      %4670 = vxpose.xlu0.b32.cont [11/16] 0.0, 128
      %4671 = vxpose.xlu0.b32.cont [12/16] 0.0, 128
      %4672 = vxpose.xlu0.b32.cont [13/16] 0.0, 128
      %4673 = vxpose.xlu0.b32.cont [14/16] 0.0, 128
      %4674 = vxpose.xlu0.b32.cont [15/16] 0.0, 128
      %4675 = vxpose.xlu0.b32.end [16/16] 0.0, 128
      %v4676 = vpop.trf.xlu0
      %v4677 = vpop.trf.xlu0
      %v4678 = vpop.trf.xlu0
      %v4679 = vpop.trf.xlu0
      %v4680 = vpop.trf.xlu0
      %v4681 = vpop.trf.xlu0
      %v4682 = vpop.trf.xlu0
      %v4683 = vpop.trf.xlu0
      %v4684 = vpop.trf.xlu0
      %v4685 = vpop.trf.xlu0
      %v4686 = vpop.trf.xlu0
      %v4687 = vpop.trf.xlu0
      %v4688 = vpop.trf.xlu0
      %v4689 = vpop.trf.xlu0
      %v4690 = vpop.trf.xlu0
      %v4691 = vpop.trf.xlu0
      %4692 = vxpose.xlu0.b32.start [1/16] %v4549, 128
      %4693 = vxpose.xlu0.b32.cont [2/16] %v4551, 128
      %4694 = vxpose.xlu0.b32.cont [3/16] 0.0, 128
      %4695 = vxpose.xlu0.b32.cont [4/16] 0.0, 128
      %4696 = vxpose.xlu0.b32.cont [5/16] 0.0, 128
      %4697 = vxpose.xlu0.b32.cont [6/16] 0.0, 128
      %4698 = vxpose.xlu0.b32.cont [7/16] 0.0, 128
      %4699 = vxpose.xlu0.b32.cont [8/16] 0.0, 128
      %4700 = vxpose.xlu0.b32.cont [9/16] 0.0, 128
      %4701 = vxpose.xlu0.b32.cont [10/16] 0.0, 128
      %4702 = vxpose.xlu0.b32.cont [11/16] 0.0, 128
      %4703 = vxpose.xlu0.b32.cont [12/16] 0.0, 128
      %4704 = vxpose.xlu0.b32.cont [13/16] 0.0, 128
      %4705 = vxpose.xlu0.b32.cont [14/16] 0.0, 128
      %4706 = vxpose.xlu0.b32.cont [15/16] 0.0, 128
      %4707 = vxpose.xlu0.b32.end [16/16] 0.0, 128
      %v4708 = vpop.trf.xlu0
      %v4709 = vpop.trf.xlu0
      %v4710 = vpop.trf.xlu0
      %v4711 = vpop.trf.xlu0
      %v4712 = vpop.trf.xlu0
      %v4713 = vpop.trf.xlu0
      %v4714 = vpop.trf.xlu0
      %v4715 = vpop.trf.xlu0
      %v4716 = vpop.trf.xlu0
      %v4717 = vpop.trf.xlu0
      %v4718 = vpop.trf.xlu0
      %v4719 = vpop.trf.xlu0
      %v4720 = vpop.trf.xlu0
      %v4721 = vpop.trf.xlu0
      %v4722 = vpop.trf.xlu0
      %v4723 = vpop.trf.xlu0
      %4724 = vxpose.xlu0.b32.start [1/16] %v4553, 128
      %4725 = vxpose.xlu0.b32.cont [2/16] %v4555, 128
      %4726 = vxpose.xlu0.b32.cont [3/16] 0.0, 128
      %4727 = vxpose.xlu0.b32.cont [4/16] 0.0, 128
      %4728 = vxpose.xlu0.b32.cont [5/16] 0.0, 128
      %4729 = vxpose.xlu0.b32.cont [6/16] 0.0, 128
      %4730 = vxpose.xlu0.b32.cont [7/16] 0.0, 128
      %4731 = vxpose.xlu0.b32.cont [8/16] 0.0, 128
      %4732 = vxpose.xlu0.b32.cont [9/16] 0.0, 128
      %4733 = vxpose.xlu0.b32.cont [10/16] 0.0, 128
      %4734 = vxpose.xlu0.b32.cont [11/16] 0.0, 128
      %4735 = vxpose.xlu0.b32.cont [12/16] 0.0, 128
      %4736 = vxpose.xlu0.b32.cont [13/16] 0.0, 128
      %4737 = vxpose.xlu0.b32.cont [14/16] 0.0, 128
      %4738 = vxpose.xlu0.b32.cont [15/16] 0.0, 128
      %4739 = vxpose.xlu0.b32.end [16/16] 0.0, 128
      %v4740 = vpop.trf.xlu0
      %v4741 = vpop.trf.xlu0
      %v4742 = vpop.trf.xlu0
      %v4743 = vpop.trf.xlu0
      %v4744 = vpop.trf.xlu0
      %v4745 = vpop.trf.xlu0
      %v4746 = vpop.trf.xlu0
      %v4747 = vpop.trf.xlu0
      %v4748 = vpop.trf.xlu0
      %v4749 = vpop.trf.xlu0
      %v4750 = vpop.trf.xlu0
      %v4751 = vpop.trf.xlu0
      %v4752 = vpop.trf.xlu0
      %v4753 = vpop.trf.xlu0
      %v4754 = vpop.trf.xlu0
      %v4755 = vpop.trf.xlu0
      %4756 = vxpose.xlu0.b32.start [1/16] %v4557, 128
      %4757 = vxpose.xlu0.b32.cont [2/16] %v4559, 128
      %4758 = vxpose.xlu0.b32.cont [3/16] 0.0, 128
      %4759 = vxpose.xlu0.b32.cont [4/16] 0.0, 128
      %4760 = vxpose.xlu0.b32.cont [5/16] 0.0, 128
      %4761 = vxpose.xlu0.b32.cont [6/16] 0.0, 128
      %4762 = vxpose.xlu0.b32.cont [7/16] 0.0, 128
      %4763 = vxpose.xlu0.b32.cont [8/16] 0.0, 128
      %4764 = vxpose.xlu0.b32.cont [9/16] 0.0, 128
      %4765 = vxpose.xlu0.b32.cont [10/16] 0.0, 128
      %4766 = vxpose.xlu0.b32.cont [11/16] 0.0, 128
      %4767 = vxpose.xlu0.b32.cont [12/16] 0.0, 128
      %4768 = vxpose.xlu0.b32.cont [13/16] 0.0, 128
      %4769 = vxpose.xlu0.b32.cont [14/16] 0.0, 128
      %4770 = vxpose.xlu0.b32.cont [15/16] 0.0, 128
      %4771 = vxpose.xlu0.b32.end [16/16] 0.0, 128
      %v4772 = vpop.trf.xlu0
      %v4773 = vpop.trf.xlu0
      %v4774 = vpop.trf.xlu0
      %v4775 = vpop.trf.xlu0
      %v4776 = vpop.trf.xlu0
      %v4777 = vpop.trf.xlu0
      %v4778 = vpop.trf.xlu0
      %v4779 = vpop.trf.xlu0
      %v4780 = vpop.trf.xlu0
      %v4781 = vpop.trf.xlu0
      %v4782 = vpop.trf.xlu0
      %v4783 = vpop.trf.xlu0
      %v4784 = vpop.trf.xlu0
      %v4785 = vpop.trf.xlu0
      %v4786 = vpop.trf.xlu0
      %v4787 = vpop.trf.xlu0
      %4788 = vxpose.xlu0.b32.start [1/16] %v4561, 128
      %4789 = vxpose.xlu0.b32.cont [2/16] %v4563, 128
      %4790 = vxpose.xlu0.b32.cont [3/16] 0.0, 128
      %4791 = vxpose.xlu0.b32.cont [4/16] 0.0, 128
      %4792 = vxpose.xlu0.b32.cont [5/16] 0.0, 128
      %4793 = vxpose.xlu0.b32.cont [6/16] 0.0, 128
      %4794 = vxpose.xlu0.b32.cont [7/16] 0.0, 128
      %4795 = vxpose.xlu0.b32.cont [8/16] 0.0, 128
      %4796 = vxpose.xlu0.b32.cont [9/16] 0.0, 128
      %4797 = vxpose.xlu0.b32.cont [10/16] 0.0, 128
      %4798 = vxpose.xlu0.b32.cont [11/16] 0.0, 128
      %4799 = vxpose.xlu0.b32.cont [12/16] 0.0, 128
      %4800 = vxpose.xlu0.b32.cont [13/16] 0.0, 128
      %4801 = vxpose.xlu0.b32.cont [14/16] 0.0, 128
      %4802 = vxpose.xlu0.b32.cont [15/16] 0.0, 128
      %4803 = vxpose.xlu0.b32.end [16/16] 0.0, 128
      %v4804 = vpop.trf.xlu0
      %v4805 = vpop.trf.xlu0
      %v4806 = vpop.trf.xlu0
      %v4807 = vpop.trf.xlu0
      %v4808 = vpop.trf.xlu0
      %v4809 = vpop.trf.xlu0
      %v4810 = vpop.trf.xlu0
      %v4811 = vpop.trf.xlu0
      %v4812 = vpop.trf.xlu0
      %v4813 = vpop.trf.xlu0
      %v4814 = vpop.trf.xlu0
      %v4815 = vpop.trf.xlu0
      %v4816 = vpop.trf.xlu0
      %v4817 = vpop.trf.xlu0
      %v4818 = vpop.trf.xlu0
      %v4819 = vpop.trf.xlu0
      %v4821 = vsel %vm4338, %v4580, 0
      %v4824 = vsel %vm4338, %v4581, 0
      %4826 = vmatprep.subr.mxu0 0.0
      %4827 = vmatpush1.msra.mxu0 %v351
      %4828 = vmatprep.subr.mxu0 0.0
      %4829 = vmatpush1.msra.mxu0 %v352
      %4830 = vmatprep.subr.mxu0 0.0
      %4831 = vmatpush1.msra.mxu0 0.0
      %4832 = vmatprep.subr.mxu0 0.0
      %4833 = vmatpush1.msra.mxu0 0.0
      %4834 = vmatprep.subr.mxu0 0.0
      %4835 = vmatpush1.msra.mxu0 0.0
      %4836 = vmatprep.subr.mxu0 0.0
      %4837 = vmatpush1.msra.mxu0 0.0
      %4838 = vmatprep.subr.mxu0 0.0
      %4839 = vmatpush1.msra.mxu0 0.0
      %4840 = vmatprep.subr.mxu0 0.0
      %4841 = vmatpush1.msra.mxu0 0.0
      %4842 = vmatprep.subr.mxu0 0.0
      %4843 = vmatpush1.msra.mxu0 0.0
      %4844 = vmatprep.subr.mxu0 0.0
      %4845 = vmatpush1.msra.mxu0 0.0
      %4846 = vmatprep.subr.mxu0 0.0
      %4847 = vmatpush1.msra.mxu0 0.0
      %4848 = vmatprep.subr.mxu0 0.0
      %4849 = vmatpush1.msra.mxu0 0.0
      %4850 = vmatprep.subr.mxu0 0.0
      %4851 = vmatpush1.msra.mxu0 0.0
      %4852 = vmatprep.subr.mxu0 0.0
      %4853 = vmatpush1.msra.mxu0 0.0
      %4854 = vmatprep.subr.mxu0 0.0
      %4855 = vmatpush1.msra.mxu0 0.0
      %4856 = vmatprep.subr.mxu0 0.0
      %4857 = vmatpush1.msra.mxu0 0.0
      %4858 = vmatprep.subr.mxu0 0.0
      %4859 = vmatpush1.msra.mxu0 0.0
      %4860 = vmatprep.subr.mxu0 0.0
      %4861 = vmatpush1.msra.mxu0 0.0
      %4862 = vmatprep.subr.mxu0 0.0
      %4863 = vmatpush1.msra.mxu0 0.0
      %4864 = vmatprep.subr.mxu0 0.0
      %4865 = vmatpush1.msra.mxu0 0.0
      %4866 = vmatprep.subr.mxu0 0.0
      %4867 = vmatpush1.msra.mxu0 0.0
      %4868 = vmatprep.subr.mxu0 0.0
      %4869 = vmatpush1.msra.mxu0 0.0
      %4870 = vmatprep.subr.mxu0 0.0
      %4871 = vmatpush1.msra.mxu0 0.0
      %4872 = vmatprep.subr.mxu0 0.0
      %4873 = vmatpush1.msra.mxu0 0.0
      %4874 = vmatprep.subr.mxu0 0.0
      %4875 = vmatpush1.msra.mxu0 0.0
      %4876 = vmatprep.subr.mxu0 0.0
      %4877 = vmatpush1.msra.mxu0 0.0
      %4878 = vmatprep.subr.mxu0 0.0
      %4879 = vmatpush1.msra.mxu0 0.0
      %4880 = vmatprep.subr.mxu0 0.0
      %4881 = vmatpush1.msra.mxu0 0.0
      %4882 = vmatprep.subr.mxu0 0.0
      %4883 = vmatpush1.msra.mxu0 0.0
      %4884 = vmatprep.subr.mxu0 0.0
      %4885 = vmatpush1.msra.mxu0 0.0
      %4886 = vmatprep.subr.mxu0 0.0
      %4887 = vmatpush1.msra.mxu0 0.0
      %4888 = vmatprep.subr.mxu0 0.0
      %4889 = vmatpush1.msra.mxu0 0.0
      %4890 = vmatprep.mubr.f32.mxu0 0.0
      %4891 = vmatmul.mubr.f32.gmra.mrb[0].mxu0 %v4821
      %v4892 = vpop.f32.mrb[0].mxu0
      %v4893 = vadd.f32 0.0, %v4892
      %v4894 = vpop.f32.mrb[0].mxu0
      %4895 = vmatprep.mubr.f32.mxu0 0.0
      %4896 = vmatmul.mubr.f32.gmra.mrb[0].mxu0 %v4824
      %v4897 = vpop.f32.mrb[0].mxu0
      %v4898 = vadd.f32 0.0, %v4897
      %v4899 = vpop.f32.mrb[0].mxu0
      %4900 = vdwg.mxu0
      %v4902 = vsel %vm4338, %v4612, 0
      %v4905 = vsel %vm4338, %v4613, 0
      %4907 = vmatprep.subr.mxu0 0.0
      %4908 = vmatpush1.msra.mxu0 %v353
      %4909 = vmatprep.subr.mxu0 0.0
      %4910 = vmatpush1.msra.mxu0 %v354
      %4911 = vmatprep.subr.mxu0 0.0
      %4912 = vmatpush1.msra.mxu0 0.0
      %4913 = vmatprep.subr.mxu0 0.0
      %4914 = vmatpush1.msra.mxu0 0.0
      %4915 = vmatprep.subr.mxu0 0.0
      %4916 = vmatpush1.msra.mxu0 0.0
      %4917 = vmatprep.subr.mxu0 0.0
      %4918 = vmatpush1.msra.mxu0 0.0
      %4919 = vmatprep.subr.mxu0 0.0
      %4920 = vmatpush1.msra.mxu0 0.0
      %4921 = vmatprep.subr.mxu0 0.0
      %4922 = vmatpush1.msra.mxu0 0.0
      %4923 = vmatprep.subr.mxu0 0.0
      %4924 = vmatpush1.msra.mxu0 0.0
      %4925 = vmatprep.subr.mxu0 0.0
      %4926 = vmatpush1.msra.mxu0 0.0
      %4927 = vmatprep.subr.mxu0 0.0
      %4928 = vmatpush1.msra.mxu0 0.0
      %4929 = vmatprep.subr.mxu0 0.0
      %4930 = vmatpush1.msra.mxu0 0.0
      %4931 = vmatprep.subr.mxu0 0.0
      %4932 = vmatpush1.msra.mxu0 0.0
      %4933 = vmatprep.subr.mxu0 0.0
      %4934 = vmatpush1.msra.mxu0 0.0
      %4935 = vmatprep.subr.mxu0 0.0
      %4936 = vmatpush1.msra.mxu0 0.0
      %4937 = vmatprep.subr.mxu0 0.0
      %4938 = vmatpush1.msra.mxu0 0.0
      %4939 = vmatprep.subr.mxu0 0.0
      %4940 = vmatpush1.msra.mxu0 0.0
      %4941 = vmatprep.subr.mxu0 0.0
      %4942 = vmatpush1.msra.mxu0 0.0
      %4943 = vmatprep.subr.mxu0 0.0
      %4944 = vmatpush1.msra.mxu0 0.0
      %4945 = vmatprep.subr.mxu0 0.0
      %4946 = vmatpush1.msra.mxu0 0.0
      %4947 = vmatprep.subr.mxu0 0.0
      %4948 = vmatpush1.msra.mxu0 0.0
      %4949 = vmatprep.subr.mxu0 0.0
      %4950 = vmatpush1.msra.mxu0 0.0
      %4951 = vmatprep.subr.mxu0 0.0
      %4952 = vmatpush1.msra.mxu0 0.0
      %4953 = vmatprep.subr.mxu0 0.0
      %4954 = vmatpush1.msra.mxu0 0.0
      %4955 = vmatprep.subr.mxu0 0.0
      %4956 = vmatpush1.msra.mxu0 0.0
      %4957 = vmatprep.subr.mxu0 0.0
      %4958 = vmatpush1.msra.mxu0 0.0
      %4959 = vmatprep.subr.mxu0 0.0
      %4960 = vmatpush1.msra.mxu0 0.0
      %4961 = vmatprep.subr.mxu0 0.0
      %4962 = vmatpush1.msra.mxu0 0.0
      %4963 = vmatprep.subr.mxu0 0.0
      %4964 = vmatpush1.msra.mxu0 0.0
      %4965 = vmatprep.subr.mxu0 0.0
      %4966 = vmatpush1.msra.mxu0 0.0
      %4967 = vmatprep.subr.mxu0 0.0
      %4968 = vmatpush1.msra.mxu0 0.0
      %4969 = vmatprep.subr.mxu0 0.0
      %4970 = vmatpush1.msra.mxu0 0.0
      %4971 = vmatprep.mubr.f32.mxu0 0.0
      %4972 = vmatmul.mubr.f32.gmra.mrb[0].mxu0 %v4902
      %v4973 = vpop.f32.mrb[0].mxu0
      %v4974 = vadd.f32 0.0, %v4973
      %v4975 = vpop.f32.mrb[0].mxu0
      %4976 = vmatprep.mubr.f32.mxu0 0.0
      %4977 = vmatmul.mubr.f32.gmra.mrb[0].mxu0 %v4905
      %v4978 = vpop.f32.mrb[0].mxu0
      %v4979 = vadd.f32 0.0, %v4978
      %v4980 = vpop.f32.mrb[0].mxu0
      %4981 = vdwg.mxu0
      %v4983 = vsel %vm4338, %v4644, 0
      %v4986 = vsel %vm4338, %v4645, 0
      %4988 = vmatprep.subr.mxu0 0.0
      %4989 = vmatpush1.msra.mxu0 %v355
      %4990 = vmatprep.subr.mxu0 0.0
      %4991 = vmatpush1.msra.mxu0 %v356
      %4992 = vmatprep.subr.mxu0 0.0
      %4993 = vmatpush1.msra.mxu0 0.0
      %4994 = vmatprep.subr.mxu0 0.0
      %4995 = vmatpush1.msra.mxu0 0.0
      %4996 = vmatprep.subr.mxu0 0.0
      %4997 = vmatpush1.msra.mxu0 0.0
      %4998 = vmatprep.subr.mxu0 0.0
      %4999 = vmatpush1.msra.mxu0 0.0
      %5000 = vmatprep.subr.mxu0 0.0
      %5001 = vmatpush1.msra.mxu0 0.0
      %5002 = vmatprep.subr.mxu0 0.0
      %5003 = vmatpush1.msra.mxu0 0.0
      %5004 = vmatprep.subr.mxu0 0.0
      %5005 = vmatpush1.msra.mxu0 0.0
      %5006 = vmatprep.subr.mxu0 0.0
      %5007 = vmatpush1.msra.mxu0 0.0
      %5008 = vmatprep.subr.mxu0 0.0
      %5009 = vmatpush1.msra.mxu0 0.0
      %5010 = vmatprep.subr.mxu0 0.0
      %5011 = vmatpush1.msra.mxu0 0.0
      %5012 = vmatprep.subr.mxu0 0.0
      %5013 = vmatpush1.msra.mxu0 0.0
      %5014 = vmatprep.subr.mxu0 0.0
      %5015 = vmatpush1.msra.mxu0 0.0
      %5016 = vmatprep.subr.mxu0 0.0
      %5017 = vmatpush1.msra.mxu0 0.0
      %5018 = vmatprep.subr.mxu0 0.0
      %5019 = vmatpush1.msra.mxu0 0.0
      %5020 = vmatprep.subr.mxu0 0.0
      %5021 = vmatpush1.msra.mxu0 0.0
      %5022 = vmatprep.subr.mxu0 0.0
      %5023 = vmatpush1.msra.mxu0 0.0
      %5024 = vmatprep.subr.mxu0 0.0
      %5025 = vmatpush1.msra.mxu0 0.0
      %5026 = vmatprep.subr.mxu0 0.0
      %5027 = vmatpush1.msra.mxu0 0.0
      %5028 = vmatprep.subr.mxu0 0.0
      %5029 = vmatpush1.msra.mxu0 0.0
      %5030 = vmatprep.subr.mxu0 0.0
      %5031 = vmatpush1.msra.mxu0 0.0
      %5032 = vmatprep.subr.mxu0 0.0
      %5033 = vmatpush1.msra.mxu0 0.0
      %5034 = vmatprep.subr.mxu0 0.0
      %5035 = vmatpush1.msra.mxu0 0.0
      %5036 = vmatprep.subr.mxu0 0.0
      %5037 = vmatpush1.msra.mxu0 0.0
      %5038 = vmatprep.subr.mxu0 0.0
      %5039 = vmatpush1.msra.mxu0 0.0
      %5040 = vmatprep.subr.mxu0 0.0
      %5041 = vmatpush1.msra.mxu0 0.0
      %5042 = vmatprep.subr.mxu0 0.0
      %5043 = vmatpush1.msra.mxu0 0.0
      %5044 = vmatprep.subr.mxu0 0.0
      %5045 = vmatpush1.msra.mxu0 0.0
      %5046 = vmatprep.subr.mxu0 0.0
      %5047 = vmatpush1.msra.mxu0 0.0
      %5048 = vmatprep.subr.mxu0 0.0
      %5049 = vmatpush1.msra.mxu0 0.0
      %5050 = vmatprep.subr.mxu0 0.0
      %5051 = vmatpush1.msra.mxu0 0.0
      %5052 = vmatprep.mubr.f32.mxu0 0.0
      %5053 = vmatmul.mubr.f32.gmra.mrb[0].mxu0 %v4983
      %v5054 = vpop.f32.mrb[0].mxu0
      %v5055 = vadd.f32 0.0, %v5054
      %v5056 = vpop.f32.mrb[0].mxu0
      %5057 = vmatprep.mubr.f32.mxu0 0.0
      %5058 = vmatmul.mubr.f32.gmra.mrb[0].mxu0 %v4986
      %v5059 = vpop.f32.mrb[0].mxu0
      %v5060 = vadd.f32 0.0, %v5059
      %v5061 = vpop.f32.mrb[0].mxu0
      %5062 = vdwg.mxu0
      %v5064 = vsel %vm4338, %v4676, 0
      %v5067 = vsel %vm4338, %v4677, 0
      %5069 = vmatprep.subr.mxu0 0.0
      %5070 = vmatpush1.msra.mxu0 %v357
      %5071 = vmatprep.subr.mxu0 0.0
      %5072 = vmatpush1.msra.mxu0 %v358
      %5073 = vmatprep.subr.mxu0 0.0
      %5074 = vmatpush1.msra.mxu0 0.0
      %5075 = vmatprep.subr.mxu0 0.0
      %5076 = vmatpush1.msra.mxu0 0.0
      %5077 = vmatprep.subr.mxu0 0.0
      %5078 = vmatpush1.msra.mxu0 0.0
      %5079 = vmatprep.subr.mxu0 0.0
      %5080 = vmatpush1.msra.mxu0 0.0
      %5081 = vmatprep.subr.mxu0 0.0
      %5082 = vmatpush1.msra.mxu0 0.0
      %5083 = vmatprep.subr.mxu0 0.0
      %5084 = vmatpush1.msra.mxu0 0.0
      %5085 = vmatprep.subr.mxu0 0.0
      %5086 = vmatpush1.msra.mxu0 0.0
      %5087 = vmatprep.subr.mxu0 0.0
      %5088 = vmatpush1.msra.mxu0 0.0
      %5089 = vmatprep.subr.mxu0 0.0
      %5090 = vmatpush1.msra.mxu0 0.0
      %5091 = vmatprep.subr.mxu0 0.0
      %5092 = vmatpush1.msra.mxu0 0.0
      %5093 = vmatprep.subr.mxu0 0.0
      %5094 = vmatpush1.msra.mxu0 0.0
      %5095 = vmatprep.subr.mxu0 0.0
      %5096 = vmatpush1.msra.mxu0 0.0
      %5097 = vmatprep.subr.mxu0 0.0
      %5098 = vmatpush1.msra.mxu0 0.0
      %5099 = vmatprep.subr.mxu0 0.0
      %5100 = vmatpush1.msra.mxu0 0.0
      %5101 = vmatprep.subr.mxu0 0.0
      %5102 = vmatpush1.msra.mxu0 0.0
      %5103 = vmatprep.subr.mxu0 0.0
      %5104 = vmatpush1.msra.mxu0 0.0
      %5105 = vmatprep.subr.mxu0 0.0
      %5106 = vmatpush1.msra.mxu0 0.0
      %5107 = vmatprep.subr.mxu0 0.0
      %5108 = vmatpush1.msra.mxu0 0.0
      %5109 = vmatprep.subr.mxu0 0.0
      %5110 = vmatpush1.msra.mxu0 0.0
      %5111 = vmatprep.subr.mxu0 0.0
      %5112 = vmatpush1.msra.mxu0 0.0
      %5113 = vmatprep.subr.mxu0 0.0
      %5114 = vmatpush1.msra.mxu0 0.0
      %5115 = vmatprep.subr.mxu0 0.0
      %5116 = vmatpush1.msra.mxu0 0.0
      %5117 = vmatprep.subr.mxu0 0.0
      %5118 = vmatpush1.msra.mxu0 0.0
      %5119 = vmatprep.subr.mxu0 0.0
      %5120 = vmatpush1.msra.mxu0 0.0
      %5121 = vmatprep.subr.mxu0 0.0
      %5122 = vmatpush1.msra.mxu0 0.0
      %5123 = vmatprep.subr.mxu0 0.0
      %5124 = vmatpush1.msra.mxu0 0.0
      %5125 = vmatprep.subr.mxu0 0.0
      %5126 = vmatpush1.msra.mxu0 0.0
      %5127 = vmatprep.subr.mxu0 0.0
      %5128 = vmatpush1.msra.mxu0 0.0
      %5129 = vmatprep.subr.mxu0 0.0
      %5130 = vmatpush1.msra.mxu0 0.0
      %5131 = vmatprep.subr.mxu0 0.0
      %5132 = vmatpush1.msra.mxu0 0.0
      %5133 = vmatprep.mubr.f32.mxu0 0.0
      %5134 = vmatmul.mubr.f32.gmra.mrb[0].mxu0 %v5064
      %v5135 = vpop.f32.mrb[0].mxu0
      %v5136 = vadd.f32 0.0, %v5135
      %v5137 = vpop.f32.mrb[0].mxu0
      %5138 = vmatprep.mubr.f32.mxu0 0.0
      %5139 = vmatmul.mubr.f32.gmra.mrb[0].mxu0 %v5067
      %v5140 = vpop.f32.mrb[0].mxu0
      %v5141 = vadd.f32 0.0, %v5140
      %v5142 = vpop.f32.mrb[0].mxu0
      %5143 = vdwg.mxu0
      %v5145 = vsel %vm4338, %v4708, 0
      %v5148 = vsel %vm4338, %v4709, 0
      %5150 = vmatprep.subr.mxu0 0.0
      %5151 = vmatpush1.msra.mxu0 %v359
      %5152 = vmatprep.subr.mxu0 0.0
      %5153 = vmatpush1.msra.mxu0 %v360
      %5154 = vmatprep.subr.mxu0 0.0
      %5155 = vmatpush1.msra.mxu0 0.0
      %5156 = vmatprep.subr.mxu0 0.0
      %5157 = vmatpush1.msra.mxu0 0.0
      %5158 = vmatprep.subr.mxu0 0.0
      %5159 = vmatpush1.msra.mxu0 0.0
      %5160 = vmatprep.subr.mxu0 0.0
      %5161 = vmatpush1.msra.mxu0 0.0
      %5162 = vmatprep.subr.mxu0 0.0
      %5163 = vmatpush1.msra.mxu0 0.0
      %5164 = vmatprep.subr.mxu0 0.0
      %5165 = vmatpush1.msra.mxu0 0.0
      %5166 = vmatprep.subr.mxu0 0.0
      %5167 = vmatpush1.msra.mxu0 0.0
      %5168 = vmatprep.subr.mxu0 0.0
      %5169 = vmatpush1.msra.mxu0 0.0
      %5170 = vmatprep.subr.mxu0 0.0
      %5171 = vmatpush1.msra.mxu0 0.0
      %5172 = vmatprep.subr.mxu0 0.0
      %5173 = vmatpush1.msra.mxu0 0.0
      %5174 = vmatprep.subr.mxu0 0.0
      %5175 = vmatpush1.msra.mxu0 0.0
      %5176 = vmatprep.subr.mxu0 0.0
      %5177 = vmatpush1.msra.mxu0 0.0
      %5178 = vmatprep.subr.mxu0 0.0
      %5179 = vmatpush1.msra.mxu0 0.0
      %5180 = vmatprep.subr.mxu0 0.0
      %5181 = vmatpush1.msra.mxu0 0.0
      %5182 = vmatprep.subr.mxu0 0.0
      %5183 = vmatpush1.msra.mxu0 0.0
      %5184 = vmatprep.subr.mxu0 0.0
      %5185 = vmatpush1.msra.mxu0 0.0
      %5186 = vmatprep.subr.mxu0 0.0
      %5187 = vmatpush1.msra.mxu0 0.0
      %5188 = vmatprep.subr.mxu0 0.0
      %5189 = vmatpush1.msra.mxu0 0.0
      %5190 = vmatprep.subr.mxu0 0.0
      %5191 = vmatpush1.msra.mxu0 0.0
      %5192 = vmatprep.subr.mxu0 0.0
      %5193 = vmatpush1.msra.mxu0 0.0
      %5194 = vmatprep.subr.mxu0 0.0
      %5195 = vmatpush1.msra.mxu0 0.0
      %5196 = vmatprep.subr.mxu0 0.0
      %5197 = vmatpush1.msra.mxu0 0.0
      %5198 = vmatprep.subr.mxu0 0.0
      %5199 = vmatpush1.msra.mxu0 0.0
      %5200 = vmatprep.subr.mxu0 0.0
      %5201 = vmatpush1.msra.mxu0 0.0
      %5202 = vmatprep.subr.mxu0 0.0
      %5203 = vmatpush1.msra.mxu0 0.0
      %5204 = vmatprep.subr.mxu0 0.0
      %5205 = vmatpush1.msra.mxu0 0.0
      %5206 = vmatprep.subr.mxu0 0.0
      %5207 = vmatpush1.msra.mxu0 0.0
      %5208 = vmatprep.subr.mxu0 0.0
      %5209 = vmatpush1.msra.mxu0 0.0
      %5210 = vmatprep.subr.mxu0 0.0
      %5211 = vmatpush1.msra.mxu0 0.0
      %5212 = vmatprep.subr.mxu0 0.0
      %5213 = vmatpush1.msra.mxu0 0.0
      %5214 = vmatprep.mubr.f32.mxu0 0.0
      %5215 = vmatmul.mubr.f32.gmra.mrb[0].mxu0 %v5145
      %v5216 = vpop.f32.mrb[0].mxu0
      %v5217 = vadd.f32 0.0, %v5216
      %v5218 = vpop.f32.mrb[0].mxu0
      %5219 = vmatprep.mubr.f32.mxu0 0.0
      %5220 = vmatmul.mubr.f32.gmra.mrb[0].mxu0 %v5148
      %v5221 = vpop.f32.mrb[0].mxu0
      %v5222 = vadd.f32 0.0, %v5221
      %v5223 = vpop.f32.mrb[0].mxu0
      %5224 = vdwg.mxu0
      %v5226 = vsel %vm4338, %v4740, 0
      %v5229 = vsel %vm4338, %v4741, 0
      %5231 = vmatprep.subr.mxu0 0.0
      %5232 = vmatpush1.msra.mxu0 %v361
      %5233 = vmatprep.subr.mxu0 0.0
      %5234 = vmatpush1.msra.mxu0 %v362
      %5235 = vmatprep.subr.mxu0 0.0
      %5236 = vmatpush1.msra.mxu0 0.0
      %5237 = vmatprep.subr.mxu0 0.0
      %5238 = vmatpush1.msra.mxu0 0.0
      %5239 = vmatprep.subr.mxu0 0.0
      %5240 = vmatpush1.msra.mxu0 0.0
      %5241 = vmatprep.subr.mxu0 0.0
      %5242 = vmatpush1.msra.mxu0 0.0
      %5243 = vmatprep.subr.mxu0 0.0
      %5244 = vmatpush1.msra.mxu0 0.0
      %5245 = vmatprep.subr.mxu0 0.0
      %5246 = vmatpush1.msra.mxu0 0.0
      %5247 = vmatprep.subr.mxu0 0.0
      %5248 = vmatpush1.msra.mxu0 0.0
      %5249 = vmatprep.subr.mxu0 0.0
      %5250 = vmatpush1.msra.mxu0 0.0
      %5251 = vmatprep.subr.mxu0 0.0
      %5252 = vmatpush1.msra.mxu0 0.0
      %5253 = vmatprep.subr.mxu0 0.0
      %5254 = vmatpush1.msra.mxu0 0.0
      %5255 = vmatprep.subr.mxu0 0.0
      %5256 = vmatpush1.msra.mxu0 0.0
      %5257 = vmatprep.subr.mxu0 0.0
      %5258 = vmatpush1.msra.mxu0 0.0
      %5259 = vmatprep.subr.mxu0 0.0
      %5260 = vmatpush1.msra.mxu0 0.0
      %5261 = vmatprep.subr.mxu0 0.0
      %5262 = vmatpush1.msra.mxu0 0.0
      %5263 = vmatprep.subr.mxu0 0.0
      %5264 = vmatpush1.msra.mxu0 0.0
      %5265 = vmatprep.subr.mxu0 0.0
      %5266 = vmatpush1.msra.mxu0 0.0
      %5267 = vmatprep.subr.mxu0 0.0
      %5268 = vmatpush1.msra.mxu0 0.0
      %5269 = vmatprep.subr.mxu0 0.0
      %5270 = vmatpush1.msra.mxu0 0.0
      %5271 = vmatprep.subr.mxu0 0.0
      %5272 = vmatpush1.msra.mxu0 0.0
      %5273 = vmatprep.subr.mxu0 0.0
      %5274 = vmatpush1.msra.mxu0 0.0
      %5275 = vmatprep.subr.mxu0 0.0
      %5276 = vmatpush1.msra.mxu0 0.0
      %5277 = vmatprep.subr.mxu0 0.0
      %5278 = vmatpush1.msra.mxu0 0.0
      %5279 = vmatprep.subr.mxu0 0.0
      %5280 = vmatpush1.msra.mxu0 0.0
      %5281 = vmatprep.subr.mxu0 0.0
      %5282 = vmatpush1.msra.mxu0 0.0
      %5283 = vmatprep.subr.mxu0 0.0
      %5284 = vmatpush1.msra.mxu0 0.0
      %5285 = vmatprep.subr.mxu0 0.0
      %5286 = vmatpush1.msra.mxu0 0.0
      %5287 = vmatprep.subr.mxu0 0.0
      %5288 = vmatpush1.msra.mxu0 0.0
      %5289 = vmatprep.subr.mxu0 0.0
      %5290 = vmatpush1.msra.mxu0 0.0
      %5291 = vmatprep.subr.mxu0 0.0
      %5292 = vmatpush1.msra.mxu0 0.0
      %5293 = vmatprep.subr.mxu0 0.0
      %5294 = vmatpush1.msra.mxu0 0.0
      %5295 = vmatprep.mubr.f32.mxu0 0.0
      %5296 = vmatmul.mubr.f32.gmra.mrb[0].mxu0 %v5226
      %v5297 = vpop.f32.mrb[0].mxu0
      %v5298 = vadd.f32 0.0, %v5297
      %v5299 = vpop.f32.mrb[0].mxu0
      %5300 = vmatprep.mubr.f32.mxu0 0.0
      %5301 = vmatmul.mubr.f32.gmra.mrb[0].mxu0 %v5229
      %v5302 = vpop.f32.mrb[0].mxu0
      %v5303 = vadd.f32 0.0, %v5302
      %v5304 = vpop.f32.mrb[0].mxu0
      %5305 = vdwg.mxu0
      %v5307 = vsel %vm4338, %v4772, 0
      %v5310 = vsel %vm4338, %v4773, 0
      %5312 = vmatprep.subr.mxu0 0.0
      %5313 = vmatpush1.msra.mxu0 %v363
      %5314 = vmatprep.subr.mxu0 0.0
      %5315 = vmatpush1.msra.mxu0 %v364
      %5316 = vmatprep.subr.mxu0 0.0
      %5317 = vmatpush1.msra.mxu0 0.0
      %5318 = vmatprep.subr.mxu0 0.0
      %5319 = vmatpush1.msra.mxu0 0.0
      %5320 = vmatprep.subr.mxu0 0.0
      %5321 = vmatpush1.msra.mxu0 0.0
      %5322 = vmatprep.subr.mxu0 0.0
      %5323 = vmatpush1.msra.mxu0 0.0
      %5324 = vmatprep.subr.mxu0 0.0
      %5325 = vmatpush1.msra.mxu0 0.0
      %5326 = vmatprep.subr.mxu0 0.0
      %5327 = vmatpush1.msra.mxu0 0.0
      %5328 = vmatprep.subr.mxu0 0.0
      %5329 = vmatpush1.msra.mxu0 0.0
      %5330 = vmatprep.subr.mxu0 0.0
      %5331 = vmatpush1.msra.mxu0 0.0
      %5332 = vmatprep.subr.mxu0 0.0
      %5333 = vmatpush1.msra.mxu0 0.0
      %5334 = vmatprep.subr.mxu0 0.0
      %5335 = vmatpush1.msra.mxu0 0.0
      %5336 = vmatprep.subr.mxu0 0.0
      %5337 = vmatpush1.msra.mxu0 0.0
      %5338 = vmatprep.subr.mxu0 0.0
      %5339 = vmatpush1.msra.mxu0 0.0
      %5340 = vmatprep.subr.mxu0 0.0
      %5341 = vmatpush1.msra.mxu0 0.0
      %5342 = vmatprep.subr.mxu0 0.0
      %5343 = vmatpush1.msra.mxu0 0.0
      %5344 = vmatprep.subr.mxu0 0.0
      %5345 = vmatpush1.msra.mxu0 0.0
      %5346 = vmatprep.subr.mxu0 0.0
      %5347 = vmatpush1.msra.mxu0 0.0
      %5348 = vmatprep.subr.mxu0 0.0
      %5349 = vmatpush1.msra.mxu0 0.0
      %5350 = vmatprep.subr.mxu0 0.0
      %5351 = vmatpush1.msra.mxu0 0.0
      %5352 = vmatprep.subr.mxu0 0.0
      %5353 = vmatpush1.msra.mxu0 0.0
      %5354 = vmatprep.subr.mxu0 0.0
      %5355 = vmatpush1.msra.mxu0 0.0
      %5356 = vmatprep.subr.mxu0 0.0
      %5357 = vmatpush1.msra.mxu0 0.0
      %5358 = vmatprep.subr.mxu0 0.0
      %5359 = vmatpush1.msra.mxu0 0.0
      %5360 = vmatprep.subr.mxu0 0.0
      %5361 = vmatpush1.msra.mxu0 0.0
      %5362 = vmatprep.subr.mxu0 0.0
      %5363 = vmatpush1.msra.mxu0 0.0
      %5364 = vmatprep.subr.mxu0 0.0
      %5365 = vmatpush1.msra.mxu0 0.0
      %5366 = vmatprep.subr.mxu0 0.0
      %5367 = vmatpush1.msra.mxu0 0.0
      %5368 = vmatprep.subr.mxu0 0.0
      %5369 = vmatpush1.msra.mxu0 0.0
      %5370 = vmatprep.subr.mxu0 0.0
      %5371 = vmatpush1.msra.mxu0 0.0
      %5372 = vmatprep.subr.mxu0 0.0
      %5373 = vmatpush1.msra.mxu0 0.0
      %5374 = vmatprep.subr.mxu0 0.0
      %5375 = vmatpush1.msra.mxu0 0.0
      %5376 = vmatprep.mubr.f32.mxu0 0.0
      %5377 = vmatmul.mubr.f32.gmra.mrb[0].mxu0 %v5307
      %v5378 = vpop.f32.mrb[0].mxu0
      %v5379 = vadd.f32 0.0, %v5378
      %v5380 = vpop.f32.mrb[0].mxu0
      %5381 = vmatprep.mubr.f32.mxu0 0.0
      %5382 = vmatmul.mubr.f32.gmra.mrb[0].mxu0 %v5310
      %v5383 = vpop.f32.mrb[0].mxu0
      %v5384 = vadd.f32 0.0, %v5383
      %v5385 = vpop.f32.mrb[0].mxu0
      %5386 = vdwg.mxu0
      %v5388 = vsel %vm4338, %v4804, 0
      %v5391 = vsel %vm4338, %v4805, 0
      %5393 = vmatprep.subr.mxu0 0.0
      %5394 = vmatpush1.msra.mxu0 %v365
      %5395 = vmatprep.subr.mxu0 0.0
      %5396 = vmatpush1.msra.mxu0 %v366
      %5397 = vmatprep.subr.mxu0 0.0
      %5398 = vmatpush1.msra.mxu0 0.0
      %5399 = vmatprep.subr.mxu0 0.0
      %5400 = vmatpush1.msra.mxu0 0.0
      %5401 = vmatprep.subr.mxu0 0.0
      %5402 = vmatpush1.msra.mxu0 0.0
      %5403 = vmatprep.subr.mxu0 0.0
      %5404 = vmatpush1.msra.mxu0 0.0
      %5405 = vmatprep.subr.mxu0 0.0
      %5406 = vmatpush1.msra.mxu0 0.0
      %5407 = vmatprep.subr.mxu0 0.0
      %5408 = vmatpush1.msra.mxu0 0.0
      %5409 = vmatprep.subr.mxu0 0.0
      %5410 = vmatpush1.msra.mxu0 0.0
      %5411 = vmatprep.subr.mxu0 0.0
      %5412 = vmatpush1.msra.mxu0 0.0
      %5413 = vmatprep.subr.mxu0 0.0
      %5414 = vmatpush1.msra.mxu0 0.0
      %5415 = vmatprep.subr.mxu0 0.0
      %5416 = vmatpush1.msra.mxu0 0.0
      %5417 = vmatprep.subr.mxu0 0.0
      %5418 = vmatpush1.msra.mxu0 0.0
      %5419 = vmatprep.subr.mxu0 0.0
      %5420 = vmatpush1.msra.mxu0 0.0
      %5421 = vmatprep.subr.mxu0 0.0
      %5422 = vmatpush1.msra.mxu0 0.0
      %5423 = vmatprep.subr.mxu0 0.0
      %5424 = vmatpush1.msra.mxu0 0.0
      %5425 = vmatprep.subr.mxu0 0.0
      %5426 = vmatpush1.msra.mxu0 0.0
      %5427 = vmatprep.subr.mxu0 0.0
      %5428 = vmatpush1.msra.mxu0 0.0
      %5429 = vmatprep.subr.mxu0 0.0
      %5430 = vmatpush1.msra.mxu0 0.0
      %5431 = vmatprep.subr.mxu0 0.0
      %5432 = vmatpush1.msra.mxu0 0.0
      %5433 = vmatprep.subr.mxu0 0.0
      %5434 = vmatpush1.msra.mxu0 0.0
      %5435 = vmatprep.subr.mxu0 0.0
      %5436 = vmatpush1.msra.mxu0 0.0
      %5437 = vmatprep.subr.mxu0 0.0
      %5438 = vmatpush1.msra.mxu0 0.0
      %5439 = vmatprep.subr.mxu0 0.0
      %5440 = vmatpush1.msra.mxu0 0.0
      %5441 = vmatprep.subr.mxu0 0.0
      %5442 = vmatpush1.msra.mxu0 0.0
      %5443 = vmatprep.subr.mxu0 0.0
      %5444 = vmatpush1.msra.mxu0 0.0
      %5445 = vmatprep.subr.mxu0 0.0
      %5446 = vmatpush1.msra.mxu0 0.0
      %5447 = vmatprep.subr.mxu0 0.0
      %5448 = vmatpush1.msra.mxu0 0.0
      %5449 = vmatprep.subr.mxu0 0.0
      %5450 = vmatpush1.msra.mxu0 0.0
      %5451 = vmatprep.subr.mxu0 0.0
      %5452 = vmatpush1.msra.mxu0 0.0
      %5453 = vmatprep.subr.mxu0 0.0
      %5454 = vmatpush1.msra.mxu0 0.0
      %5455 = vmatprep.subr.mxu0 0.0
      %5456 = vmatpush1.msra.mxu0 0.0
      %5457 = vmatprep.mubr.f32.mxu0 0.0
      %5458 = vmatmul.mubr.f32.gmra.mrb[0].mxu0 %v5388
      %v5459 = vpop.f32.mrb[0].mxu0
      %v5460 = vadd.f32 0.0, %v5459
      %v5461 = vpop.f32.mrb[0].mxu0
      %5462 = vmatprep.mubr.f32.mxu0 0.0
      %5463 = vmatmul.mubr.f32.gmra.mrb[0].mxu0 %v5391
      %v5464 = vpop.f32.mrb[0].mxu0
      %v5465 = vadd.f32 0.0, %v5464
      %v5466 = vpop.f32.mrb[0].mxu0
      %5467 = vdwg.mxu0
      %5468 = vst.msk [vmem:[%s318] sm:$0xff] %vm399, %v4893
      %5469 = vst.msk [vmem:[%s318 + $0x8] sm:$0xff] %vm399, %v4898
      %5470 = vst.msk [vmem:[%s318 + $0x10] sm:$0xff] %vm399, %v4974
      %5471 = vst.msk [vmem:[%s318 + $0x18] sm:$0xff] %vm399, %v4979
      %5472 = vst.msk [vmem:[%s318 + $0x20] sm:$0xff] %vm399, %v5055
      %5473 = vst.msk [vmem:[%s318 + $0x28] sm:$0xff] %vm399, %v5060
      %5474 = vst.msk [vmem:[%s318 + $0x30] sm:$0xff] %vm399, %v5136
      %5475 = vst.msk [vmem:[%s318 + $0x38] sm:$0xff] %vm399, %v5141
      %5476 = vst.msk [vmem:[%s318 + $0x40] sm:$0xff] %vm399, %v5217
      %5477 = vst.msk [vmem:[%s318 + $0x48] sm:$0xff] %vm399, %v5222
      %5478 = vst.msk [vmem:[%s318 + $0x50] sm:$0xff] %vm399, %v5298
      %5479 = vst.msk [vmem:[%s318 + $0x58] sm:$0xff] %vm399, %v5303
      %5480 = vst.msk [vmem:[%s318 + $0x60] sm:$0xff] %vm399, %v5379
      %5481 = vst.msk [vmem:[%s318 + $0x68] sm:$0xff] %vm399, %v5384
      %5482 = vst.msk [vmem:[%s318 + $0x70] sm:$0xff] %vm399, %v5460
      %5483 = vst.msk [vmem:[%s318 + $0x78] sm:$0xff] %vm399, %v5465
      %p5484 = scmp.lt.s32.totalorder %s18, 1
      %s5485 = scalar_select %p5484, %s18, 1
      %s5486 = smul.addr %s5485, 16
      %s5487 = smul.addr %s5486, 8
      %s5488 = scalar_lea.vmem %s7, %s5487
      // Predicated region
      $region49: #{tpu_custom_call.1} parent=47 // pred_check
        %p5489 = pneg %p198
      $region50: #{tpu_custom_call.1} parent=47 // pred_check_branch
        %5491 = sbr.rel (%p5489) target = $region52
      $region51: #{tpu_custom_call.1} parent=47 // pred_region
        _
      $region52: #{tpu_custom_call.1} parent=47 // pred_fallthru
        _
    $region48: #{tpu_custom_call.1} parent=5 // pred_fallthru
      _
    %p5492 = scmp.le.s32.totalorder 2, %s13
    // Predicated region
    $region53: #{tpu_custom_call.1} parent=5 // pred_check
      %p5493 = pneg %p5492
    $region54: #{tpu_custom_call.1} parent=5 // pred_check_branch
      %5495 = sbr.rel (%p5493) target = $region56
    $region55: #{tpu_custom_call.1} parent=5 // pred_region
      %s5496 = ssub.s32 %s13, 2
      // Predicated region
      $region57: #{tpu_custom_call.1} parent=55 // pred_check
        %p5497 = pneg %p204
      $region58: #{tpu_custom_call.1} parent=55 // pred_check_branch
        %5499 = sbr.rel (%p5497) target = $region60
      $region59: #{tpu_custom_call.1} parent=55 // pred_region
        %p5500 = scmp.lt.s32.totalorder %s19, 1
        %s5501 = scalar_select %p5500, %s19, 1
        %s5502 = smul.addr %s5501, 16
        %s5503 = smul.addr %s5502, 8
        %s5504 = scalar_lea.vmem %s7, %s5503
      $region60: #{tpu_custom_call.1} parent=55 // pred_fallthru
        _
    $region56: #{tpu_custom_call.1} parent=5 // pred_fallthru
      _
  $region6: #{tpu_custom_call.1} parent=0 // loop_footer
    %s17 = sadd.s32 1, %s13
  $region7: #{tpu_custom_call.1} parent=0 // loop_footer_branch
    %12 = sbr.rel target = $region3
  $region8: #{tpu_custom_call.1} parent=0 // loop_exit
    _

</llo_original>
